<compile_context>
chip_gen: v5e
topology: v5e:2x2
jax: 0.10.0
libtpu: 0.0.40
codegen_flags: <defaults>
</compile_context>

<pallas_src>
import jax
import jax.numpy as jnp
from jax.experimental import pallas as pl
from jax.experimental.pallas import tpu as pltpu

NEG_SLOPE = 0.1
BN_EPS = 1e-5


def _round_up(v, m):
    return (v + m - 1) // m * m


def _pick_tile_h(h, max_tile=64):
    # Largest divisor of H that is <= max_tile (keeps halo overhead <= 2/tile_h).
    best = 1
    for cand in range(1, min(h, max_tile) + 1):
        if h % cand == 0:
            best = cand
    return best


def _leaky(v):
    return jnp.where(v > 0, v, NEG_SLOPE * v)


def residual_block(x, w1, s1, b1, w2, s2, b2, *, tile_h=None):
    """x: (N, H, W, Cin) f32; w1: (Cin, Cmed); w2: (3, 3, Cmed, Cout) HWIO;
    s*/b*: (1, C) folded-BN scale / bias.  Requires Cin == Cout."""
    n, h, w, cin = x.shape
    cmed = w1.shape[1]
    cout = w2.shape[-1]
    assert cin == cout, "residual add requires filters_in == filters_out"

    th = _pick_tile_h(h) if tile_h is None else tile_h
    assert h % th == 0, "tile_h must divide H"
    n_tiles = h // th

    # Sublane-aligned widths: w_al for the conv2 tap slices / accumulator,
    # wp (>= w_al + 2 halo columns, multiple of 8) for the padded slab width.
    w_al = _round_up(w, 8)
    wp = w_al + 8

    # ---- fold BN scale into the conv weights; cast MXU operands to bf16 ----
    w1f = (w1 * s1.reshape(1, -1)).astype(jnp.bfloat16)                 # (Cin, Cmed)
    w2f = (w2 * s2.reshape(1, 1, 1, -1)).astype(jnp.bfloat16)           # (3,3,Cmed,Cout)
    b1f = b1.reshape(1, -1).astype(jnp.float32)
    b2f = b2.reshape(1, -1).astype(jnp.float32)

    # Pad ONCE (1-row/col halo + sublane alignment).  Per-tile halo windows are
    # sliced in-kernel from the per-batch resident block (no slab stacking).
    xpad = jnp.pad(x, ((0, 0), (1, 1), (1, wp - w - 1), (0, 0))).astype(jnp.bfloat16)

    def kernel(xpad_ref, x_ref, w1_ref, b1_ref, w2_ref, b2_ref, o_ref):
        t = pl.program_id(1)
        row0 = t * th

        # Halo window for this row tile: (th+2, wp, Cin) bf16 (outer-dim slice).
        xp = xpad_ref[pl.ds(row0, th + 2), :, :]

        # ---- conv1 (1x1): one MXU matmul.  wp % 8 == 0, so the reshape does
        # not cross sublane tiles (no relayout copy). ----
        z = jnp.dot(xp.reshape((th + 2) * wp, cin), w1_ref[...],
                    preferred_element_type=jnp.float32)
        z = z.reshape(th + 2, wp, cmed)

        # conv2 must see ZERO padding of the conv1 *output* (not leaky(bias)),
        # so zero conv1 results at spatial-padding / alignment-padding columns.
        rr = jax.lax.broadcasted_iota(jnp.int32, (th + 2, wp, 1), 0) + row0
        cc = jax.lax.broadcasted_iota(jnp.int32, (th + 2, wp, 1), 1)
        valid = (rr >= 1) & (rr <= h) & (cc >= 1) & (cc <= w)
        r1 = jnp.where(valid, _leaky(z + b1_ref[...]), 0.0)             # f32
        r1b = r1.astype(jnp.bfloat16)                                   # MXU operand

        # ---- conv2 (3x3, pad=1): 9 tap-wise dots accumulated in f32 (no
        # materialized 9x im2col buffer).  dx slices are the only remaining
        # sublane-offset relayouts (3 per step); dy slices and 2-D reshapes are
        # free because w_al % 8 == 0. ----
        acc = jnp.zeros((th * w_al, cout), jnp.float32)
        for dx in range(3):
            sh = r1b[:, dx:dx + w_al, :]                                # (th+2, w_al, Cmed)
            for dy in range(3):
                tap = sh[dy:dy + th].reshape(th * w_al, cmed)
                acc = acc + jnp.dot(tap, w2_ref[dy, dx],
                                    preferred_element_type=jnp.float32)
        y = _leaky(acc + b2_ref[...]).reshape(th, w_al, cout)[:, :w, :]

        # ---- residual add with an aligned, unpadded f32 x tile ----
        o_ref[...] = x_ref[...] + y

    return pl.pallas_call(
        kernel,
        out_shape=jax.ShapeDtypeStruct((n, h, w, cout), jnp.float32),
        grid_spec=pltpu.PrefetchScalarGridSpec(
            num_scalar_prefetch=0,
            grid=(n, n_tiles),
            in_specs=[
                # Full padded image per batch; block index constant along t, so
                # it is DMA'd once per batch and stays resident across row tiles.
                pl.BlockSpec((None, h + 2, wp, cin), lambda b, t: (b, 0, 0, 0)),
                # Aligned, unpadded f32 x tile for the residual add (pipelined).
                pl.BlockSpec((None, th, w, cin), lambda b, t: (b, t, 0, 0)),
                pl.BlockSpec((cin, cmed), lambda b, t: (0, 0)),
                pl.BlockSpec((1, cmed), lambda b, t: (0, 0)),
                pl.BlockSpec((3, 3, cmed, cout), lambda b, t: (0, 0, 0, 0)),
                pl.BlockSpec((1, cout), lambda b, t: (0, 0)),
            ],
            out_specs=pl.BlockSpec((None, th, w, cout),
                                   lambda b, t: (b, t, 0, 0)),
        ),
        compiler_params=pltpu.CompilerParams(
            dimension_semantics=("parallel", "parallel"),
            vmem_limit_bytes=48 * 1024 * 1024),
    )(xpad, x, w1f, b1f, w2f, b2f)


def fold_bn(gamma, beta, mean, var):
    scale = gamma / jnp.sqrt(var + BN_EPS)
    bias = beta - mean * scale
    return scale.reshape(1, -1), bias.reshape(1, -1)


def ref_forward(x, w1, s1, b1, w2, s2, b2):
    # Pure-JAX f32 reference (lax conv) for the correctness check.
    dn = ('NHWC', 'HWIO', 'NHWC')
    r = jax.lax.conv_general_dilated(x, w1.reshape(1, 1, *w1.shape),
                                     (1, 1), 'VALID', dimension_numbers=dn)
    r = r * s1 + b1
    r = jnp.where(r > 0, r, NEG_SLOPE * r)
    r = jax.lax.conv_general_dilated(r, w2, (1, 1), ((1, 1), (1, 1)),
                                     dimension_numbers=dn)
    r = r * s2 + b2
    r = jnp.where(r > 0, r, NEG_SLOPE * r)
    return x + r


if __name__ == "__main__":
    # filters_in == filters_out is required by the residual add.
    N, H, W = 2, 16, 16
    filters_in, filters_out, filters_medium = 4, 4, 2

    key = jax.random.PRNGKey(0)
    keys = jax.random.split(key, 11)

    # Input (NHWC; equivalent PyTorch NCHW shape is [2, 4, 16, 16]).
    x = jax.random.normal(keys[0], (N, H, W, filters_in), dtype=jnp.float32)

    # conv1: 1x1, no bias (norm='bn')  -> weight (Cin, Cmed)
    w1 = jax.random.normal(keys[1], (filters_in, filters_medium), jnp.float32) * 0.1
    g1 = 1.0 + 0.1 * jax.random.normal(keys[2], (filters_medium,), jnp.float32)
    be1 = 0.1 * jax.random.normal(keys[3], (filters_medium,), jnp.float32)
    m1 = 0.1 * jax.random.normal(keys[4], (filters_medium,), jnp.float32)
    v1 = jnp.abs(jax.random.normal(keys[5], (filters_medium,), jnp.float32)) + 0.5
    s1, b1 = fold_bn(g1, be1, m1, v1)

    # conv2: 3x3 pad=1, no bias -> weight (3, 3, Cmed, Cout) (HWIO)
    w2 = jax.random.normal(keys[6], (3, 3, filters_medium, filters_out),
                           jnp.float32) * 0.1
    g2 = 1.0 + 0.1 * jax.random.normal(keys[7], (filters_out,), jnp.float32)
    be2 = 0.1 * jax.random.normal(keys[8], (filters_out,), jnp.float32)
    m2 = 0.1 * jax.random.normal(keys[9], (filters_out,), jnp.float32)
    v2 = jnp.abs(jax.random.normal(keys[10], (filters_out,), jnp.float32)) + 0.5
    s2, b2 = fold_bn(g2, be2, m2, v2)

    out = residual_block(x, w1, s1, b1, w2, s2, b2)
    out = jax.block_until_ready(out)

    expected = ref_forward(x, w1, s1, b1, w2, s2, b2)
    assert out.shape == (N, H, W, filters_out)
    # Tolerance loosened vs the f32 reference because the MXU operands are bf16
    # (review-requested); the residual path and all elementwise math stay f32.
    assert jnp.allclose(out, expected, rtol=5e-2, atol=5e-2), "mismatch vs reference"

    print("KERNEL_OK")
</pallas_src>

<mosaic_0001>
module attributes {stable_mosaic.version = 11 : i64} {
  func.func @kernel(%arg0: i32, %arg1: i32, %arg2: memref<1x18x24x4xbf16, #tpu.memory_space<vmem>>, %arg3: memref<1x16x16x4xf32, #tpu.memory_space<vmem>>, %arg4: memref<4x2xbf16, #tpu.memory_space<vmem>>, %arg5: memref<1x2xf32, #tpu.memory_space<vmem>>, %arg6: memref<3x3x2x4xbf16, #tpu.memory_space<vmem>>, %arg7: memref<1x4xf32, #tpu.memory_space<vmem>>, %arg8: memref<1x16x16x4xf32, #tpu.memory_space<vmem>>) attributes {dimension_semantics = [#tpu.dimension_semantics<parallel>, #tpu.dimension_semantics<parallel>], iteration_bounds = array<i64: 2, 1>, scalar_prefetch = 0 : i64, scratch_operands = 0 : i64, tpu.core_type = #tpu.core_type<tc>, window_params = [{transform_indices = @transform_0, window_bounds = array<i64: 1, 18, 24, 4>}, {transform_indices = @transform_1, window_bounds = array<i64: 1, 16, 16, 4>}, {pipeline_mode = #tpu.pipeline_mode<synchronous>, transform_indices = @transform_2, window_bounds = array<i64: 4, 2>}, {pipeline_mode = #tpu.pipeline_mode<synchronous>, transform_indices = @transform_3, window_bounds = array<i64: 1, 2>}, {pipeline_mode = #tpu.pipeline_mode<synchronous>, transform_indices = @transform_4, window_bounds = array<i64: 3, 3, 2, 4>}, {pipeline_mode = #tpu.pipeline_mode<synchronous>, transform_indices = @transform_5, window_bounds = array<i64: 1, 4>}, {transform_indices = @transform_6, window_bounds = array<i64: 1, 16, 16, 4>}]} {
    %c16_i32 = arith.constant 16 : i32
    %0 = arith.muli %arg1, %c16_i32 : i32
    %c0 = arith.constant 0 : index
    %1 = arith.index_cast %0 : i32 to index
    %c0_0 = arith.constant 0 : index
    %c0_1 = arith.constant 0 : index
    %2 = vector.load %arg2[%c0, %1, %c0_0, %c0_1] : memref<1x18x24x4xbf16, #tpu.memory_space<vmem>>, vector<1x18x24x4xbf16>
    %3 = vector.shape_cast %2 : vector<1x18x24x4xbf16> to vector<18x24x4xbf16>
    %4 = vector.shape_cast %3 : vector<18x24x4xbf16> to vector<432x4xbf16>
    %c0_2 = arith.constant 0 : index
    %c0_3 = arith.constant 0 : index
    %5 = vector.load %arg4[%c0_2, %c0_3] : memref<4x2xbf16, #tpu.memory_space<vmem>>, vector<4x2xbf16>
    %cst = arith.constant dense<0.000000e+00> : vector<432x2xf32>
    %6 = tpu.matmul %4, %5, %cst {dimension_numbers = #tpu.dot_dimension_numbers<[1], [0], [0], [1], [0, 0, 1, 1], [], []>} : vector<432x4xbf16>, vector<4x2xbf16>, vector<432x2xf32> -> vector<432x2xf32>
    %7 = vector.shape_cast %6 : vector<432x2xf32> to vector<18x24x2xf32>
    %8 = tpu.iota {dimensions = array<i32: 0>} : vector<18x24x1xi32>
    %9 = vector.broadcast %0 : i32 to vector<18x24x1xi32>
    %10 = arith.addi %8, %9 : vector<18x24x1xi32>
    %11 = tpu.iota {dimensions = array<i32: 1>} : vector<18x24x1xi32>
    %c1_i32 = arith.constant 1 : i32
    %12 = vector.broadcast %c1_i32 : i32 to vector<18x24x1xi32>
    %13 = arith.cmpi sge, %10, %12 : vector<18x24x1xi32>
    %c16_i32_4 = arith.constant 16 : i32
    %14 = vector.broadcast %c16_i32_4 : i32 to vector<18x24x1xi32>
    %15 = arith.cmpi sle, %10, %14 : vector<18x24x1xi32>
    %16 = arith.andi %13, %15 : vector<18x24x1xi1>
    %c1_i32_5 = arith.constant 1 : i32
    %17 = vector.broadcast %c1_i32_5 : i32 to vector<18x24x1xi32>
    %18 = arith.cmpi sge, %11, %17 : vector<18x24x1xi32>
    %19 = arith.andi %16, %18 : vector<18x24x1xi1>
    %c16_i32_6 = arith.constant 16 : i32
    %20 = vector.broadcast %c16_i32_6 : i32 to vector<18x24x1xi32>
    %21 = arith.cmpi sle, %11, %20 : vector<18x24x1xi32>
    %22 = arith.andi %19, %21 : vector<18x24x1xi1>
    %c0_7 = arith.constant 0 : index
    %c0_8 = arith.constant 0 : index
    %23 = vector.load %arg5[%c0_7, %c0_8] : memref<1x2xf32, #tpu.memory_space<vmem>>, vector<1x2xf32>
    %24 = vector.shape_cast %23 : vector<1x2xf32> to vector<1x1x2xf32>
    %25 = vector.broadcast %24 : vector<1x1x2xf32> to vector<18x24x2xf32>
    %26 = arith.addf %7, %25 : vector<18x24x2xf32>
    %cst_9 = arith.constant 0.000000e+00 : f32
    %27 = vector.broadcast %cst_9 : f32 to vector<18x24x2xf32>
    %28 = arith.cmpf ogt, %26, %27 : vector<18x24x2xf32>
    %cst_10 = arith.constant 1.000000e-01 : f32
    %29 = vector.broadcast %cst_10 : f32 to vector<18x24x2xf32>
    %30 = arith.mulf %29, %26 : vector<18x24x2xf32>
    %31 = arith.select %28, %26, %30 : vector<18x24x2xi1>, vector<18x24x2xf32>
    %cst_11 = arith.constant 0.000000e+00 : f32
    %32 = vector.shape_cast %22 : vector<18x24x1xi1> to vector<18x24x1xi1>
    %33 = vector.broadcast %32 : vector<18x24x1xi1> to vector<18x24x2xi1>
    %34 = vector.broadcast %cst_11 : f32 to vector<18x24x2xf32>
    %35 = arith.select %33, %31, %34 : vector<18x24x2xi1>, vector<18x24x2xf32>
    %36 = arith.truncf %35 : vector<18x24x2xf32> to vector<18x24x2xbf16>
    %cst_12 = arith.constant 0.000000e+00 : f32
    %37 = vector.broadcast %cst_12 : f32 to vector<256x4xf32>
    %38 = vector.extract_strided_slice %36 {offsets = [0, 0, 0], sizes = [18, 16, 2], strides = [1, 1, 1]} : vector<18x24x2xbf16> to vector<18x16x2xbf16>
    %39 = vector.extract_strided_slice %38 {offsets = [0, 0, 0], sizes = [16, 16, 2], strides = [1, 1, 1]} : vector<18x16x2xbf16> to vector<16x16x2xbf16>
    %40 = vector.shape_cast %39 : vector<16x16x2xbf16> to vector<256x2xbf16>
    %c0_13 = arith.constant 0 : index
    %c0_14 = arith.constant 0 : index
    %c0_15 = arith.constant 0 : index
    %c0_16 = arith.constant 0 : index
    %41 = vector.load %arg6[%c0_13, %c0_14, %c0_15, %c0_16] : memref<3x3x2x4xbf16, #tpu.memory_space<vmem>>, vector<1x1x2x4xbf16>
    %42 = vector.shape_cast %41 : vector<1x1x2x4xbf16> to vector<2x4xbf16>
    %cst_17 = arith.constant dense<0.000000e+00> : vector<256x4xf32>
    %43 = tpu.matmul %40, %42, %cst_17 {dimension_numbers = #tpu.dot_dimension_numbers<[1], [0], [0], [1], [0, 0, 1, 1], [], []>} : vector<256x2xbf16>, vector<2x4xbf16>, vector<256x4xf32> -> vector<256x4xf32>
    %44 = arith.addf %37, %43 : vector<256x4xf32>
    %45 = vector.extract_strided_slice %38 {offsets = [1, 0, 0], sizes = [16, 16, 2], strides = [1, 1, 1]} : vector<18x16x2xbf16> to vector<16x16x2xbf16>
    %46 = vector.shape_cast %45 : vector<16x16x2xbf16> to vector<256x2xbf16>
    %c1 = arith.constant 1 : index
    %c0_18 = arith.constant 0 : index
    %c0_19 = arith.constant 0 : index
    %c0_20 = arith.constant 0 : index
    %47 = vector.load %arg6[%c1, %c0_18, %c0_19, %c0_20] : memref<3x3x2x4xbf16, #tpu.memory_space<vmem>>, vector<1x1x2x4xbf16>
    %48 = vector.shape_cast %47 : vector<1x1x2x4xbf16> to vector<2x4xbf16>
    %cst_21 = arith.constant dense<0.000000e+00> : vector<256x4xf32>
    %49 = tpu.matmul %46, %48, %cst_21 {dimension_numbers = #tpu.dot_dimension_numbers<[1], [0], [0], [1], [0, 0, 1, 1], [], []>} : vector<256x2xbf16>, vector<2x4xbf16>, vector<256x4xf32> -> vector<256x4xf32>
    %50 = arith.addf %44, %49 : vector<256x4xf32>
    %51 = vector.extract_strided_slice %38 {offsets = [2, 0, 0], sizes = [16, 16, 2], strides = [1, 1, 1]} : vector<18x16x2xbf16> to vector<16x16x2xbf16>
    %52 = vector.shape_cast %51 : vector<16x16x2xbf16> to vector<256x2xbf16>
    %c2 = arith.constant 2 : index
    %c0_22 = arith.constant 0 : index
    %c0_23 = arith.constant 0 : index
    %c0_24 = arith.constant 0 : index
    %53 = vector.load %arg6[%c2, %c0_22, %c0_23, %c0_24] : memref<3x3x2x4xbf16, #tpu.memory_space<vmem>>, vector<1x1x2x4xbf16>
    %54 = vector.shape_cast %53 : vector<1x1x2x4xbf16> to vector<2x4xbf16>
    %cst_25 = arith.constant dense<0.000000e+00> : vector<256x4xf32>
    %55 = tpu.matmul %52, %54, %cst_25 {dimension_numbers = #tpu.dot_dimension_numbers<[1], [0], [0], [1], [0, 0, 1, 1], [], []>} : vector<256x2xbf16>, vector<2x4xbf16>, vector<256x4xf32> -> vector<256x4xf32>
    %56 = arith.addf %50, %55 : vector<256x4xf32>
    %57 = vector.extract_strided_slice %36 {offsets = [0, 1, 0], sizes = [18, 16, 2], strides = [1, 1, 1]} : vector<18x24x2xbf16> to vector<18x16x2xbf16>
    %58 = vector.extract_strided_slice %57 {offsets = [0, 0, 0], sizes = [16, 16, 2], strides = [1, 1, 1]} : vector<18x16x2xbf16> to vector<16x16x2xbf16>
    %59 = vector.shape_cast %58 : vector<16x16x2xbf16> to vector<256x2xbf16>
    %c0_26 = arith.constant 0 : index
    %c1_27 = arith.constant 1 : index
    %c0_28 = arith.constant 0 : index
    %c0_29 = arith.constant 0 : index
    %60 = vector.load %arg6[%c0_26, %c1_27, %c0_28, %c0_29] : memref<3x3x2x4xbf16, #tpu.memory_space<vmem>>, vector<1x1x2x4xbf16>
    %61 = vector.shape_cast %60 : vector<1x1x2x4xbf16> to vector<2x4xbf16>
    %cst_30 = arith.constant dense<0.000000e+00> : vector<256x4xf32>
    %62 = tpu.matmul %59, %61, %cst_30 {dimension_numbers = #tpu.dot_dimension_numbers<[1], [0], [0], [1], [0, 0, 1, 1], [], []>} : vector<256x2xbf16>, vector<2x4xbf16>, vector<256x4xf32> -> vector<256x4xf32>
    %63 = arith.addf %56, %62 : vector<256x4xf32>
    %64 = vector.extract_strided_slice %57 {offsets = [1, 0, 0], sizes = [16, 16, 2], strides = [1, 1, 1]} : vector<18x16x2xbf16> to vector<16x16x2xbf16>
    %65 = vector.shape_cast %64 : vector<16x16x2xbf16> to vector<256x2xbf16>
    %c1_31 = arith.constant 1 : index
    %c1_32 = arith.constant 1 : index
    %c0_33 = arith.constant 0 : index
    %c0_34 = arith.constant 0 : index
    %66 = vector.load %arg6[%c1_31, %c1_32, %c0_33, %c0_34] : memref<3x3x2x4xbf16, #tpu.memory_space<vmem>>, vector<1x1x2x4xbf16>
    %67 = vector.shape_cast %66 : vector<1x1x2x4xbf16> to vector<2x4xbf16>
    %cst_35 = arith.constant dense<0.000000e+00> : vector<256x4xf32>
    %68 = tpu.matmul %65, %67, %cst_35 {dimension_numbers = #tpu.dot_dimension_numbers<[1], [0], [0], [1], [0, 0, 1, 1], [], []>} : vector<256x2xbf16>, vector<2x4xbf16>, vector<256x4xf32> -> vector<256x4xf32>
    %69 = arith.addf %63, %68 : vector<256x4xf32>
    %70 = vector.extract_strided_slice %57 {offsets = [2, 0, 0], sizes = [16, 16, 2], strides = [1, 1, 1]} : vector<18x16x2xbf16> to vector<16x16x2xbf16>
    %71 = vector.shape_cast %70 : vector<16x16x2xbf16> to vector<256x2xbf16>
    %c2_36 = arith.constant 2 : index
    %c1_37 = arith.constant 1 : index
    %c0_38 = arith.constant 0 : index
    %c0_39 = arith.constant 0 : index
    %72 = vector.load %arg6[%c2_36, %c1_37, %c0_38, %c0_39] : memref<3x3x2x4xbf16, #tpu.memory_space<vmem>>, vector<1x1x2x4xbf16>
    %73 = vector.shape_cast %72 : vector<1x1x2x4xbf16> to vector<2x4xbf16>
    %cst_40 = arith.constant dense<0.000000e+00> : vector<256x4xf32>
    %74 = tpu.matmul %71, %73, %cst_40 {dimension_numbers = #tpu.dot_dimension_numbers<[1], [0], [0], [1], [0, 0, 1, 1], [], []>} : vector<256x2xbf16>, vector<2x4xbf16>, vector<256x4xf32> -> vector<256x4xf32>
    %75 = arith.addf %69, %74 : vector<256x4xf32>
    %76 = vector.extract_strided_slice %36 {offsets = [0, 2, 0], sizes = [18, 16, 2], strides = [1, 1, 1]} : vector<18x24x2xbf16> to vector<18x16x2xbf16>
    %77 = vector.extract_strided_slice %76 {offsets = [0, 0, 0], sizes = [16, 16, 2], strides = [1, 1, 1]} : vector<18x16x2xbf16> to vector<16x16x2xbf16>
    %78 = vector.shape_cast %77 : vector<16x16x2xbf16> to vector<256x2xbf16>
    %c0_41 = arith.constant 0 : index
    %c2_42 = arith.constant 2 : index
    %c0_43 = arith.constant 0 : index
    %c0_44 = arith.constant 0 : index
    %79 = vector.load %arg6[%c0_41, %c2_42, %c0_43, %c0_44] : memref<3x3x2x4xbf16, #tpu.memory_space<vmem>>, vector<1x1x2x4xbf16>
    %80 = vector.shape_cast %79 : vector<1x1x2x4xbf16> to vector<2x4xbf16>
    %cst_45 = arith.constant dense<0.000000e+00> : vector<256x4xf32>
    %81 = tpu.matmul %78, %80, %cst_45 {dimension_numbers = #tpu.dot_dimension_numbers<[1], [0], [0], [1], [0, 0, 1, 1], [], []>} : vector<256x2xbf16>, vector<2x4xbf16>, vector<256x4xf32> -> vector<256x4xf32>
    %82 = arith.addf %75, %81 : vector<256x4xf32>
    %83 = vector.extract_strided_slice %76 {offsets = [1, 0, 0], sizes = [16, 16, 2], strides = [1, 1, 1]} : vector<18x16x2xbf16> to vector<16x16x2xbf16>
    %84 = vector.shape_cast %83 : vector<16x16x2xbf16> to vector<256x2xbf16>
    %c1_46 = arith.constant 1 : index
    %c2_47 = arith.constant 2 : index
    %c0_48 = arith.constant 0 : index
    %c0_49 = arith.constant 0 : index
    %85 = vector.load %arg6[%c1_46, %c2_47, %c0_48, %c0_49] : memref<3x3x2x4xbf16, #tpu.memory_space<vmem>>, vector<1x1x2x4xbf16>
    %86 = vector.shape_cast %85 : vector<1x1x2x4xbf16> to vector<2x4xbf16>
    %cst_50 = arith.constant dense<0.000000e+00> : vector<256x4xf32>
    %87 = tpu.matmul %84, %86, %cst_50 {dimension_numbers = #tpu.dot_dimension_numbers<[1], [0], [0], [1], [0, 0, 1, 1], [], []>} : vector<256x2xbf16>, vector<2x4xbf16>, vector<256x4xf32> -> vector<256x4xf32>
    %88 = arith.addf %82, %87 : vector<256x4xf32>
    %89 = vector.extract_strided_slice %76 {offsets = [2, 0, 0], sizes = [16, 16, 2], strides = [1, 1, 1]} : vector<18x16x2xbf16> to vector<16x16x2xbf16>
    %90 = vector.shape_cast %89 : vector<16x16x2xbf16> to vector<256x2xbf16>
    %c2_51 = arith.constant 2 : index
    %c2_52 = arith.constant 2 : index
    %c0_53 = arith.constant 0 : index
    %c0_54 = arith.constant 0 : index
    %91 = vector.load %arg6[%c2_51, %c2_52, %c0_53, %c0_54] : memref<3x3x2x4xbf16, #tpu.memory_space<vmem>>, vector<1x1x2x4xbf16>
    %92 = vector.shape_cast %91 : vector<1x1x2x4xbf16> to vector<2x4xbf16>
    %cst_55 = arith.constant dense<0.000000e+00> : vector<256x4xf32>
    %93 = tpu.matmul %90, %92, %cst_55 {dimension_numbers = #tpu.dot_dimension_numbers<[1], [0], [0], [1], [0, 0, 1, 1], [], []>} : vector<256x2xbf16>, vector<2x4xbf16>, vector<256x4xf32> -> vector<256x4xf32>
    %94 = arith.addf %88, %93 : vector<256x4xf32>
    %c0_56 = arith.constant 0 : index
    %c0_57 = arith.constant 0 : index
    %95 = vector.load %arg7[%c0_56, %c0_57] : memref<1x4xf32, #tpu.memory_space<vmem>>, vector<1x4xf32>
    %96 = vector.broadcast %95 : vector<1x4xf32> to vector<256x4xf32>
    %97 = arith.addf %94, %96 : vector<256x4xf32>
    %cst_58 = arith.constant 0.000000e+00 : f32
    %98 = vector.broadcast %cst_58 : f32 to vector<256x4xf32>
    %99 = arith.cmpf ogt, %97, %98 : vector<256x4xf32>
    %cst_59 = arith.constant 1.000000e-01 : f32
    %100 = vector.broadcast %cst_59 : f32 to vector<256x4xf32>
    %101 = arith.mulf %100, %97 : vector<256x4xf32>
    %102 = arith.select %99, %97, %101 : vector<256x4xi1>, vector<256x4xf32>
    %103 = vector.shape_cast %102 : vector<256x4xf32> to vector<16x16x4xf32>
    %c0_60 = arith.constant 0 : index
    %c0_61 = arith.constant 0 : index
    %c0_62 = arith.constant 0 : index
    %c0_63 = arith.constant 0 : index
    %104 = vector.load %arg3[%c0_60, %c0_61, %c0_62, %c0_63] : memref<1x16x16x4xf32, #tpu.memory_space<vmem>>, vector<1x16x16x4xf32>
    %105 = vector.shape_cast %104 : vector<1x16x16x4xf32> to vector<16x16x4xf32>
    %106 = arith.addf %105, %103 : vector<16x16x4xf32>
    %c0_64 = arith.constant 0 : index
    %c0_65 = arith.constant 0 : index
    %c0_66 = arith.constant 0 : index
    %c0_67 = arith.constant 0 : index
    %107 = vector.load %arg8[%c0_64, %c0_65, %c0_66, %c0_67] : memref<1x16x16x4xf32, #tpu.memory_space<vmem>>, vector<1x16x16x4xf32>
    %108 = vector.shape_cast %107 : vector<1x16x16x4xf32> to vector<16x16x4xf32>
    %109 = vector.shape_cast %106 : vector<16x16x4xf32> to vector<1x16x16x4xf32>
    tpu.vector_store %arg8[%c0_64, %c0_65, %c0_66, %c0_67], %109 {strides = array<i32>} : memref<1x16x16x4xf32, #tpu.memory_space<vmem>>, vector<1x16x16x4xf32>,
    return
  }
  func.func @transform_0(%arg0: i32, %arg1: i32) -> (i32, i32, i32, i32) {
    %c0_i32 = arith.constant 0 : i32
    %c0_i32_0 = arith.constant 0 : i32
    %c0_i32_1 = arith.constant 0 : i32
    %c0_i32_2 = arith.constant 0 : i32
    return %arg0, %c0_i32, %c0_i32_0, %c0_i32_1 : i32, i32, i32, i32
  }
  func.func @transform_1(%arg0: i32, %arg1: i32) -> (i32, i32, i32, i32) {
    %c0_i32 = arith.constant 0 : i32
    %c0_i32_0 = arith.constant 0 : i32
    %c0_i32_1 = arith.constant 0 : i32
    return %arg0, %arg1, %c0_i32, %c0_i32_0 : i32, i32, i32, i32
  }
  func.func @transform_2(%arg0: i32, %arg1: i32) -> (i32, i32) {
    %c0_i32 = arith.constant 0 : i32
    %c0_i32_0 = arith.constant 0 : i32
    %c0_i32_1 = arith.constant 0 : i32
    return %c0_i32, %c0_i32_0 : i32, i32
  }
  func.func @transform_3(%arg0: i32, %arg1: i32) -> (i32, i32) {
    %c0_i32 = arith.constant 0 : i32
    %c0_i32_0 = arith.constant 0 : i32
    %c0_i32_1 = arith.constant 0 : i32
    return %c0_i32, %c0_i32_0 : i32, i32
  }
  func.func @transform_4(%arg0: i32, %arg1: i32) -> (i32, i32, i32, i32) {
    %c0_i32 = arith.constant 0 : i32
    %c0_i32_0 = arith.constant 0 : i32
    %c0_i32_1 = arith.constant 0 : i32
    %c0_i32_2 = arith.constant 0 : i32
    %c0_i32_3 = arith.constant 0 : i32
    return %c0_i32, %c0_i32_0, %c0_i32_1, %c0_i32_2 : i32, i32, i32, i32
  }
  func.func @transform_5(%arg0: i32, %arg1: i32) -> (i32, i32) {
    %c0_i32 = arith.constant 0 : i32
    %c0_i32_0 = arith.constant 0 : i32
    %c0_i32_1 = arith.constant 0 : i32
    return %c0_i32, %c0_i32_0 : i32, i32
  }
  func.func @transform_6(%arg0: i32, %arg1: i32) -> (i32, i32, i32, i32) {
    %c0_i32 = arith.constant 0 : i32
    %c0_i32_0 = arith.constant 0 : i32
    %c0_i32_1 = arith.constant 0 : i32
    return %arg0, %arg1, %c0_i32, %c0_i32_0 : i32, i32, i32, i32
  }
}

</mosaic_0001>

<llo_original>
// kernel: tpu_custom_call.1
$region0: #{tpu_custom_call.1}
  #allocation0 [shape = 'u32[]', space=smem, size = 0x4, offset = 0x4, fixed_abs, tag = 'smem constant byte address 0x4 - core index']
  #allocation1 [shape = 'u32[72,128]{1,0:T(1,128)}', space=vmem, size = 0x9000, scoped, tag = 'internal scratch']
  %s0 = inlined_call_operand.vmem [shape: bf16[2,18,24,4], index: 0, kind: input, shape index: {}]
  %s1 = inlined_call_operand.vmem [shape: f32[2,16,16,4], index: 1, kind: input, shape index: {}]
  %s2 = inlined_call_operand.vmem [shape: bf16[4,2], index: 2, kind: input, shape index: {}]
  %s3 = inlined_call_operand.vmem [shape: f32[1,2], index: 3, kind: input, shape index: {}]
  %s4 = inlined_call_operand.vmem [shape: bf16[3,3,2,4], index: 4, kind: input, shape index: {}]
  %s5 = inlined_call_operand.vmem [shape: f32[1,4], index: 5, kind: input, shape index: {}]
  %s6 = inlined_call_operand.vmem [shape: f32[2,16,16,4], index: 6, kind: output, shape index: {}]
  %s7 = sld [smem:[#allocation0]]
  $region57: #{tpu_custom_call.1} parent=0
    _
  %s9 = ssub.s32 1, %s7
  %s10 = scalar_select 0, %s9, %s7
  loop: start=0, step=1, limit=4
  $region2: #{tpu_custom_call.1} parent=0 // loop_pre_header
    _
  $region3: #{tpu_custom_call.1} parent=0 // loop_header
    %s12 = sphi 0, %s16
    %p13 = scmp.ge.s32.totalorder %s12, 4
    %s19 = sphi 0, %s31
    %s20 = sphi 0, %s27
    %s21 = sphi 0, %s19
    %s22 = sphi 0, %s20
    %s23 = sphi 0, %s21
    %s24 = sphi 0, %s22
    %s34 = sphi 0, %s36
    %s37 = sphi 0, %s34
    %s38 = sphi 0, %s37
    %s54 = sphi 0, %s38
    %s62 = sphi 0, %s64
    %s65 = sphi 0, %s62
    %s66 = sphi 0, %s65
    %s82 = sphi 0, %s66
    %s86 = sphi 0, %s86
    %s88 = sphi 0, %s86
    %s89 = sphi 0, %s88
    %s103 = sphi 0, %s89
    %s107 = sphi 0, %s107
    %s109 = sphi 0, %s107
    %s110 = sphi 0, %s109
    %s124 = sphi 0, %s110
    %s128 = sphi 0, %s128
    %s130 = sphi 0, %s128
    %s131 = sphi 0, %s130
    %s145 = sphi 0, %s131
    %s149 = sphi 0, %s149
    %s151 = sphi 0, %s149
    %s152 = sphi 0, %s151
    %s166 = sphi 0, %s152
    %s174 = sphi 0, %s176
    %s177 = sphi 0, %s174
    %s178 = sphi 0, %s177
    %s194 = sphi 0, %s178
  $region4: #{tpu_custom_call.1} parent=0 // loop_header_branch
    %15 = sbr.rel (%p13) target = $region8
  $region5: #{tpu_custom_call.1} parent=0 // loop_body
    %s17 = ssub.s32 %s12, 1
    %s18 = ssub.s32 %s12, 2
    %s25 = sadd.s32 1, %s20
    %p26 = scmp.ge.s32.totalorder %s25, 1
    %s27 = scalar_select %p26, 0, %s25
    %s28 = sadd.s32 1, %s19
    %s29 = scalar_select %p26, %s28, %s19
    %p30 = scmp.ge.s32.totalorder %s29, 2
    %s31 = scalar_select %p30, 0, %s29
    %s32 = ssub.s32 %s19, %s31
    %p33 = scmp.eq.s32.totalorder %s32, 0
    %s35 = sadd.s32 %s34, 1
    %s36 = scalar_select %p33, %s34, %s35
    %p39 = pneg %p33
    %p40 = scmp.eq.s32.totalorder %s12, 1
    %p41 = por %p39, %p40
    %p42 = scmp.ne.s32.totalorder %s34, %s37
    %p43 = scmp.eq.s32.totalorder %s12, 0
    %p44 = por %p42, %p43
    %p45 = scmp.ne.s32.totalorder %s34, %s37
    %p46 = scmp.eq.s32.totalorder %s17, 1
    %p47 = por %p45, %p46
    %p48 = scmp.ne.s32.totalorder %s37, %s38
    %p49 = scmp.eq.s32.totalorder %s17, 0
    %p50 = por %p48, %p49
    %p51 = scmp.ne.s32.totalorder %s37, %s38
    %p52 = scmp.eq.s32.totalorder %s18, 1
    %p53 = por %p51, %p52
    %p55 = scmp.ne.s32.totalorder %s38, %s54
    %p56 = scmp.eq.s32.totalorder %s18, 0
    %p57 = por %p55, %p56
    %s58 = ssub.s32 %s19, %s31
    %s59 = ssub.s32 %s20, %s27
    %s60 = sor.u32 %s58, %s59
    %p61 = scmp.eq.s32.totalorder %s60, 0
    %s63 = sadd.s32 %s62, 1
    %s64 = scalar_select %p61, %s62, %s63
    %p67 = pneg %p61
    %p68 = scmp.eq.s32.totalorder %s12, 1
    %p69 = por %p67, %p68
    %p70 = scmp.ne.s32.totalorder %s62, %s65
    %p71 = scmp.eq.s32.totalorder %s12, 0
    %p72 = por %p70, %p71
    %p73 = scmp.ne.s32.totalorder %s62, %s65
    %p74 = scmp.eq.s32.totalorder %s17, 1
    %p75 = por %p73, %p74
    %p76 = scmp.ne.s32.totalorder %s65, %s66
    %p77 = scmp.eq.s32.totalorder %s17, 0
    %p78 = por %p76, %p77
    %p79 = scmp.ne.s32.totalorder %s65, %s66
    %p80 = scmp.eq.s32.totalorder %s18, 1
    %p81 = por %p79, %p80
    %p83 = scmp.ne.s32.totalorder %s66, %s82
    %p84 = scmp.eq.s32.totalorder %s18, 0
    %p85 = por %p83, %p84
    %s87 = sadd.s32 %s86, 1
    %p90 = scmp.eq.s32.totalorder %s12, 1
    %p91 = scmp.ne.s32.totalorder %s86, %s88
    %p92 = scmp.eq.s32.totalorder %s12, 0
    %p93 = por %p91, %p92
    %p94 = scmp.ne.s32.totalorder %s86, %s88
    %p95 = scmp.eq.s32.totalorder %s17, 1
    %p96 = por %p94, %p95
    %p97 = scmp.ne.s32.totalorder %s88, %s89
    %p98 = scmp.eq.s32.totalorder %s17, 0
    %p99 = por %p97, %p98
    %p100 = scmp.ne.s32.totalorder %s88, %s89
    %p101 = scmp.eq.s32.totalorder %s18, 1
    %p102 = por %p100, %p101
    %p104 = scmp.ne.s32.totalorder %s89, %s103
    %p105 = scmp.eq.s32.totalorder %s18, 0
    %p106 = por %p104, %p105
    %s108 = sadd.s32 %s107, 1
    %p111 = scmp.eq.s32.totalorder %s12, 1
    %p112 = scmp.ne.s32.totalorder %s107, %s109
    %p113 = scmp.eq.s32.totalorder %s12, 0
    %p114 = por %p112, %p113
    %p115 = scmp.ne.s32.totalorder %s107, %s109
    %p116 = scmp.eq.s32.totalorder %s17, 1
    %p117 = por %p115, %p116
    %p118 = scmp.ne.s32.totalorder %s109, %s110
    %p119 = scmp.eq.s32.totalorder %s17, 0
    %p120 = por %p118, %p119
    %p121 = scmp.ne.s32.totalorder %s109, %s110
    %p122 = scmp.eq.s32.totalorder %s18, 1
    %p123 = por %p121, %p122
    %p125 = scmp.ne.s32.totalorder %s110, %s124
    %p126 = scmp.eq.s32.totalorder %s18, 0
    %p127 = por %p125, %p126
    %s129 = sadd.s32 %s128, 1
    %p132 = scmp.eq.s32.totalorder %s12, 1
    %p133 = scmp.ne.s32.totalorder %s128, %s130
    %p134 = scmp.eq.s32.totalorder %s12, 0
    %p135 = por %p133, %p134
    %p136 = scmp.ne.s32.totalorder %s128, %s130
    %p137 = scmp.eq.s32.totalorder %s17, 1
    %p138 = por %p136, %p137
    %p139 = scmp.ne.s32.totalorder %s130, %s131
    %p140 = scmp.eq.s32.totalorder %s17, 0
    %p141 = por %p139, %p140
    %p142 = scmp.ne.s32.totalorder %s130, %s131
    %p143 = scmp.eq.s32.totalorder %s18, 1
    %p144 = por %p142, %p143
    %p146 = scmp.ne.s32.totalorder %s131, %s145
    %p147 = scmp.eq.s32.totalorder %s18, 0
    %p148 = por %p146, %p147
    %s150 = sadd.s32 %s149, 1
    %p153 = scmp.eq.s32.totalorder %s12, 1
    %p154 = scmp.ne.s32.totalorder %s149, %s151
    %p155 = scmp.eq.s32.totalorder %s12, 0
    %p156 = por %p154, %p155
    %p157 = scmp.ne.s32.totalorder %s149, %s151
    %p158 = scmp.eq.s32.totalorder %s17, 1
    %p159 = por %p157, %p158
    %p160 = scmp.ne.s32.totalorder %s151, %s152
    %p161 = scmp.eq.s32.totalorder %s17, 0
    %p162 = por %p160, %p161
    %p163 = scmp.ne.s32.totalorder %s151, %s152
    %p164 = scmp.eq.s32.totalorder %s18, 1
    %p165 = por %p163, %p164
    %p167 = scmp.ne.s32.totalorder %s152, %s166
    %p168 = scmp.eq.s32.totalorder %s18, 0
    %p169 = por %p167, %p168
    %s170 = ssub.s32 %s19, %s31
    %s171 = ssub.s32 %s20, %s27
    %s172 = sor.u32 %s170, %s171
    %p173 = scmp.eq.s32.totalorder %s172, 0
    %s175 = sadd.s32 %s174, 1
    %s176 = scalar_select %p173, %s174, %s175
    %p179 = pneg %p173
    %p180 = scmp.eq.s32.totalorder %s12, 1
    %p181 = por %p179, %p180
    %p182 = scmp.ne.s32.totalorder %s174, %s177
    %p183 = scmp.eq.s32.totalorder %s12, 0
    %p184 = por %p182, %p183
    %p185 = scmp.ne.s32.totalorder %s174, %s177
    %p186 = scmp.eq.s32.totalorder %s17, 1
    %p187 = por %p185, %p186
    %p188 = scmp.ne.s32.totalorder %s177, %s178
    %p189 = scmp.eq.s32.totalorder %s17, 0
    %p190 = por %p188, %p189
    %p191 = scmp.ne.s32.totalorder %s177, %s178
    %p192 = scmp.eq.s32.totalorder %s18, 1
    %p193 = por %p191, %p192
    %p195 = scmp.ne.s32.totalorder %s178, %s194
    %p196 = scmp.eq.s32.totalorder %s18, 0
    %p197 = por %p195, %p196
    %p198 = scmp.le.s32.totalorder 1, %s12
    %p199 = scmp.lt.s32.totalorder %s12, 3
    %p200 = pnand %p198, %p199
    %p201 = pneg %p200
    // Predicated region
    $region9: #{tpu_custom_call.1} parent=5 // pred_check
      _
    $region10: #{tpu_custom_call.1} parent=5 // pred_check_branch
      %203 = sbr.rel (%p200) target = $region12
    $region11: #{tpu_custom_call.1} parent=5 // pred_region
      %s204 = ssub.s32 %s12, 1
      // Predicated region
      $region13: #{tpu_custom_call.1} parent=11 // pred_check
        %p205 = pneg %p99
      $region14: #{tpu_custom_call.1} parent=11 // pred_check_branch
        %207 = sbr.rel (%p205) target = $region16
      $region15: #{tpu_custom_call.1} parent=11 // pred_region
        _
      $region16: #{tpu_custom_call.1} parent=11 // pred_fallthru
        _
      // Predicated region
      $region17: #{tpu_custom_call.1} parent=11 // pred_check
        %p208 = pneg %p120
      $region18: #{tpu_custom_call.1} parent=11 // pred_check_branch
        %210 = sbr.rel (%p208) target = $region20
      $region19: #{tpu_custom_call.1} parent=11 // pred_region
        _
      $region20: #{tpu_custom_call.1} parent=11 // pred_fallthru
        _
      // Predicated region
      $region21: #{tpu_custom_call.1} parent=11 // pred_check
        %p211 = pneg %p141
      $region22: #{tpu_custom_call.1} parent=11 // pred_check_branch
        %213 = sbr.rel (%p211) target = $region24
      $region23: #{tpu_custom_call.1} parent=11 // pred_region
        _
      $region24: #{tpu_custom_call.1} parent=11 // pred_fallthru
        _
      // Predicated region
      $region25: #{tpu_custom_call.1} parent=11 // pred_check
        %p214 = pneg %p162
      $region26: #{tpu_custom_call.1} parent=11 // pred_check_branch
        %216 = sbr.rel (%p214) target = $region28
      $region27: #{tpu_custom_call.1} parent=11 // pred_region
        _
      $region28: #{tpu_custom_call.1} parent=11 // pred_fallthru
        _
    $region12: #{tpu_custom_call.1} parent=5 // pred_fallthru
      _
    %p217 = scmp.lt.s32.totalorder %s12, 2
    // Predicated region
    $region29: #{tpu_custom_call.1} parent=5 // pred_check
      %p218 = pneg %p217
    $region30: #{tpu_custom_call.1} parent=5 // pred_check_branch
      %220 = sbr.rel (%p218) target = $region32
    $region31: #{tpu_custom_call.1} parent=5 // pred_region
      // Predicated region
      $region33: #{tpu_custom_call.1} parent=31 // pred_check
        %p221 = pneg %p44
      $region34: #{tpu_custom_call.1} parent=31 // pred_check_branch
        %223 = sbr.rel (%p221) target = $region36
      $region35: #{tpu_custom_call.1} parent=31 // pred_region
        %p224 = scmp.lt.s32.totalorder %s19, 1
        %s225 = scalar_select %p224, %s19, 1
        %s226 = smul.addr %s225, 54
        %s227 = smul.addr %s226, 4
        %s228 = scalar_lea.vmem %s0, %s227
      $region36: #{tpu_custom_call.1} parent=31 // pred_fallthru
        _
      // Predicated region
      $region37: #{tpu_custom_call.1} parent=31 // pred_check
        %p229 = pneg %p72
      $region38: #{tpu_custom_call.1} parent=31 // pred_check_branch
        %231 = sbr.rel (%p229) target = $region40
      $region39: #{tpu_custom_call.1} parent=31 // pred_region
        %s232 = smul.u32 16, %s20
        %p233 = scmp.lt.s32.totalorder %s19, 1
        %s234 = scalar_select %p233, %s19, 1
        %p235 = scmp.lt.s32.totalorder %s232, 15
        %s236 = scalar_select %p235, %s232, 15
        %s237 = smul.addr %s236, 2
        %s238 = smul.addr %s234, 32
        %s239 = sadd.s32 %s237, %s238
        %s240 = smul.addr %s239, 8
        %s241 = scalar_lea.vmem %s1, %s240
        %s242 = smul.u32 16, %s20
      $region40: #{tpu_custom_call.1} parent=31 // pred_fallthru
        _
    $region32: #{tpu_custom_call.1} parent=5 // pred_fallthru
      _
    %p243 = scmp.le.s32.totalorder 1, %s12
    %p244 = scmp.lt.s32.totalorder %s12, 3
    %p245 = pnand %p243, %p244
    %p246 = pneg %p245
    // Predicated region
    $region41: #{tpu_custom_call.1} parent=5 // pred_check
      _
    $region42: #{tpu_custom_call.1} parent=5 // pred_check_branch
      %248 = sbr.rel (%p245) target = $region44
    $region43: #{tpu_custom_call.1} parent=5 // pred_region
      %s249 = ssub.s32 %s12, 1
      %p250 = scmp.lt.s32.totalorder %s21, 1
      %s251 = scalar_select %p250, %s21, 1
      %s252 = smul.addr %s251, 54
      %s253 = smul.addr %s252, 4
      %s254 = scalar_lea.vmem %s0, %s253
      %p255 = pneg %p50
      %p256 = pneg %p47
      %s257 = smul.u32 16, %s22
      %p258 = scmp.lt.s32.totalorder %s21, 1
      %s259 = scalar_select %p258, %s21, 1
      %p260 = scmp.lt.s32.totalorder %s257, 15
      %s261 = scalar_select %p260, %s257, 15
      %s262 = smul.addr %s261, 2
      %s263 = smul.addr %s259, 32
      %s264 = sadd.s32 %s262, %s263
      %s265 = smul.addr %s264, 8
      %s266 = scalar_lea.vmem %s1, %s265
      %p267 = pneg %p78
      %p268 = pneg %p75
      %p269 = pneg %p99
      %p270 = pneg %p96
      %p271 = pneg %p120
      %p272 = pneg %p117
      %p273 = pneg %p141
      %p274 = pneg %p138
      %p275 = pneg %p162
      %p276 = pneg %p159
      %p277 = pneg %p190
      %p278 = pneg %p187
      %s279 = smul.u32 16, %s22
      %p280 = scmp.lt.s32.totalorder %s21, 1
      %s281 = scalar_select %p280, %s21, 1
      %p282 = scmp.lt.s32.totalorder %s279, 15
      %s283 = scalar_select %p282, %s279, 15
      %s284 = smul.addr %s283, 2
      %s285 = smul.addr %s281, 32
      %s286 = sadd.s32 %s284, %s285
      %s287 = smul.addr %s286, 8
      %s288 = scalar_lea.vmem %s6, %s287
      %p289 = scmp.lt.s32.totalorder %s21, 1
      %s290 = scalar_select %p289, %s21, 1
      %s291 = smul.addr %s290, 54
      %s292 = smul.addr %s291, 4
      %s293 = scalar_lea.vmem %s0, %s292
      %s294 = smul.u32 16, %s22
      %p295 = scmp.lt.s32.totalorder %s21, 1
      %s296 = scalar_select %p295, %s21, 1
      %p297 = scmp.lt.s32.totalorder %s294, 15
      %s298 = scalar_select %p297, %s294, 15
      %s299 = smul.addr %s298, 2
      %s300 = smul.addr %s296, 32
      %s301 = sadd.s32 %s299, %s300
      %s302 = smul.addr %s301, 8
      %s303 = scalar_lea.vmem %s1, %s302
      %s304 = smul.u32 16, %s22
      %s305 = smul.u32 16, %s22
      %p306 = scmp.lt.s32.totalorder %s21, 1
      %s307 = scalar_select %p306, %s21, 1
      %p308 = scmp.lt.s32.totalorder %s305, 15
      %s309 = scalar_select %p308, %s305, 15
      %s310 = smul.addr %s309, 2
      %s311 = smul.addr %s307, 32
      %s312 = sadd.s32 %s310, %s311
      %s313 = smul.addr %s312, 8
      %s314 = scalar_lea.vmem %s6, %s313
      %s315 = smul.u32 16, %s22
      %s317 = smul.u32 %s22, 16
      %s318 = smul.u32 %s317, 3
      %s319 = smul.addr %s318, 4
      %s320 = scalar_lea.vmem %s293, %s319
      %v321 = vld [vmem:[%s320] sm:$0xf]
      %v322 = vld [vmem:[%s320 + $0x4] sm:$0xf]
      %v323 = vld [vmem:[%s320 + $0x8] sm:$0xf]
      %v324 = vld [vmem:[%s320 + $0xc] sm:$0xf]
      %v325 = vld [vmem:[%s320 + $0x10] sm:$0xf]
      %v326 = vld [vmem:[%s320 + $0x14] sm:$0xf]
      %v327 = vld [vmem:[%s320 + $0x18] sm:$0xf]
      %v328 = vld [vmem:[%s320 + $0x1c] sm:$0xf]
      %v329 = vld [vmem:[%s320 + $0x20] sm:$0xf]
      %v330 = vld [vmem:[%s320 + $0x24] sm:$0xf]
      %v331 = vld [vmem:[%s320 + $0x28] sm:$0xf]
      %v332 = vld [vmem:[%s320 + $0x2c] sm:$0xf]
      %v333 = vld [vmem:[%s320 + $0x30] sm:$0xf]
      %v334 = vld [vmem:[%s320 + $0x34] sm:$0xf]
      %v335 = vld [vmem:[%s320 + $0x38] sm:$0xf]
      %v336 = vld [vmem:[%s320 + $0x3c] sm:$0xf]
      %v337 = vld [vmem:[%s320 + $0x40] sm:$0xf]
      %v338 = vld [vmem:[%s320 + $0x44] sm:$0xf]
      %v339 = vld [vmem:[%s320 + $0x48] sm:$0xf]
      %v340 = vld [vmem:[%s320 + $0x4c] sm:$0xf]
      %v341 = vld [vmem:[%s320 + $0x50] sm:$0xf]
      %v342 = vld [vmem:[%s320 + $0x54] sm:$0xf]
      %v343 = vld [vmem:[%s320 + $0x58] sm:$0xf]
      %v344 = vld [vmem:[%s320 + $0x5c] sm:$0xf]
      %v345 = vld [vmem:[%s320 + $0x60] sm:$0xf]
      %v346 = vld [vmem:[%s320 + $0x64] sm:$0xf]
      %v347 = vld [vmem:[%s320 + $0x68] sm:$0xf]
      %v348 = vld [vmem:[%s320 + $0x6c] sm:$0xf]
      %v349 = vld [vmem:[%s320 + $0x70] sm:$0xf]
      %v350 = vld [vmem:[%s320 + $0x74] sm:$0xf]
      %v351 = vld [vmem:[%s320 + $0x78] sm:$0xf]
      %v352 = vld [vmem:[%s320 + $0x7c] sm:$0xf]
      %v353 = vld [vmem:[%s320 + $0x80] sm:$0xf]
      %v354 = vld [vmem:[%s320 + $0x84] sm:$0xf]
      %v355 = vld [vmem:[%s320 + $0x88] sm:$0xf]
      %v356 = vld [vmem:[%s320 + $0x8c] sm:$0xf]
      %v357 = vld [vmem:[%s320 + $0x90] sm:$0xf]
      %v358 = vld [vmem:[%s320 + $0x94] sm:$0xf]
      %v359 = vld [vmem:[%s320 + $0x98] sm:$0xf]
      %v360 = vld [vmem:[%s320 + $0x9c] sm:$0xf]
      %v361 = vld [vmem:[%s320 + $0xa0] sm:$0xf]
      %v362 = vld [vmem:[%s320 + $0xa4] sm:$0xf]
      %v363 = vld [vmem:[%s320 + $0xa8] sm:$0xf]
      %v364 = vld [vmem:[%s320 + $0xac] sm:$0xf]
      %v365 = vld [vmem:[%s320 + $0xb0] sm:$0xf]
      %v366 = vld [vmem:[%s320 + $0xb4] sm:$0xf]
      %v367 = vld [vmem:[%s320 + $0xb8] sm:$0xf]
      %v368 = vld [vmem:[%s320 + $0xbc] sm:$0xf]
      %v369 = vld [vmem:[%s320 + $0xc0] sm:$0xf]
      %v370 = vld [vmem:[%s320 + $0xc4] sm:$0xf]
      %v371 = vld [vmem:[%s320 + $0xc8] sm:$0xf]
      %v372 = vld [vmem:[%s320 + $0xcc] sm:$0xf]
      %v373 = vld [vmem:[%s320 + $0xd0] sm:$0xf]
      %v374 = vld [vmem:[%s320 + $0xd4] sm:$0xf]
      %v375 = vld [vmem:[%s2] sm:$0x3]
      %v430 = vunpack.c.l.b16 %v321
      %v431 = vunpack.c.l.b16 %v322
      %v432 = vunpack.c.l.b16 %v323
      %v433 = vunpack.c.l.b16 %v324
      %v434 = vunpack.c.l.b16 %v325
      %v435 = vunpack.c.l.b16 %v326
      %v436 = vunpack.c.l.b16 %v327
      %v437 = vunpack.c.l.b16 %v328
      %v438 = vunpack.c.l.b16 %v329
      %v439 = vunpack.c.l.b16 %v330
      %v440 = vunpack.c.l.b16 %v331
      %v441 = vunpack.c.l.b16 %v332
      %v442 = vunpack.c.l.b16 %v333
      %v443 = vunpack.c.l.b16 %v334
      %v444 = vunpack.c.l.b16 %v335
      %v445 = vunpack.c.l.b16 %v336
      %v446 = vunpack.c.l.b16 %v337
      %v447 = vunpack.c.l.b16 %v338
      %v448 = vunpack.c.l.b16 %v339
      %v449 = vunpack.c.l.b16 %v340
      %v450 = vunpack.c.l.b16 %v341
      %v451 = vunpack.c.l.b16 %v342
      %v452 = vunpack.c.l.b16 %v343
      %v453 = vunpack.c.l.b16 %v344
      %v454 = vunpack.c.l.b16 %v345
      %v455 = vunpack.c.l.b16 %v346
      %v456 = vunpack.c.l.b16 %v347
      %v457 = vunpack.c.l.b16 %v348
      %v458 = vunpack.c.l.b16 %v349
      %v459 = vunpack.c.l.b16 %v350
      %v460 = vunpack.c.l.b16 %v351
      %v461 = vunpack.c.l.b16 %v352
      %v462 = vunpack.c.l.b16 %v353
      %v463 = vunpack.c.l.b16 %v354
      %v464 = vunpack.c.l.b16 %v355
      %v465 = vunpack.c.l.b16 %v356
      %v466 = vunpack.c.l.b16 %v357
      %v467 = vunpack.c.l.b16 %v358
      %v468 = vunpack.c.l.b16 %v359
      %v469 = vunpack.c.l.b16 %v360
      %v470 = vunpack.c.l.b16 %v361
      %v471 = vunpack.c.l.b16 %v362
      %v472 = vunpack.c.l.b16 %v363
      %v473 = vunpack.c.l.b16 %v364
      %v474 = vunpack.c.l.b16 %v365
      %v475 = vunpack.c.l.b16 %v366
      %v476 = vunpack.c.l.b16 %v367
      %v477 = vunpack.c.l.b16 %v368
      %v478 = vunpack.c.l.b16 %v369
      %v479 = vunpack.c.l.b16 %v370
      %v480 = vunpack.c.l.b16 %v371
      %v481 = vunpack.c.l.b16 %v372
      %v482 = vunpack.c.l.b16 %v373
      %v483 = vunpack.c.l.b16 %v374
      %v484 = vpack.c.b16 %v431, %v430
      %v485 = vpack.c.b16 %v433, %v432
      %v486 = vpack.c.b16 %v435, %v434
      %v487 = vpack.c.b16 %v437, %v436
      %v488 = vpack.c.b16 %v439, %v438
      %v489 = vpack.c.b16 %v441, %v440
      %v490 = vpack.c.b16 %v443, %v442
      %v491 = vpack.c.b16 %v445, %v444
      %v492 = vpack.c.b16 %v447, %v446
      %v493 = vpack.c.b16 %v449, %v448
      %v494 = vpack.c.b16 %v451, %v450
      %v495 = vpack.c.b16 %v453, %v452
      %v496 = vpack.c.b16 %v455, %v454
      %v497 = vpack.c.b16 %v457, %v456
      %v498 = vpack.c.b16 %v459, %v458
      %v499 = vpack.c.b16 %v461, %v460
      %v500 = vpack.c.b16 %v463, %v462
      %v501 = vpack.c.b16 %v465, %v464
      %v502 = vpack.c.b16 %v467, %v466
      %v503 = vpack.c.b16 %v469, %v468
      %v504 = vpack.c.b16 %v471, %v470
      %v505 = vpack.c.b16 %v473, %v472
      %v506 = vpack.c.b16 %v475, %v474
      %v507 = vpack.c.b16 %v477, %v476
      %v508 = vpack.c.b16 %v479, %v478
      %v509 = vpack.c.b16 %v481, %v480
      %v510 = vpack.c.b16 %v483, %v482
      %vm511 = vcmask 31744
      %v513 = vsel %vm511, %v484, 0
      %v516 = vsel %vm511, %v485, 0
      %v519 = vsel %vm511, %v486, 0
      %v522 = vsel %vm511, %v487, 0
      %v525 = vsel %vm511, %v488, 0
      %v528 = vsel %vm511, %v489, 0
      %v531 = vsel %vm511, %v490, 0
      %v534 = vsel %vm511, %v491, 0
      %v537 = vsel %vm511, %v492, 0
      %v540 = vsel %vm511, %v493, 0
      %v543 = vsel %vm511, %v494, 0
      %v546 = vsel %vm511, %v495, 0
      %v549 = vsel %vm511, %v496, 0
      %v552 = vsel %vm511, %v497, 0
      %v555 = vsel %vm511, %v498, 0
      %v558 = vsel %vm511, %v499, 0
      %v561 = vsel %vm511, %v500, 0
      %v564 = vsel %vm511, %v501, 0
      %v567 = vsel %vm511, %v502, 0
      %v570 = vsel %vm511, %v503, 0
      %v573 = vsel %vm511, %v504, 0
      %v576 = vsel %vm511, %v505, 0
      %v579 = vsel %vm511, %v506, 0
      %v582 = vsel %vm511, %v507, 0
      %v585 = vsel %vm511, %v508, 0
      %v588 = vsel %vm511, %v509, 0
      %v591 = vsel %vm511, %v510, 0
      %vm593 = vcmask 1041408
      %v595 = vsel %vm593, %v375, 0
      %597 = vmatpush.bf16.msra.mxu0 0
      %598 = vmatpush.bf16.msra.mxu0 0
      %599 = vmatpush.bf16.msra.mxu0 0
      %600 = vmatpush.bf16.msra.mxu0 0
      %601 = vmatpush.bf16.msra.mxu0 0
      %602 = vmatpush.bf16.msra.mxu0 0
      %603 = vmatpush.bf16.msra.mxu0 0
      %604 = vmatpush.bf16.msra.mxu0 %v595
      %605 = vmatmul.bf16.gmra.mxu0 %v513
      %v606 = vpop.f32.mrf.mxu0
      %v607 = vadd.f32 0.0, %v606
      %v608 = vpop.f32.mrf.mxu0
      %v609 = vadd.f32 0.0, %v608
      %610 = vmatmul.bf16.gmra.mxu0 %v516
      %v611 = vpop.f32.mrf.mxu0
      %v612 = vadd.f32 0.0, %v611
      %v613 = vpop.f32.mrf.mxu0
      %v614 = vadd.f32 0.0, %v613
      %615 = vmatmul.bf16.gmra.mxu0 %v519
      %v616 = vpop.f32.mrf.mxu0
      %v617 = vadd.f32 0.0, %v616
      %v618 = vpop.f32.mrf.mxu0
      %v619 = vadd.f32 0.0, %v618
      %620 = vmatmul.bf16.gmra.mxu0 %v522
      %v621 = vpop.f32.mrf.mxu0
      %v622 = vadd.f32 0.0, %v621
      %v623 = vpop.f32.mrf.mxu0
      %v624 = vadd.f32 0.0, %v623
      %625 = vmatmul.bf16.gmra.mxu0 %v525
      %v626 = vpop.f32.mrf.mxu0
      %v627 = vadd.f32 0.0, %v626
      %v628 = vpop.f32.mrf.mxu0
      %v629 = vadd.f32 0.0, %v628
      %630 = vmatmul.bf16.gmra.mxu0 %v528
      %v631 = vpop.f32.mrf.mxu0
      %v632 = vadd.f32 0.0, %v631
      %v633 = vpop.f32.mrf.mxu0
      %v634 = vadd.f32 0.0, %v633
      %635 = vmatmul.bf16.gmra.mxu0 %v531
      %v636 = vpop.f32.mrf.mxu0
      %v637 = vadd.f32 0.0, %v636
      %v638 = vpop.f32.mrf.mxu0
      %v639 = vadd.f32 0.0, %v638
      %640 = vmatmul.bf16.gmra.mxu0 %v534
      %v641 = vpop.f32.mrf.mxu0
      %v642 = vadd.f32 0.0, %v641
      %v643 = vpop.f32.mrf.mxu0
      %v644 = vadd.f32 0.0, %v643
      %645 = vmatmul.bf16.gmra.mxu0 %v537
      %v646 = vpop.f32.mrf.mxu0
      %v647 = vadd.f32 0.0, %v646
      %v648 = vpop.f32.mrf.mxu0
      %v649 = vadd.f32 0.0, %v648
      %650 = vmatmul.bf16.gmra.mxu0 %v540
      %v651 = vpop.f32.mrf.mxu0
      %v652 = vadd.f32 0.0, %v651
      %v653 = vpop.f32.mrf.mxu0
      %v654 = vadd.f32 0.0, %v653
      %655 = vmatmul.bf16.gmra.mxu0 %v543
      %v656 = vpop.f32.mrf.mxu0
      %v657 = vadd.f32 0.0, %v656
      %v658 = vpop.f32.mrf.mxu0
      %v659 = vadd.f32 0.0, %v658
      %660 = vmatmul.bf16.gmra.mxu0 %v546
      %v661 = vpop.f32.mrf.mxu0
      %v662 = vadd.f32 0.0, %v661
      %v663 = vpop.f32.mrf.mxu0
      %v664 = vadd.f32 0.0, %v663
      %665 = vmatmul.bf16.gmra.mxu0 %v549
      %v666 = vpop.f32.mrf.mxu0
      %v667 = vadd.f32 0.0, %v666
      %v668 = vpop.f32.mrf.mxu0
      %v669 = vadd.f32 0.0, %v668
      %670 = vmatmul.bf16.gmra.mxu0 %v552
      %v671 = vpop.f32.mrf.mxu0
      %v672 = vadd.f32 0.0, %v671
      %v673 = vpop.f32.mrf.mxu0
      %v674 = vadd.f32 0.0, %v673
      %675 = vmatmul.bf16.gmra.mxu0 %v555
      %v676 = vpop.f32.mrf.mxu0
      %v677 = vadd.f32 0.0, %v676
      %v678 = vpop.f32.mrf.mxu0
      %v679 = vadd.f32 0.0, %v678
      %680 = vmatmul.bf16.gmra.mxu0 %v558
      %v681 = vpop.f32.mrf.mxu0
      %v682 = vadd.f32 0.0, %v681
      %v683 = vpop.f32.mrf.mxu0
      %v684 = vadd.f32 0.0, %v683
      %685 = vmatmul.bf16.gmra.mxu0 %v561
      %v686 = vpop.f32.mrf.mxu0
      %v687 = vadd.f32 0.0, %v686
      %v688 = vpop.f32.mrf.mxu0
      %v689 = vadd.f32 0.0, %v688
      %690 = vmatmul.bf16.gmra.mxu0 %v564
      %v691 = vpop.f32.mrf.mxu0
      %v692 = vadd.f32 0.0, %v691
      %v693 = vpop.f32.mrf.mxu0
      %v694 = vadd.f32 0.0, %v693
      %695 = vmatmul.bf16.gmra.mxu0 %v567
      %v696 = vpop.f32.mrf.mxu0
      %v697 = vadd.f32 0.0, %v696
      %v698 = vpop.f32.mrf.mxu0
      %v699 = vadd.f32 0.0, %v698
      %700 = vmatmul.bf16.gmra.mxu0 %v570
      %v701 = vpop.f32.mrf.mxu0
      %v702 = vadd.f32 0.0, %v701
      %v703 = vpop.f32.mrf.mxu0
      %v704 = vadd.f32 0.0, %v703
      %705 = vmatmul.bf16.gmra.mxu0 %v573
      %v706 = vpop.f32.mrf.mxu0
      %v707 = vadd.f32 0.0, %v706
      %v708 = vpop.f32.mrf.mxu0
      %v709 = vadd.f32 0.0, %v708
      %710 = vmatmul.bf16.gmra.mxu0 %v576
      %v711 = vpop.f32.mrf.mxu0
      %v712 = vadd.f32 0.0, %v711
      %v713 = vpop.f32.mrf.mxu0
      %v714 = vadd.f32 0.0, %v713
      %715 = vmatmul.bf16.gmra.mxu0 %v579
      %v716 = vpop.f32.mrf.mxu0
      %v717 = vadd.f32 0.0, %v716
      %v718 = vpop.f32.mrf.mxu0
      %v719 = vadd.f32 0.0, %v718
      %720 = vmatmul.bf16.gmra.mxu0 %v582
      %v721 = vpop.f32.mrf.mxu0
      %v722 = vadd.f32 0.0, %v721
      %v723 = vpop.f32.mrf.mxu0
      %v724 = vadd.f32 0.0, %v723
      %725 = vmatmul.bf16.gmra.mxu0 %v585
      %v726 = vpop.f32.mrf.mxu0
      %v727 = vadd.f32 0.0, %v726
      %v728 = vpop.f32.mrf.mxu0
      %v729 = vadd.f32 0.0, %v728
      %730 = vmatmul.bf16.gmra.mxu0 %v588
      %v731 = vpop.f32.mrf.mxu0
      %v732 = vadd.f32 0.0, %v731
      %v733 = vpop.f32.mrf.mxu0
      %v734 = vadd.f32 0.0, %v733
      %735 = vmatmul.bf16.gmra.mxu0 %v591
      %v736 = vpop.f32.mrf.mxu0
      %v737 = vadd.f32 0.0, %v736
      %v738 = vpop.f32.mrf.mxu0
      %v739 = vadd.f32 0.0, %v738
      %740 = vdwg.mxu0
      %v741 = vstv %s317
      %v742 = vadd.s32 %v741, 1
      %v743 = vadd.s32 %v741, 2
      %v744 = vadd.s32 %v741, 3
      %v745 = vadd.s32 %v741, 4
      %v746 = vadd.s32 %v741, 5
      %v747 = vadd.s32 %v741, 6
      %v748 = vadd.s32 %v741, 7
      %v749 = vadd.s32 %v741, 8
      %v750 = vadd.s32 %v741, 9
      %v751 = vadd.s32 %v741, 10
      %v752 = vadd.s32 %v741, 11
      %v753 = vadd.s32 %v741, 12
      %v754 = vadd.s32 %v741, 13
      %v755 = vadd.s32 %v741, 14
      %v756 = vadd.s32 %v741, 15
      %v757 = vadd.s32 %v741, 16
      %v758 = vadd.s32 %v741, 17
      %v759 = vlaneseq
      %v760 = vshrl.u32 %v759, 7
      %v761 = vadd.s32 %v760, 8
      %v762 = vadd.s32 %v760, 16
      %vm763 = vcmp.ge.s32.totalorder %v741, 1
      %vm764 = vcmp.ge.s32.totalorder %v742, 1
      %vm765 = vcmp.ge.s32.totalorder %v743, 1
      %vm766 = vcmp.ge.s32.totalorder %v744, 1
      %vm767 = vcmp.ge.s32.totalorder %v745, 1
      %vm768 = vcmp.ge.s32.totalorder %v746, 1
      %vm769 = vcmp.ge.s32.totalorder %v747, 1
      %vm770 = vcmp.ge.s32.totalorder %v748, 1
      %vm771 = vcmp.ge.s32.totalorder %v749, 1
      %vm772 = vcmp.ge.s32.totalorder %v750, 1
      %vm773 = vcmp.ge.s32.totalorder %v751, 1
      %vm774 = vcmp.ge.s32.totalorder %v752, 1
      %vm775 = vcmp.ge.s32.totalorder %v753, 1
      %vm776 = vcmp.ge.s32.totalorder %v754, 1
      %vm777 = vcmp.ge.s32.totalorder %v755, 1
      %vm778 = vcmp.ge.s32.totalorder %v756, 1
      %vm779 = vcmp.ge.s32.totalorder %v757, 1
      %vm780 = vcmp.ge.s32.totalorder %v758, 1
      %vm781 = vcmp.le.s32.totalorder %v741, 16
      %vm782 = vcmp.le.s32.totalorder %v742, 16
      %vm783 = vcmp.le.s32.totalorder %v743, 16
      %vm784 = vcmp.le.s32.totalorder %v744, 16
      %vm785 = vcmp.le.s32.totalorder %v745, 16
      %vm786 = vcmp.le.s32.totalorder %v746, 16
      %vm787 = vcmp.le.s32.totalorder %v747, 16
      %vm788 = vcmp.le.s32.totalorder %v748, 16
      %vm789 = vcmp.le.s32.totalorder %v749, 16
      %vm790 = vcmp.le.s32.totalorder %v750, 16
      %vm791 = vcmp.le.s32.totalorder %v751, 16
      %vm792 = vcmp.le.s32.totalorder %v752, 16
      %vm793 = vcmp.le.s32.totalorder %v753, 16
      %vm794 = vcmp.le.s32.totalorder %v754, 16
      %vm795 = vcmp.le.s32.totalorder %v755, 16
      %vm796 = vcmp.le.s32.totalorder %v756, 16
      %vm797 = vcmp.le.s32.totalorder %v757, 16
      %vm798 = vcmp.le.s32.totalorder %v758, 16
      %vm799 = vmand %vm763, %vm781
      %vm800 = vmand %vm764, %vm782
      %vm801 = vmand %vm765, %vm783
      %vm802 = vmand %vm766, %vm784
      %vm803 = vmand %vm767, %vm785
      %vm804 = vmand %vm768, %vm786
      %vm805 = vmand %vm769, %vm787
      %vm806 = vmand %vm770, %vm788
      %vm807 = vmand %vm771, %vm789
      %vm808 = vmand %vm772, %vm790
      %vm809 = vmand %vm773, %vm791
      %vm810 = vmand %vm774, %vm792
      %vm811 = vmand %vm775, %vm793
      %vm812 = vmand %vm776, %vm794
      %vm813 = vmand %vm777, %vm795
      %vm814 = vmand %vm778, %vm796
      %vm815 = vmand %vm779, %vm797
      %vm816 = vmand %vm780, %vm798
      %vm817 = vcmp.ge.s32.totalorder %v760, 1
      %vm818 = vcmp.ge.s32.totalorder %v761, 1
      %vm819 = vcmp.ge.s32.totalorder %v762, 1
      %vm820 = vmand %vm799, %vm817
      %vm821 = vmand %vm799, %vm818
      %vm822 = vmand %vm799, %vm819
      %vm823 = vmand %vm800, %vm817
      %vm824 = vmand %vm800, %vm818
      %vm825 = vmand %vm800, %vm819
      %vm826 = vmand %vm801, %vm817
      %vm827 = vmand %vm801, %vm818
      %vm828 = vmand %vm801, %vm819
      %vm829 = vmand %vm802, %vm817
      %vm830 = vmand %vm802, %vm818
      %vm831 = vmand %vm802, %vm819
      %vm832 = vmand %vm803, %vm817
      %vm833 = vmand %vm803, %vm818
      %vm834 = vmand %vm803, %vm819
      %vm835 = vmand %vm804, %vm817
      %vm836 = vmand %vm804, %vm818
      %vm837 = vmand %vm804, %vm819
      %vm838 = vmand %vm805, %vm817
      %vm839 = vmand %vm805, %vm818
      %vm840 = vmand %vm805, %vm819
      %vm841 = vmand %vm806, %vm817
      %vm842 = vmand %vm806, %vm818
      %vm843 = vmand %vm806, %vm819
      %vm844 = vmand %vm807, %vm817
      %vm845 = vmand %vm807, %vm818
      %vm846 = vmand %vm807, %vm819
      %vm847 = vmand %vm808, %vm817
      %vm848 = vmand %vm808, %vm818
      %vm849 = vmand %vm808, %vm819
      %vm850 = vmand %vm809, %vm817
      %vm851 = vmand %vm809, %vm818
      %vm852 = vmand %vm809, %vm819
      %vm853 = vmand %vm810, %vm817
      %vm854 = vmand %vm810, %vm818
      %vm855 = vmand %vm810, %vm819
      %vm856 = vmand %vm811, %vm817
      %vm857 = vmand %vm811, %vm818
      %vm858 = vmand %vm811, %vm819
      %vm859 = vmand %vm812, %vm817
      %vm860 = vmand %vm812, %vm818
      %vm861 = vmand %vm812, %vm819
      %vm862 = vmand %vm813, %vm817
      %vm863 = vmand %vm813, %vm818
      %vm864 = vmand %vm813, %vm819
      %vm865 = vmand %vm814, %vm817
      %vm866 = vmand %vm814, %vm818
      %vm867 = vmand %vm814, %vm819
      %vm868 = vmand %vm815, %vm817
      %vm869 = vmand %vm815, %vm818
      %vm870 = vmand %vm815, %vm819
      %vm871 = vmand %vm816, %vm817
      %vm872 = vmand %vm816, %vm818
      %vm873 = vmand %vm816, %vm819
      %vm874 = vcmp.le.s32.totalorder %v760, 16
      %vm875 = vcmp.le.s32.totalorder %v761, 16
      %vm876 = vcmp.le.s32.totalorder %v762, 16
      %vm877 = vmand %vm820, %vm874
      %vm878 = vmand %vm821, %vm875
      %vm879 = vmand %vm822, %vm876
      %vm880 = vmand %vm823, %vm874
      %vm881 = vmand %vm824, %vm875
      %vm882 = vmand %vm825, %vm876
      %vm883 = vmand %vm826, %vm874
      %vm884 = vmand %vm827, %vm875
      %vm885 = vmand %vm828, %vm876
      %vm886 = vmand %vm829, %vm874
      %vm887 = vmand %vm830, %vm875
      %vm888 = vmand %vm831, %vm876
      %vm889 = vmand %vm832, %vm874
      %vm890 = vmand %vm833, %vm875
      %vm891 = vmand %vm834, %vm876
      %vm892 = vmand %vm835, %vm874
      %vm893 = vmand %vm836, %vm875
      %vm894 = vmand %vm837, %vm876
      %vm895 = vmand %vm838, %vm874
      %vm896 = vmand %vm839, %vm875
      %vm897 = vmand %vm840, %vm876
      %vm898 = vmand %vm841, %vm874
      %vm899 = vmand %vm842, %vm875
      %vm900 = vmand %vm843, %vm876
      %vm901 = vmand %vm844, %vm874
      %vm902 = vmand %vm845, %vm875
      %vm903 = vmand %vm846, %vm876
      %vm904 = vmand %vm847, %vm874
      %vm905 = vmand %vm848, %vm875
      %vm906 = vmand %vm849, %vm876
      %vm907 = vmand %vm850, %vm874
      %vm908 = vmand %vm851, %vm875
      %vm909 = vmand %vm852, %vm876
      %vm910 = vmand %vm853, %vm874
      %vm911 = vmand %vm854, %vm875
      %vm912 = vmand %vm855, %vm876
      %vm913 = vmand %vm856, %vm874
      %vm914 = vmand %vm857, %vm875
      %vm915 = vmand %vm858, %vm876
      %vm916 = vmand %vm859, %vm874
      %vm917 = vmand %vm860, %vm875
      %vm918 = vmand %vm861, %vm876
      %vm919 = vmand %vm862, %vm874
      %vm920 = vmand %vm863, %vm875
      %vm921 = vmand %vm864, %vm876
      %vm922 = vmand %vm865, %vm874
      %vm923 = vmand %vm866, %vm875
      %vm924 = vmand %vm867, %vm876
      %vm925 = vmand %vm868, %vm874
      %vm926 = vmand %vm869, %vm875
      %vm927 = vmand %vm870, %vm876
      %vm928 = vmand %vm871, %vm874
      %vm929 = vmand %vm872, %vm875
      %vm930 = vmand %vm873, %vm876
      %v931 = vld [vmem:[%s3] sm:$0x1]
      %v933 = vperm.slane %v931, 0
      %v935 = vadd.f32 %v607, %v933
      %v936 = vadd.f32 %v609, %v933
      %v937 = vadd.f32 %v612, %v933
      %v938 = vadd.f32 %v614, %v933
      %v939 = vadd.f32 %v617, %v933
      %v940 = vadd.f32 %v619, %v933
      %v941 = vadd.f32 %v622, %v933
      %v942 = vadd.f32 %v624, %v933
      %v943 = vadd.f32 %v627, %v933
      %v944 = vadd.f32 %v629, %v933
      %v945 = vadd.f32 %v632, %v933
      %v946 = vadd.f32 %v634, %v933
      %v947 = vadd.f32 %v637, %v933
      %v948 = vadd.f32 %v639, %v933
      %v949 = vadd.f32 %v642, %v933
      %v950 = vadd.f32 %v644, %v933
      %v951 = vadd.f32 %v647, %v933
      %v952 = vadd.f32 %v649, %v933
      %v953 = vadd.f32 %v652, %v933
      %v954 = vadd.f32 %v654, %v933
      %v955 = vadd.f32 %v657, %v933
      %v956 = vadd.f32 %v659, %v933
      %v957 = vadd.f32 %v662, %v933
      %v958 = vadd.f32 %v664, %v933
      %v959 = vadd.f32 %v667, %v933
      %v960 = vadd.f32 %v669, %v933
      %v961 = vadd.f32 %v672, %v933
      %v962 = vadd.f32 %v674, %v933
      %v963 = vadd.f32 %v677, %v933
      %v964 = vadd.f32 %v679, %v933
      %v965 = vadd.f32 %v682, %v933
      %v966 = vadd.f32 %v684, %v933
      %v967 = vadd.f32 %v687, %v933
      %v968 = vadd.f32 %v689, %v933
      %v969 = vadd.f32 %v692, %v933
      %v970 = vadd.f32 %v694, %v933
      %v971 = vadd.f32 %v697, %v933
      %v972 = vadd.f32 %v699, %v933
      %v973 = vadd.f32 %v702, %v933
      %v974 = vadd.f32 %v704, %v933
      %v975 = vadd.f32 %v707, %v933
      %v976 = vadd.f32 %v709, %v933
      %v977 = vadd.f32 %v712, %v933
      %v978 = vadd.f32 %v714, %v933
      %v979 = vadd.f32 %v717, %v933
      %v980 = vadd.f32 %v719, %v933
      %v981 = vadd.f32 %v722, %v933
      %v982 = vadd.f32 %v724, %v933
      %v983 = vadd.f32 %v727, %v933
      %v984 = vadd.f32 %v729, %v933
      %v985 = vadd.f32 %v732, %v933
      %v986 = vadd.f32 %v734, %v933
      %v987 = vadd.f32 %v737, %v933
      %v988 = vadd.f32 %v739, %v933
      %vm989 = vcmp.gt.f32.partialorder %v935, 0.0
      %vm990 = vcmp.gt.f32.partialorder %v936, 0.0
      %vm991 = vcmp.gt.f32.partialorder %v937, 0.0
      %vm992 = vcmp.gt.f32.partialorder %v938, 0.0
      %vm993 = vcmp.gt.f32.partialorder %v939, 0.0
      %vm994 = vcmp.gt.f32.partialorder %v940, 0.0
      %vm995 = vcmp.gt.f32.partialorder %v941, 0.0
      %vm996 = vcmp.gt.f32.partialorder %v942, 0.0
      %vm997 = vcmp.gt.f32.partialorder %v943, 0.0
      %vm998 = vcmp.gt.f32.partialorder %v944, 0.0
      %vm999 = vcmp.gt.f32.partialorder %v945, 0.0
      %vm1000 = vcmp.gt.f32.partialorder %v946, 0.0
      %vm1001 = vcmp.gt.f32.partialorder %v947, 0.0
      %vm1002 = vcmp.gt.f32.partialorder %v948, 0.0
      %vm1003 = vcmp.gt.f32.partialorder %v949, 0.0
      %vm1004 = vcmp.gt.f32.partialorder %v950, 0.0
      %vm1005 = vcmp.gt.f32.partialorder %v951, 0.0
      %vm1006 = vcmp.gt.f32.partialorder %v952, 0.0
      %vm1007 = vcmp.gt.f32.partialorder %v953, 0.0
      %vm1008 = vcmp.gt.f32.partialorder %v954, 0.0
      %vm1009 = vcmp.gt.f32.partialorder %v955, 0.0
      %vm1010 = vcmp.gt.f32.partialorder %v956, 0.0
      %vm1011 = vcmp.gt.f32.partialorder %v957, 0.0
      %vm1012 = vcmp.gt.f32.partialorder %v958, 0.0
      %vm1013 = vcmp.gt.f32.partialorder %v959, 0.0
      %vm1014 = vcmp.gt.f32.partialorder %v960, 0.0
      %vm1015 = vcmp.gt.f32.partialorder %v961, 0.0
      %vm1016 = vcmp.gt.f32.partialorder %v962, 0.0
      %vm1017 = vcmp.gt.f32.partialorder %v963, 0.0
      %vm1018 = vcmp.gt.f32.partialorder %v964, 0.0
      %vm1019 = vcmp.gt.f32.partialorder %v965, 0.0
      %vm1020 = vcmp.gt.f32.partialorder %v966, 0.0
      %vm1021 = vcmp.gt.f32.partialorder %v967, 0.0
      %vm1022 = vcmp.gt.f32.partialorder %v968, 0.0
      %vm1023 = vcmp.gt.f32.partialorder %v969, 0.0
      %vm1024 = vcmp.gt.f32.partialorder %v970, 0.0
      %vm1025 = vcmp.gt.f32.partialorder %v971, 0.0
      %vm1026 = vcmp.gt.f32.partialorder %v972, 0.0
      %vm1027 = vcmp.gt.f32.partialorder %v973, 0.0
      %vm1028 = vcmp.gt.f32.partialorder %v974, 0.0
      %vm1029 = vcmp.gt.f32.partialorder %v975, 0.0
      %vm1030 = vcmp.gt.f32.partialorder %v976, 0.0
      %vm1031 = vcmp.gt.f32.partialorder %v977, 0.0
      %vm1032 = vcmp.gt.f32.partialorder %v978, 0.0
      %vm1033 = vcmp.gt.f32.partialorder %v979, 0.0
      %vm1034 = vcmp.gt.f32.partialorder %v980, 0.0
      %vm1035 = vcmp.gt.f32.partialorder %v981, 0.0
      %vm1036 = vcmp.gt.f32.partialorder %v982, 0.0
      %vm1037 = vcmp.gt.f32.partialorder %v983, 0.0
      %vm1038 = vcmp.gt.f32.partialorder %v984, 0.0
      %vm1039 = vcmp.gt.f32.partialorder %v985, 0.0
      %vm1040 = vcmp.gt.f32.partialorder %v986, 0.0
      %vm1041 = vcmp.gt.f32.partialorder %v987, 0.0
      %vm1042 = vcmp.gt.f32.partialorder %v988, 0.0
      %v1043 = vmul.f32 %v935, 0.1
      %v1044 = vmul.f32 %v936, 0.1
      %v1045 = vmul.f32 %v937, 0.1
      %v1046 = vmul.f32 %v938, 0.1
      %v1047 = vmul.f32 %v939, 0.1
      %v1048 = vmul.f32 %v940, 0.1
      %v1049 = vmul.f32 %v941, 0.1
      %v1050 = vmul.f32 %v942, 0.1
      %v1051 = vmul.f32 %v943, 0.1
      %v1052 = vmul.f32 %v944, 0.1
      %v1053 = vmul.f32 %v945, 0.1
      %v1054 = vmul.f32 %v946, 0.1
      %v1055 = vmul.f32 %v947, 0.1
      %v1056 = vmul.f32 %v948, 0.1
      %v1057 = vmul.f32 %v949, 0.1
      %v1058 = vmul.f32 %v950, 0.1
      %v1059 = vmul.f32 %v951, 0.1
      %v1060 = vmul.f32 %v952, 0.1
      %v1061 = vmul.f32 %v953, 0.1
      %v1062 = vmul.f32 %v954, 0.1
      %v1063 = vmul.f32 %v955, 0.1
      %v1064 = vmul.f32 %v956, 0.1
      %v1065 = vmul.f32 %v957, 0.1
      %v1066 = vmul.f32 %v958, 0.1
      %v1067 = vmul.f32 %v959, 0.1
      %v1068 = vmul.f32 %v960, 0.1
      %v1069 = vmul.f32 %v961, 0.1
      %v1070 = vmul.f32 %v962, 0.1
      %v1071 = vmul.f32 %v963, 0.1
      %v1072 = vmul.f32 %v964, 0.1
      %v1073 = vmul.f32 %v965, 0.1
      %v1074 = vmul.f32 %v966, 0.1
      %v1075 = vmul.f32 %v967, 0.1
      %v1076 = vmul.f32 %v968, 0.1
      %v1077 = vmul.f32 %v969, 0.1
      %v1078 = vmul.f32 %v970, 0.1
      %v1079 = vmul.f32 %v971, 0.1
      %v1080 = vmul.f32 %v972, 0.1
      %v1081 = vmul.f32 %v973, 0.1
      %v1082 = vmul.f32 %v974, 0.1
      %v1083 = vmul.f32 %v975, 0.1
      %v1084 = vmul.f32 %v976, 0.1
      %v1085 = vmul.f32 %v977, 0.1
      %v1086 = vmul.f32 %v978, 0.1
      %v1087 = vmul.f32 %v979, 0.1
      %v1088 = vmul.f32 %v980, 0.1
      %v1089 = vmul.f32 %v981, 0.1
      %v1090 = vmul.f32 %v982, 0.1
      %v1091 = vmul.f32 %v983, 0.1
      %v1092 = vmul.f32 %v984, 0.1
      %v1093 = vmul.f32 %v985, 0.1
      %v1094 = vmul.f32 %v986, 0.1
      %v1095 = vmul.f32 %v987, 0.1
      %v1096 = vmul.f32 %v988, 0.1
      %v1097 = vsel %vm989, %v935, %v1043
      %v1098 = vsel %vm990, %v936, %v1044
      %v1099 = vsel %vm991, %v937, %v1045
      %v1100 = vsel %vm992, %v938, %v1046
      %v1101 = vsel %vm993, %v939, %v1047
      %v1102 = vsel %vm994, %v940, %v1048
      %v1103 = vsel %vm995, %v941, %v1049
      %v1104 = vsel %vm996, %v942, %v1050
      %v1105 = vsel %vm997, %v943, %v1051
      %v1106 = vsel %vm998, %v944, %v1052
      %v1107 = vsel %vm999, %v945, %v1053
      %v1108 = vsel %vm1000, %v946, %v1054
      %v1109 = vsel %vm1001, %v947, %v1055
      %v1110 = vsel %vm1002, %v948, %v1056
      %v1111 = vsel %vm1003, %v949, %v1057
      %v1112 = vsel %vm1004, %v950, %v1058
      %v1113 = vsel %vm1005, %v951, %v1059
      %v1114 = vsel %vm1006, %v952, %v1060
      %v1115 = vsel %vm1007, %v953, %v1061
      %v1116 = vsel %vm1008, %v954, %v1062
      %v1117 = vsel %vm1009, %v955, %v1063
      %v1118 = vsel %vm1010, %v956, %v1064
      %v1119 = vsel %vm1011, %v957, %v1065
      %v1120 = vsel %vm1012, %v958, %v1066
      %v1121 = vsel %vm1013, %v959, %v1067
      %v1122 = vsel %vm1014, %v960, %v1068
      %v1123 = vsel %vm1015, %v961, %v1069
      %v1124 = vsel %vm1016, %v962, %v1070
      %v1125 = vsel %vm1017, %v963, %v1071
      %v1126 = vsel %vm1018, %v964, %v1072
      %v1127 = vsel %vm1019, %v965, %v1073
      %v1128 = vsel %vm1020, %v966, %v1074
      %v1129 = vsel %vm1021, %v967, %v1075
      %v1130 = vsel %vm1022, %v968, %v1076
      %v1131 = vsel %vm1023, %v969, %v1077
      %v1132 = vsel %vm1024, %v970, %v1078
      %v1133 = vsel %vm1025, %v971, %v1079
      %v1134 = vsel %vm1026, %v972, %v1080
      %v1135 = vsel %vm1027, %v973, %v1081
      %v1136 = vsel %vm1028, %v974, %v1082
      %v1137 = vsel %vm1029, %v975, %v1083
      %v1138 = vsel %vm1030, %v976, %v1084
      %v1139 = vsel %vm1031, %v977, %v1085
      %v1140 = vsel %vm1032, %v978, %v1086
      %v1141 = vsel %vm1033, %v979, %v1087
      %v1142 = vsel %vm1034, %v980, %v1088
      %v1143 = vsel %vm1035, %v981, %v1089
      %v1144 = vsel %vm1036, %v982, %v1090
      %v1145 = vsel %vm1037, %v983, %v1091
      %v1146 = vsel %vm1038, %v984, %v1092
      %v1147 = vsel %vm1039, %v985, %v1093
      %v1148 = vsel %vm1040, %v986, %v1094
      %v1149 = vsel %vm1041, %v987, %v1095
      %v1150 = vsel %vm1042, %v988, %v1096
      %v1151 = vsel %vm877, 1, 0
      %v1152 = vsel %vm878, 1, 0
      %v1153 = vsel %vm879, 1, 0
      %v1154 = vsel %vm880, 1, 0
      %v1155 = vsel %vm881, 1, 0
      %v1156 = vsel %vm882, 1, 0
      %v1157 = vsel %vm883, 1, 0
      %v1158 = vsel %vm884, 1, 0
      %v1159 = vsel %vm885, 1, 0
      %v1160 = vsel %vm886, 1, 0
      %v1161 = vsel %vm887, 1, 0
      %v1162 = vsel %vm888, 1, 0
      %v1163 = vsel %vm889, 1, 0
      %v1164 = vsel %vm890, 1, 0
      %v1165 = vsel %vm891, 1, 0
      %v1166 = vsel %vm892, 1, 0
      %v1167 = vsel %vm893, 1, 0
      %v1168 = vsel %vm894, 1, 0
      %v1169 = vsel %vm895, 1, 0
      %v1170 = vsel %vm896, 1, 0
      %v1171 = vsel %vm897, 1, 0
      %v1172 = vsel %vm898, 1, 0
      %v1173 = vsel %vm899, 1, 0
      %v1174 = vsel %vm900, 1, 0
      %v1175 = vsel %vm901, 1, 0
      %v1176 = vsel %vm902, 1, 0
      %v1177 = vsel %vm903, 1, 0
      %v1178 = vsel %vm904, 1, 0
      %v1179 = vsel %vm905, 1, 0
      %v1180 = vsel %vm906, 1, 0
      %v1181 = vsel %vm907, 1, 0
      %v1182 = vsel %vm908, 1, 0
      %v1183 = vsel %vm909, 1, 0
      %v1184 = vsel %vm910, 1, 0
      %v1185 = vsel %vm911, 1, 0
      %v1186 = vsel %vm912, 1, 0
      %v1187 = vsel %vm913, 1, 0
      %v1188 = vsel %vm914, 1, 0
      %v1189 = vsel %vm915, 1, 0
      %v1190 = vsel %vm916, 1, 0
      %v1191 = vsel %vm917, 1, 0
      %v1192 = vsel %vm918, 1, 0
      %v1193 = vsel %vm919, 1, 0
      %v1194 = vsel %vm920, 1, 0
      %v1195 = vsel %vm921, 1, 0
      %v1196 = vsel %vm922, 1, 0
      %v1197 = vsel %vm923, 1, 0
      %v1198 = vsel %vm924, 1, 0
      %v1199 = vsel %vm925, 1, 0
      %v1200 = vsel %vm926, 1, 0
      %v1201 = vsel %vm927, 1, 0
      %v1202 = vsel %vm928, 1, 0
      %v1203 = vsel %vm929, 1, 0
      %v1204 = vsel %vm930, 1, 0
      %vm1205 = vcmp.eq.s32.totalorder %v1151, 1
      %vm1206 = vcmp.eq.s32.totalorder %v1152, 1
      %vm1207 = vcmp.eq.s32.totalorder %v1153, 1
      %vm1208 = vcmp.eq.s32.totalorder %v1154, 1
      %vm1209 = vcmp.eq.s32.totalorder %v1155, 1
      %vm1210 = vcmp.eq.s32.totalorder %v1156, 1
      %vm1211 = vcmp.eq.s32.totalorder %v1157, 1
      %vm1212 = vcmp.eq.s32.totalorder %v1158, 1
      %vm1213 = vcmp.eq.s32.totalorder %v1159, 1
      %vm1214 = vcmp.eq.s32.totalorder %v1160, 1
      %vm1215 = vcmp.eq.s32.totalorder %v1161, 1
      %vm1216 = vcmp.eq.s32.totalorder %v1162, 1
      %vm1217 = vcmp.eq.s32.totalorder %v1163, 1
      %vm1218 = vcmp.eq.s32.totalorder %v1164, 1
      %vm1219 = vcmp.eq.s32.totalorder %v1165, 1
      %vm1220 = vcmp.eq.s32.totalorder %v1166, 1
      %vm1221 = vcmp.eq.s32.totalorder %v1167, 1
      %vm1222 = vcmp.eq.s32.totalorder %v1168, 1
      %vm1223 = vcmp.eq.s32.totalorder %v1169, 1
      %vm1224 = vcmp.eq.s32.totalorder %v1170, 1
      %vm1225 = vcmp.eq.s32.totalorder %v1171, 1
      %vm1226 = vcmp.eq.s32.totalorder %v1172, 1
      %vm1227 = vcmp.eq.s32.totalorder %v1173, 1
      %vm1228 = vcmp.eq.s32.totalorder %v1174, 1
      %vm1229 = vcmp.eq.s32.totalorder %v1175, 1
      %vm1230 = vcmp.eq.s32.totalorder %v1176, 1
      %vm1231 = vcmp.eq.s32.totalorder %v1177, 1
      %vm1232 = vcmp.eq.s32.totalorder %v1178, 1
      %vm1233 = vcmp.eq.s32.totalorder %v1179, 1
      %vm1234 = vcmp.eq.s32.totalorder %v1180, 1
      %vm1235 = vcmp.eq.s32.totalorder %v1181, 1
      %vm1236 = vcmp.eq.s32.totalorder %v1182, 1
      %vm1237 = vcmp.eq.s32.totalorder %v1183, 1
      %vm1238 = vcmp.eq.s32.totalorder %v1184, 1
      %vm1239 = vcmp.eq.s32.totalorder %v1185, 1
      %vm1240 = vcmp.eq.s32.totalorder %v1186, 1
      %vm1241 = vcmp.eq.s32.totalorder %v1187, 1
      %vm1242 = vcmp.eq.s32.totalorder %v1188, 1
      %vm1243 = vcmp.eq.s32.totalorder %v1189, 1
      %vm1244 = vcmp.eq.s32.totalorder %v1190, 1
      %vm1245 = vcmp.eq.s32.totalorder %v1191, 1
      %vm1246 = vcmp.eq.s32.totalorder %v1192, 1
      %vm1247 = vcmp.eq.s32.totalorder %v1193, 1
      %vm1248 = vcmp.eq.s32.totalorder %v1194, 1
      %vm1249 = vcmp.eq.s32.totalorder %v1195, 1
      %vm1250 = vcmp.eq.s32.totalorder %v1196, 1
      %vm1251 = vcmp.eq.s32.totalorder %v1197, 1
      %vm1252 = vcmp.eq.s32.totalorder %v1198, 1
      %vm1253 = vcmp.eq.s32.totalorder %v1199, 1
      %vm1254 = vcmp.eq.s32.totalorder %v1200, 1
      %vm1255 = vcmp.eq.s32.totalorder %v1201, 1
      %vm1256 = vcmp.eq.s32.totalorder %v1202, 1
      %vm1257 = vcmp.eq.s32.totalorder %v1203, 1
      %vm1258 = vcmp.eq.s32.totalorder %v1204, 1
      %v1259 = vsel %vm1205, %v1097, 0.0
      %v1260 = vsel %vm1206, %v1098, 0.0
      %v1261 = vsel %vm1207, %v1099, 0.0
      %v1262 = vsel %vm1208, %v1100, 0.0
      %v1263 = vsel %vm1209, %v1101, 0.0
      %v1264 = vsel %vm1210, %v1102, 0.0
      %v1265 = vsel %vm1211, %v1103, 0.0
      %v1266 = vsel %vm1212, %v1104, 0.0
      %v1267 = vsel %vm1213, %v1105, 0.0
      %v1268 = vsel %vm1214, %v1106, 0.0
      %v1269 = vsel %vm1215, %v1107, 0.0
      %v1270 = vsel %vm1216, %v1108, 0.0
      %v1271 = vsel %vm1217, %v1109, 0.0
      %v1272 = vsel %vm1218, %v1110, 0.0
      %v1273 = vsel %vm1219, %v1111, 0.0
      %v1274 = vsel %vm1220, %v1112, 0.0
      %v1275 = vsel %vm1221, %v1113, 0.0
      %v1276 = vsel %vm1222, %v1114, 0.0
      %v1277 = vsel %vm1223, %v1115, 0.0
      %v1278 = vsel %vm1224, %v1116, 0.0
      %v1279 = vsel %vm1225, %v1117, 0.0
      %v1280 = vsel %vm1226, %v1118, 0.0
      %v1281 = vsel %vm1227, %v1119, 0.0
      %v1282 = vsel %vm1228, %v1120, 0.0
      %v1283 = vsel %vm1229, %v1121, 0.0
      %v1284 = vsel %vm1230, %v1122, 0.0
      %v1285 = vsel %vm1231, %v1123, 0.0
      %v1286 = vsel %vm1232, %v1124, 0.0
      %v1287 = vsel %vm1233, %v1125, 0.0
      %v1288 = vsel %vm1234, %v1126, 0.0
      %v1289 = vsel %vm1235, %v1127, 0.0
      %v1290 = vsel %vm1236, %v1128, 0.0
      %v1291 = vsel %vm1237, %v1129, 0.0
      %v1292 = vsel %vm1238, %v1130, 0.0
      %v1293 = vsel %vm1239, %v1131, 0.0
      %v1294 = vsel %vm1240, %v1132, 0.0
      %v1295 = vsel %vm1241, %v1133, 0.0
      %v1296 = vsel %vm1242, %v1134, 0.0
      %v1297 = vsel %vm1243, %v1135, 0.0
      %v1298 = vsel %vm1244, %v1136, 0.0
      %v1299 = vsel %vm1245, %v1137, 0.0
      %v1300 = vsel %vm1246, %v1138, 0.0
      %v1301 = vsel %vm1247, %v1139, 0.0
      %v1302 = vsel %vm1248, %v1140, 0.0
      %v1303 = vsel %vm1249, %v1141, 0.0
      %v1304 = vsel %vm1250, %v1142, 0.0
      %v1305 = vsel %vm1251, %v1143, 0.0
      %v1306 = vsel %vm1252, %v1144, 0.0
      %v1307 = vsel %vm1253, %v1145, 0.0
      %v1308 = vsel %vm1254, %v1146, 0.0
      %v1309 = vsel %vm1255, %v1147, 0.0
      %v1310 = vsel %vm1256, %v1148, 0.0
      %v1311 = vsel %vm1257, %v1149, 0.0
      %v1312 = vsel %vm1258, %v1150, 0.0
      %v1313 = vpack.c.bf16 %v1259, %v1259
      %v1314 = vpack.c.bf16 %v1260, %v1260
      %v1315 = vpack.c.bf16 %v1261, %v1261
      %v1316 = vpack.c.bf16 %v1262, %v1262
      %v1317 = vpack.c.bf16 %v1263, %v1263
      %v1318 = vpack.c.bf16 %v1264, %v1264
      %v1319 = vpack.c.bf16 %v1265, %v1265
      %v1320 = vpack.c.bf16 %v1266, %v1266
      %v1321 = vpack.c.bf16 %v1267, %v1267
      %v1322 = vpack.c.bf16 %v1268, %v1268
      %v1323 = vpack.c.bf16 %v1269, %v1269
      %v1324 = vpack.c.bf16 %v1270, %v1270
      %v1325 = vpack.c.bf16 %v1271, %v1271
      %v1326 = vpack.c.bf16 %v1272, %v1272
      %v1327 = vpack.c.bf16 %v1273, %v1273
      %v1328 = vpack.c.bf16 %v1274, %v1274
      %v1329 = vpack.c.bf16 %v1275, %v1275
      %v1330 = vpack.c.bf16 %v1276, %v1276
      %v1331 = vpack.c.bf16 %v1277, %v1277
      %v1332 = vpack.c.bf16 %v1278, %v1278
      %v1333 = vpack.c.bf16 %v1279, %v1279
      %v1334 = vpack.c.bf16 %v1280, %v1280
      %v1335 = vpack.c.bf16 %v1281, %v1281
      %v1336 = vpack.c.bf16 %v1282, %v1282
      %v1337 = vpack.c.bf16 %v1283, %v1283
      %v1338 = vpack.c.bf16 %v1284, %v1284
      %v1339 = vpack.c.bf16 %v1285, %v1285
      %v1340 = vpack.c.bf16 %v1286, %v1286
      %v1341 = vpack.c.bf16 %v1287, %v1287
      %v1342 = vpack.c.bf16 %v1288, %v1288
      %v1343 = vpack.c.bf16 %v1289, %v1289
      %v1344 = vpack.c.bf16 %v1290, %v1290
      %v1345 = vpack.c.bf16 %v1291, %v1291
      %v1346 = vpack.c.bf16 %v1292, %v1292
      %v1347 = vpack.c.bf16 %v1293, %v1293
      %v1348 = vpack.c.bf16 %v1294, %v1294
      %v1349 = vpack.c.bf16 %v1295, %v1295
      %v1350 = vpack.c.bf16 %v1296, %v1296
      %v1351 = vpack.c.bf16 %v1297, %v1297
      %v1352 = vpack.c.bf16 %v1298, %v1298
      %v1353 = vpack.c.bf16 %v1299, %v1299
      %v1354 = vpack.c.bf16 %v1300, %v1300
      %v1355 = vpack.c.bf16 %v1301, %v1301
      %v1356 = vpack.c.bf16 %v1302, %v1302
      %v1357 = vpack.c.bf16 %v1303, %v1303
      %v1358 = vpack.c.bf16 %v1304, %v1304
      %v1359 = vpack.c.bf16 %v1305, %v1305
      %v1360 = vpack.c.bf16 %v1306, %v1306
      %v1361 = vpack.c.bf16 %v1307, %v1307
      %v1362 = vpack.c.bf16 %v1308, %v1308
      %v1363 = vpack.c.bf16 %v1309, %v1309
      %v1364 = vpack.c.bf16 %v1310, %v1310
      %v1365 = vpack.c.bf16 %v1311, %v1311
      %v1366 = vpack.c.bf16 %v1312, %v1312
      %v1367 = vld [vmem:[%s4] sm:$0x1]
      %s1368 = scalar_lea.vmem %s4, 3
      %v1369 = vld [vmem:[%s1368] sm:$0x1]
      %v1402 = vunpack.c.l.b16 %v1316
      %v1403 = vunpack.c.l.b16 %v1317
      %v1404 = vunpack.c.l.b16 %v1319
      %v1405 = vunpack.c.l.b16 %v1320
      %v1406 = vunpack.c.l.b16 %v1322
      %v1407 = vunpack.c.l.b16 %v1323
      %v1408 = vunpack.c.l.b16 %v1325
      %v1409 = vunpack.c.l.b16 %v1326
      %v1410 = vunpack.c.l.b16 %v1328
      %v1411 = vunpack.c.l.b16 %v1329
      %v1412 = vunpack.c.l.b16 %v1331
      %v1413 = vunpack.c.l.b16 %v1332
      %v1414 = vunpack.c.l.b16 %v1334
      %v1415 = vunpack.c.l.b16 %v1335
      %v1416 = vunpack.c.l.b16 %v1337
      %v1417 = vunpack.c.l.b16 %v1338
      %v1418 = vunpack.c.l.b16 %v1340
      %v1419 = vunpack.c.l.b16 %v1341
      %v1420 = vunpack.c.l.b16 %v1343
      %v1421 = vunpack.c.l.b16 %v1344
      %v1422 = vunpack.c.l.b16 %v1346
      %v1423 = vunpack.c.l.b16 %v1347
      %v1424 = vunpack.c.l.b16 %v1349
      %v1425 = vunpack.c.l.b16 %v1350
      %v1426 = vunpack.c.l.b16 %v1352
      %v1427 = vunpack.c.l.b16 %v1353
      %v1428 = vunpack.c.l.b16 %v1355
      %v1429 = vunpack.c.l.b16 %v1356
      %v1430 = vunpack.c.l.b16 %v1358
      %v1431 = vunpack.c.l.b16 %v1359
      %v1432 = vunpack.c.l.b16 %v1361
      %v1433 = vunpack.c.l.b16 %v1362
      %v1434 = vpack.c.b16 %v1403, %v1402
      %v1435 = vpack.c.b16 %v1405, %v1404
      %v1436 = vpack.c.b16 %v1407, %v1406
      %v1437 = vpack.c.b16 %v1409, %v1408
      %v1438 = vpack.c.b16 %v1411, %v1410
      %v1439 = vpack.c.b16 %v1413, %v1412
      %v1440 = vpack.c.b16 %v1415, %v1414
      %v1441 = vpack.c.b16 %v1417, %v1416
      %v1442 = vpack.c.b16 %v1419, %v1418
      %v1443 = vpack.c.b16 %v1421, %v1420
      %v1444 = vpack.c.b16 %v1423, %v1422
      %v1445 = vpack.c.b16 %v1425, %v1424
      %v1446 = vpack.c.b16 %v1427, %v1426
      %v1447 = vpack.c.b16 %v1429, %v1428
      %v1448 = vpack.c.b16 %v1431, %v1430
      %v1449 = vpack.c.b16 %v1433, %v1432
      %vm1450 = vcmask 15360
      %v1452 = vsel %vm1450, %v1434, 0
      %v1455 = vsel %vm1450, %v1435, 0
      %v1458 = vsel %vm1450, %v1436, 0
      %v1461 = vsel %vm1450, %v1437, 0
      %v1464 = vsel %vm1450, %v1438, 0
      %v1467 = vsel %vm1450, %v1439, 0
      %v1470 = vsel %vm1450, %v1440, 0
      %v1473 = vsel %vm1450, %v1441, 0
      %v1476 = vsel %vm1450, %v1442, 0
      %v1479 = vsel %vm1450, %v1443, 0
      %v1482 = vsel %vm1450, %v1444, 0
      %v1485 = vsel %vm1450, %v1445, 0
      %v1488 = vsel %vm1450, %v1446, 0
      %v1491 = vsel %vm1450, %v1447, 0
      %v1494 = vsel %vm1450, %v1448, 0
      %v1497 = vsel %vm1450, %v1449, 0
      %vm1499 = vcmask 1040384
      %v1501 = vsel %vm1499, %v1369, 0
      %1503 = vmatpush.bf16.msra.mxu0 0
      %1504 = vmatpush.bf16.msra.mxu0 0
      %1505 = vmatpush.bf16.msra.mxu0 0
      %1506 = vmatpush.bf16.msra.mxu0 0
      %1507 = vmatpush.bf16.msra.mxu0 0
      %1508 = vmatpush.bf16.msra.mxu0 0
      %1509 = vmatpush.bf16.msra.mxu0 0
      %1510 = vmatpush.bf16.msra.mxu0 %v1501
      %1511 = vmatmul.bf16.gmra.mxu0 %v1452
      %v1512 = vpop.f32.mrf.mxu0
      %v1513 = vadd.f32 0.0, %v1512
      %v1514 = vpop.f32.mrf.mxu0
      %v1515 = vadd.f32 0.0, %v1514
      %1516 = vmatmul.bf16.gmra.mxu0 %v1455
      %v1517 = vpop.f32.mrf.mxu0
      %v1518 = vadd.f32 0.0, %v1517
      %v1519 = vpop.f32.mrf.mxu0
      %v1520 = vadd.f32 0.0, %v1519
      %1521 = vmatmul.bf16.gmra.mxu0 %v1458
      %v1522 = vpop.f32.mrf.mxu0
      %v1523 = vadd.f32 0.0, %v1522
      %v1524 = vpop.f32.mrf.mxu0
      %v1525 = vadd.f32 0.0, %v1524
      %1526 = vmatmul.bf16.gmra.mxu0 %v1461
      %v1527 = vpop.f32.mrf.mxu0
      %v1528 = vadd.f32 0.0, %v1527
      %v1529 = vpop.f32.mrf.mxu0
      %v1530 = vadd.f32 0.0, %v1529
      %1531 = vmatmul.bf16.gmra.mxu0 %v1464
      %v1532 = vpop.f32.mrf.mxu0
      %v1533 = vadd.f32 0.0, %v1532
      %v1534 = vpop.f32.mrf.mxu0
      %v1535 = vadd.f32 0.0, %v1534
      %1536 = vmatmul.bf16.gmra.mxu0 %v1467
      %v1537 = vpop.f32.mrf.mxu0
      %v1538 = vadd.f32 0.0, %v1537
      %v1539 = vpop.f32.mrf.mxu0
      %v1540 = vadd.f32 0.0, %v1539
      %1541 = vmatmul.bf16.gmra.mxu0 %v1470
      %v1542 = vpop.f32.mrf.mxu0
      %v1543 = vadd.f32 0.0, %v1542
      %v1544 = vpop.f32.mrf.mxu0
      %v1545 = vadd.f32 0.0, %v1544
      %1546 = vmatmul.bf16.gmra.mxu0 %v1473
      %v1547 = vpop.f32.mrf.mxu0
      %v1548 = vadd.f32 0.0, %v1547
      %v1549 = vpop.f32.mrf.mxu0
      %v1550 = vadd.f32 0.0, %v1549
      %1551 = vmatmul.bf16.gmra.mxu0 %v1476
      %v1552 = vpop.f32.mrf.mxu0
      %v1553 = vadd.f32 0.0, %v1552
      %v1554 = vpop.f32.mrf.mxu0
      %v1555 = vadd.f32 0.0, %v1554
      %1556 = vmatmul.bf16.gmra.mxu0 %v1479
      %v1557 = vpop.f32.mrf.mxu0
      %v1558 = vadd.f32 0.0, %v1557
      %v1559 = vpop.f32.mrf.mxu0
      %v1560 = vadd.f32 0.0, %v1559
      %1561 = vmatmul.bf16.gmra.mxu0 %v1482
      %v1562 = vpop.f32.mrf.mxu0
      %v1563 = vadd.f32 0.0, %v1562
      %v1564 = vpop.f32.mrf.mxu0
      %v1565 = vadd.f32 0.0, %v1564
      %1566 = vmatmul.bf16.gmra.mxu0 %v1485
      %v1567 = vpop.f32.mrf.mxu0
      %v1568 = vadd.f32 0.0, %v1567
      %v1569 = vpop.f32.mrf.mxu0
      %v1570 = vadd.f32 0.0, %v1569
      %1571 = vmatmul.bf16.gmra.mxu0 %v1488
      %v1572 = vpop.f32.mrf.mxu0
      %v1573 = vadd.f32 0.0, %v1572
      %v1574 = vpop.f32.mrf.mxu0
      %v1575 = vadd.f32 0.0, %v1574
      %1576 = vmatmul.bf16.gmra.mxu0 %v1491
      %v1577 = vpop.f32.mrf.mxu0
      %v1578 = vadd.f32 0.0, %v1577
      %v1579 = vpop.f32.mrf.mxu0
      %v1580 = vadd.f32 0.0, %v1579
      %1581 = vmatmul.bf16.gmra.mxu0 %v1494
      %v1582 = vpop.f32.mrf.mxu0
      %v1583 = vadd.f32 0.0, %v1582
      %v1584 = vpop.f32.mrf.mxu0
      %v1585 = vadd.f32 0.0, %v1584
      %1586 = vmatmul.bf16.gmra.mxu0 %v1497
      %v1587 = vpop.f32.mrf.mxu0
      %v1588 = vadd.f32 0.0, %v1587
      %v1589 = vpop.f32.mrf.mxu0
      %v1590 = vadd.f32 0.0, %v1589
      %1591 = vdwg.mxu0
      %v1594 = vunpack.c.l.b16 %v1313
      %v1595 = vunpack.c.l.b16 %v1314
      %v1596 = vpack.c.b16 %v1595, %v1594
      %v1598 = vsel %vm1450, %v1596, 0
      %v1601 = vsel %vm1499, %v1367, 0
      %1603 = vmatpush.bf16.msra.mxu0 0
      %1604 = vmatpush.bf16.msra.mxu0 0
      %1605 = vmatpush.bf16.msra.mxu0 0
      %1606 = vmatpush.bf16.msra.mxu0 0
      %1607 = vmatpush.bf16.msra.mxu0 0
      %1608 = vmatpush.bf16.msra.mxu0 0
      %1609 = vmatpush.bf16.msra.mxu0 0
      %1610 = vmatpush.bf16.msra.mxu0 %v1601
      %1611 = vmatmul.bf16.gmra.mxu0 %v1598
      %v1612 = vpop.f32.mrf.mxu0
      %v1613 = vadd.f32 %v1513, %v1612
      %v1614 = vpop.f32.mrf.mxu0
      %v1615 = vadd.f32 %v1515, %v1614
      %1616 = vmatmul.bf16.gmra.mxu0 %v1452
      %v1617 = vpop.f32.mrf.mxu0
      %v1618 = vadd.f32 %v1518, %v1617
      %v1619 = vpop.f32.mrf.mxu0
      %v1620 = vadd.f32 %v1520, %v1619
      %1621 = vmatmul.bf16.gmra.mxu0 %v1455
      %v1622 = vpop.f32.mrf.mxu0
      %v1623 = vadd.f32 %v1523, %v1622
      %v1624 = vpop.f32.mrf.mxu0
      %v1625 = vadd.f32 %v1525, %v1624
      %1626 = vmatmul.bf16.gmra.mxu0 %v1458
      %v1627 = vpop.f32.mrf.mxu0
      %v1628 = vadd.f32 %v1528, %v1627
      %v1629 = vpop.f32.mrf.mxu0
      %v1630 = vadd.f32 %v1530, %v1629
      %1631 = vmatmul.bf16.gmra.mxu0 %v1461
      %v1632 = vpop.f32.mrf.mxu0
      %v1633 = vadd.f32 %v1533, %v1632
      %v1634 = vpop.f32.mrf.mxu0
      %v1635 = vadd.f32 %v1535, %v1634
      %1636 = vmatmul.bf16.gmra.mxu0 %v1464
      %v1637 = vpop.f32.mrf.mxu0
      %v1638 = vadd.f32 %v1538, %v1637
      %v1639 = vpop.f32.mrf.mxu0
      %v1640 = vadd.f32 %v1540, %v1639
      %1641 = vmatmul.bf16.gmra.mxu0 %v1467
      %v1642 = vpop.f32.mrf.mxu0
      %v1643 = vadd.f32 %v1543, %v1642
      %v1644 = vpop.f32.mrf.mxu0
      %v1645 = vadd.f32 %v1545, %v1644
      %1646 = vmatmul.bf16.gmra.mxu0 %v1470
      %v1647 = vpop.f32.mrf.mxu0
      %v1648 = vadd.f32 %v1548, %v1647
      %v1649 = vpop.f32.mrf.mxu0
      %v1650 = vadd.f32 %v1550, %v1649
      %1651 = vmatmul.bf16.gmra.mxu0 %v1473
      %v1652 = vpop.f32.mrf.mxu0
      %v1653 = vadd.f32 %v1553, %v1652
      %v1654 = vpop.f32.mrf.mxu0
      %v1655 = vadd.f32 %v1555, %v1654
      %1656 = vmatmul.bf16.gmra.mxu0 %v1476
      %v1657 = vpop.f32.mrf.mxu0
      %v1658 = vadd.f32 %v1558, %v1657
      %v1659 = vpop.f32.mrf.mxu0
      %v1660 = vadd.f32 %v1560, %v1659
      %1661 = vmatmul.bf16.gmra.mxu0 %v1479
      %v1662 = vpop.f32.mrf.mxu0
      %v1663 = vadd.f32 %v1563, %v1662
      %v1664 = vpop.f32.mrf.mxu0
      %v1665 = vadd.f32 %v1565, %v1664
      %1666 = vmatmul.bf16.gmra.mxu0 %v1482
      %v1667 = vpop.f32.mrf.mxu0
      %v1668 = vadd.f32 %v1568, %v1667
      %v1669 = vpop.f32.mrf.mxu0
      %v1670 = vadd.f32 %v1570, %v1669
      %1671 = vmatmul.bf16.gmra.mxu0 %v1485
      %v1672 = vpop.f32.mrf.mxu0
      %v1673 = vadd.f32 %v1573, %v1672
      %v1674 = vpop.f32.mrf.mxu0
      %v1675 = vadd.f32 %v1575, %v1674
      %1676 = vmatmul.bf16.gmra.mxu0 %v1488
      %v1677 = vpop.f32.mrf.mxu0
      %v1678 = vadd.f32 %v1578, %v1677
      %v1679 = vpop.f32.mrf.mxu0
      %v1680 = vadd.f32 %v1580, %v1679
      %1681 = vmatmul.bf16.gmra.mxu0 %v1491
      %v1682 = vpop.f32.mrf.mxu0
      %v1683 = vadd.f32 %v1583, %v1682
      %v1684 = vpop.f32.mrf.mxu0
      %v1685 = vadd.f32 %v1585, %v1684
      %1686 = vmatmul.bf16.gmra.mxu0 %v1494
      %v1687 = vpop.f32.mrf.mxu0
      %v1688 = vadd.f32 %v1588, %v1687
      %v1689 = vpop.f32.mrf.mxu0
      %v1690 = vadd.f32 %v1590, %v1689
      %1691 = vdwg.mxu0
      %s1692 = scalar_lea.vmem %s4, 6
      %v1693 = vld [vmem:[%s1692] sm:$0x1]
      %v1696 = vunpack.c.l.b16 %v1364
      %v1697 = vunpack.c.l.b16 %v1365
      %v1698 = vpack.c.b16 %v1697, %v1696
      %v1700 = vsel %vm1450, %v1698, 0
      %v1703 = vsel %vm1499, %v1693, 0
      %1705 = vmatpush.bf16.msra.mxu0 0
      %1706 = vmatpush.bf16.msra.mxu0 0
      %1707 = vmatpush.bf16.msra.mxu0 0
      %1708 = vmatpush.bf16.msra.mxu0 0
      %1709 = vmatpush.bf16.msra.mxu0 0
      %1710 = vmatpush.bf16.msra.mxu0 0
      %1711 = vmatpush.bf16.msra.mxu0 0
      %1712 = vmatpush.bf16.msra.mxu0 %v1703
      %1713 = vmatmul.bf16.gmra.mxu0 %v1455
      %v1714 = vpop.f32.mrf.mxu0
      %v1715 = vadd.f32 0.0, %v1714
      %v1716 = vpop.f32.mrf.mxu0
      %v1717 = vadd.f32 0.0, %v1716
      %1718 = vmatmul.bf16.gmra.mxu0 %v1458
      %v1719 = vpop.f32.mrf.mxu0
      %v1720 = vadd.f32 0.0, %v1719
      %v1721 = vpop.f32.mrf.mxu0
      %v1722 = vadd.f32 0.0, %v1721
      %1723 = vmatmul.bf16.gmra.mxu0 %v1461
      %v1724 = vpop.f32.mrf.mxu0
      %v1725 = vadd.f32 0.0, %v1724
      %v1726 = vpop.f32.mrf.mxu0
      %v1727 = vadd.f32 0.0, %v1726
      %1728 = vmatmul.bf16.gmra.mxu0 %v1464
      %v1729 = vpop.f32.mrf.mxu0
      %v1730 = vadd.f32 0.0, %v1729
      %v1731 = vpop.f32.mrf.mxu0
      %v1732 = vadd.f32 0.0, %v1731
      %1733 = vmatmul.bf16.gmra.mxu0 %v1467
      %v1734 = vpop.f32.mrf.mxu0
      %v1735 = vadd.f32 0.0, %v1734
      %v1736 = vpop.f32.mrf.mxu0
      %v1737 = vadd.f32 0.0, %v1736
      %1738 = vmatmul.bf16.gmra.mxu0 %v1470
      %v1739 = vpop.f32.mrf.mxu0
      %v1740 = vadd.f32 0.0, %v1739
      %v1741 = vpop.f32.mrf.mxu0
      %v1742 = vadd.f32 0.0, %v1741
      %1743 = vmatmul.bf16.gmra.mxu0 %v1473
      %v1744 = vpop.f32.mrf.mxu0
      %v1745 = vadd.f32 0.0, %v1744
      %v1746 = vpop.f32.mrf.mxu0
      %v1747 = vadd.f32 0.0, %v1746
      %1748 = vmatmul.bf16.gmra.mxu0 %v1476
      %v1749 = vpop.f32.mrf.mxu0
      %v1750 = vadd.f32 0.0, %v1749
      %v1751 = vpop.f32.mrf.mxu0
      %v1752 = vadd.f32 0.0, %v1751
      %1753 = vmatmul.bf16.gmra.mxu0 %v1479
      %v1754 = vpop.f32.mrf.mxu0
      %v1755 = vadd.f32 0.0, %v1754
      %v1756 = vpop.f32.mrf.mxu0
      %v1757 = vadd.f32 0.0, %v1756
      %1758 = vmatmul.bf16.gmra.mxu0 %v1482
      %v1759 = vpop.f32.mrf.mxu0
      %v1760 = vadd.f32 0.0, %v1759
      %v1761 = vpop.f32.mrf.mxu0
      %v1762 = vadd.f32 0.0, %v1761
      %1763 = vmatmul.bf16.gmra.mxu0 %v1485
      %v1764 = vpop.f32.mrf.mxu0
      %v1765 = vadd.f32 0.0, %v1764
      %v1766 = vpop.f32.mrf.mxu0
      %v1767 = vadd.f32 0.0, %v1766
      %1768 = vmatmul.bf16.gmra.mxu0 %v1488
      %v1769 = vpop.f32.mrf.mxu0
      %v1770 = vadd.f32 0.0, %v1769
      %v1771 = vpop.f32.mrf.mxu0
      %v1772 = vadd.f32 0.0, %v1771
      %1773 = vmatmul.bf16.gmra.mxu0 %v1491
      %v1774 = vpop.f32.mrf.mxu0
      %v1775 = vadd.f32 0.0, %v1774
      %v1776 = vpop.f32.mrf.mxu0
      %v1777 = vadd.f32 0.0, %v1776
      %1778 = vmatmul.bf16.gmra.mxu0 %v1494
      %v1779 = vpop.f32.mrf.mxu0
      %v1780 = vadd.f32 0.0, %v1779
      %v1781 = vpop.f32.mrf.mxu0
      %v1782 = vadd.f32 0.0, %v1781
      %1783 = vmatmul.bf16.gmra.mxu0 %v1497
      %v1784 = vpop.f32.mrf.mxu0
      %v1785 = vadd.f32 0.0, %v1784
      %v1786 = vpop.f32.mrf.mxu0
      %v1787 = vadd.f32 0.0, %v1786
      %1788 = vmatmul.bf16.gmra.mxu0 %v1700
      %v1789 = vpop.f32.mrf.mxu0
      %v1790 = vadd.f32 0.0, %v1789
      %v1791 = vpop.f32.mrf.mxu0
      %v1792 = vadd.f32 0.0, %v1791
      %1793 = vdwg.mxu0
      %v1794 = vadd.f32 %v1613, %v1715
      %v1795 = vadd.f32 %v1615, %v1717
      %v1796 = vadd.f32 %v1618, %v1720
      %v1797 = vadd.f32 %v1620, %v1722
      %v1798 = vadd.f32 %v1623, %v1725
      %v1799 = vadd.f32 %v1625, %v1727
      %v1800 = vadd.f32 %v1628, %v1730
      %v1801 = vadd.f32 %v1630, %v1732
      %v1802 = vadd.f32 %v1633, %v1735
      %v1803 = vadd.f32 %v1635, %v1737
      %v1804 = vadd.f32 %v1638, %v1740
      %v1805 = vadd.f32 %v1640, %v1742
      %v1806 = vadd.f32 %v1643, %v1745
      %v1807 = vadd.f32 %v1645, %v1747
      %v1808 = vadd.f32 %v1648, %v1750
      %v1809 = vadd.f32 %v1650, %v1752
      %v1810 = vadd.f32 %v1653, %v1755
      %v1811 = vadd.f32 %v1655, %v1757
      %v1812 = vadd.f32 %v1658, %v1760
      %v1813 = vadd.f32 %v1660, %v1762
      %v1814 = vadd.f32 %v1663, %v1765
      %v1815 = vadd.f32 %v1665, %v1767
      %v1816 = vadd.f32 %v1668, %v1770
      %v1817 = vadd.f32 %v1670, %v1772
      %v1818 = vadd.f32 %v1673, %v1775
      %v1819 = vadd.f32 %v1675, %v1777
      %v1820 = vadd.f32 %v1678, %v1780
      %v1821 = vadd.f32 %v1680, %v1782
      %v1822 = vadd.f32 %v1683, %v1785
      %v1823 = vadd.f32 %v1685, %v1787
      %v1824 = vadd.f32 %v1688, %v1790
      %v1825 = vadd.f32 %v1690, %v1792
      %vm1826 = vsmask.f32 3328
      %vm1827 = vsmask.f32 7440
      %vm1828 = vmor %vm1826, %vm1827
      %v1830 = vshrl.u32 %v1313, 16
      %v1832 = vrot.slane %v1830, 4
      %v1833 = vshll.u32 %v1313, 16
      %v1835 = vrot.slane %v1833, 5
      %v1836 = vor.u32 %v1832, %v1835
      %v1837 = vrot.slane %v1836, 4
      %v1839 = vshll.u32 %v1314, 16
      %v1841 = vrot.slane %v1839, 5
      %v1842 = vsel %vm1828, %v1837, %v1841
      %v1843 = vshrl.u32 %v1314, 16
      %v1845 = vrot.slane %v1843, 4
      %v1846 = vor.u32 %v1845, %v1841
      %v1847 = vrot.slane %v1846, 4
      %v1849 = vshll.u32 %v1315, 16
      %v1851 = vrot.slane %v1849, 5
      %v1852 = vsel %vm1828, %v1847, %v1851
      %v1854 = vshrl.u32 %v1316, 16
      %v1856 = vrot.slane %v1854, 4
      %v1857 = vshll.u32 %v1316, 16
      %v1859 = vrot.slane %v1857, 5
      %v1860 = vor.u32 %v1856, %v1859
      %v1861 = vrot.slane %v1860, 4
      %v1863 = vshll.u32 %v1317, 16
      %v1865 = vrot.slane %v1863, 5
      %v1866 = vsel %vm1828, %v1861, %v1865
      %v1867 = vshrl.u32 %v1317, 16
      %v1869 = vrot.slane %v1867, 4
      %v1870 = vor.u32 %v1869, %v1865
      %v1871 = vrot.slane %v1870, 4
      %v1873 = vshll.u32 %v1318, 16
      %v1875 = vrot.slane %v1873, 5
      %v1876 = vsel %vm1828, %v1871, %v1875
      %v1878 = vshrl.u32 %v1319, 16
      %v1880 = vrot.slane %v1878, 4
      %v1881 = vshll.u32 %v1319, 16
      %v1883 = vrot.slane %v1881, 5
      %v1884 = vor.u32 %v1880, %v1883
      %v1885 = vrot.slane %v1884, 4
      %v1887 = vshll.u32 %v1320, 16
      %v1889 = vrot.slane %v1887, 5
      %v1890 = vsel %vm1828, %v1885, %v1889
      %v1891 = vshrl.u32 %v1320, 16
      %v1893 = vrot.slane %v1891, 4
      %v1894 = vor.u32 %v1893, %v1889
      %v1895 = vrot.slane %v1894, 4
      %v1897 = vshll.u32 %v1321, 16
      %v1899 = vrot.slane %v1897, 5
      %v1900 = vsel %vm1828, %v1895, %v1899
      %v1902 = vshrl.u32 %v1322, 16
      %v1904 = vrot.slane %v1902, 4
      %v1905 = vshll.u32 %v1322, 16
      %v1907 = vrot.slane %v1905, 5
      %v1908 = vor.u32 %v1904, %v1907
      %v1909 = vrot.slane %v1908, 4
      %v1911 = vshll.u32 %v1323, 16
      %v1913 = vrot.slane %v1911, 5
      %v1914 = vsel %vm1828, %v1909, %v1913
      %v1915 = vshrl.u32 %v1323, 16
      %v1917 = vrot.slane %v1915, 4
      %v1918 = vor.u32 %v1917, %v1913
      %v1919 = vrot.slane %v1918, 4
      %v1921 = vshll.u32 %v1324, 16
      %v1923 = vrot.slane %v1921, 5
      %v1924 = vsel %vm1828, %v1919, %v1923
      %v1926 = vshrl.u32 %v1325, 16
      %v1928 = vrot.slane %v1926, 4
      %v1929 = vshll.u32 %v1325, 16
      %v1931 = vrot.slane %v1929, 5
      %v1932 = vor.u32 %v1928, %v1931
      %v1933 = vrot.slane %v1932, 4
      %v1935 = vshll.u32 %v1326, 16
      %v1937 = vrot.slane %v1935, 5
      %v1938 = vsel %vm1828, %v1933, %v1937
      %v1939 = vshrl.u32 %v1326, 16
      %v1941 = vrot.slane %v1939, 4
      %v1942 = vor.u32 %v1941, %v1937
      %v1943 = vrot.slane %v1942, 4
      %v1945 = vshll.u32 %v1327, 16
      %v1947 = vrot.slane %v1945, 5
      %v1948 = vsel %vm1828, %v1943, %v1947
      %v1950 = vshrl.u32 %v1328, 16
      %v1952 = vrot.slane %v1950, 4
      %v1953 = vshll.u32 %v1328, 16
      %v1955 = vrot.slane %v1953, 5
      %v1956 = vor.u32 %v1952, %v1955
      %v1957 = vrot.slane %v1956, 4
      %v1959 = vshll.u32 %v1329, 16
      %v1961 = vrot.slane %v1959, 5
      %v1962 = vsel %vm1828, %v1957, %v1961
      %v1963 = vshrl.u32 %v1329, 16
      %v1965 = vrot.slane %v1963, 4
      %v1966 = vor.u32 %v1965, %v1961
      %v1967 = vrot.slane %v1966, 4
      %v1969 = vshll.u32 %v1330, 16
      %v1971 = vrot.slane %v1969, 5
      %v1972 = vsel %vm1828, %v1967, %v1971
      %v1974 = vshrl.u32 %v1331, 16
      %v1976 = vrot.slane %v1974, 4
      %v1977 = vshll.u32 %v1331, 16
      %v1979 = vrot.slane %v1977, 5
      %v1980 = vor.u32 %v1976, %v1979
      %v1981 = vrot.slane %v1980, 4
      %v1983 = vshll.u32 %v1332, 16
      %v1985 = vrot.slane %v1983, 5
      %v1986 = vsel %vm1828, %v1981, %v1985
      %v1987 = vshrl.u32 %v1332, 16
      %v1989 = vrot.slane %v1987, 4
      %v1990 = vor.u32 %v1989, %v1985
      %v1991 = vrot.slane %v1990, 4
      %v1993 = vshll.u32 %v1333, 16
      %v1995 = vrot.slane %v1993, 5
      %v1996 = vsel %vm1828, %v1991, %v1995
      %v1998 = vshrl.u32 %v1334, 16
      %v2000 = vrot.slane %v1998, 4
      %v2001 = vshll.u32 %v1334, 16
      %v2003 = vrot.slane %v2001, 5
      %v2004 = vor.u32 %v2000, %v2003
      %v2005 = vrot.slane %v2004, 4
      %v2007 = vshll.u32 %v1335, 16
      %v2009 = vrot.slane %v2007, 5
      %v2010 = vsel %vm1828, %v2005, %v2009
      %v2011 = vshrl.u32 %v1335, 16
      %v2013 = vrot.slane %v2011, 4
      %v2014 = vor.u32 %v2013, %v2009
      %v2015 = vrot.slane %v2014, 4
      %v2017 = vshll.u32 %v1336, 16
      %v2019 = vrot.slane %v2017, 5
      %v2020 = vsel %vm1828, %v2015, %v2019
      %v2022 = vshrl.u32 %v1337, 16
      %v2024 = vrot.slane %v2022, 4
      %v2025 = vshll.u32 %v1337, 16
      %v2027 = vrot.slane %v2025, 5
      %v2028 = vor.u32 %v2024, %v2027
      %v2029 = vrot.slane %v2028, 4
      %v2031 = vshll.u32 %v1338, 16
      %v2033 = vrot.slane %v2031, 5
      %v2034 = vsel %vm1828, %v2029, %v2033
      %v2035 = vshrl.u32 %v1338, 16
      %v2037 = vrot.slane %v2035, 4
      %v2038 = vor.u32 %v2037, %v2033
      %v2039 = vrot.slane %v2038, 4
      %v2041 = vshll.u32 %v1339, 16
      %v2043 = vrot.slane %v2041, 5
      %v2044 = vsel %vm1828, %v2039, %v2043
      %v2046 = vshrl.u32 %v1340, 16
      %v2048 = vrot.slane %v2046, 4
      %v2049 = vshll.u32 %v1340, 16
      %v2051 = vrot.slane %v2049, 5
      %v2052 = vor.u32 %v2048, %v2051
      %v2053 = vrot.slane %v2052, 4
      %v2055 = vshll.u32 %v1341, 16
      %v2057 = vrot.slane %v2055, 5
      %v2058 = vsel %vm1828, %v2053, %v2057
      %v2059 = vshrl.u32 %v1341, 16
      %v2061 = vrot.slane %v2059, 4
      %v2062 = vor.u32 %v2061, %v2057
      %v2063 = vrot.slane %v2062, 4
      %v2065 = vshll.u32 %v1342, 16
      %v2067 = vrot.slane %v2065, 5
      %v2068 = vsel %vm1828, %v2063, %v2067
      %v2070 = vshrl.u32 %v1343, 16
      %v2072 = vrot.slane %v2070, 4
      %v2073 = vshll.u32 %v1343, 16
      %v2075 = vrot.slane %v2073, 5
      %v2076 = vor.u32 %v2072, %v2075
      %v2077 = vrot.slane %v2076, 4
      %v2079 = vshll.u32 %v1344, 16
      %v2081 = vrot.slane %v2079, 5
      %v2082 = vsel %vm1828, %v2077, %v2081
      %v2083 = vshrl.u32 %v1344, 16
      %v2085 = vrot.slane %v2083, 4
      %v2086 = vor.u32 %v2085, %v2081
      %v2087 = vrot.slane %v2086, 4
      %v2089 = vshll.u32 %v1345, 16
      %v2091 = vrot.slane %v2089, 5
      %v2092 = vsel %vm1828, %v2087, %v2091
      %v2094 = vshrl.u32 %v1346, 16
      %v2096 = vrot.slane %v2094, 4
      %v2097 = vshll.u32 %v1346, 16
      %v2099 = vrot.slane %v2097, 5
      %v2100 = vor.u32 %v2096, %v2099
      %v2101 = vrot.slane %v2100, 4
      %v2103 = vshll.u32 %v1347, 16
      %v2105 = vrot.slane %v2103, 5
      %v2106 = vsel %vm1828, %v2101, %v2105
      %v2107 = vshrl.u32 %v1347, 16
      %v2109 = vrot.slane %v2107, 4
      %v2110 = vor.u32 %v2109, %v2105
      %v2111 = vrot.slane %v2110, 4
      %v2113 = vshll.u32 %v1348, 16
      %v2115 = vrot.slane %v2113, 5
      %v2116 = vsel %vm1828, %v2111, %v2115
      %v2118 = vshrl.u32 %v1349, 16
      %v2120 = vrot.slane %v2118, 4
      %v2121 = vshll.u32 %v1349, 16
      %v2123 = vrot.slane %v2121, 5
      %v2124 = vor.u32 %v2120, %v2123
      %v2125 = vrot.slane %v2124, 4
      %v2127 = vshll.u32 %v1350, 16
      %v2129 = vrot.slane %v2127, 5
      %v2130 = vsel %vm1828, %v2125, %v2129
      %v2131 = vshrl.u32 %v1350, 16
      %v2133 = vrot.slane %v2131, 4
      %v2134 = vor.u32 %v2133, %v2129
      %v2135 = vrot.slane %v2134, 4
      %v2137 = vshll.u32 %v1351, 16
      %v2139 = vrot.slane %v2137, 5
      %v2140 = vsel %vm1828, %v2135, %v2139
      %v2142 = vshrl.u32 %v1352, 16
      %v2144 = vrot.slane %v2142, 4
      %v2145 = vshll.u32 %v1352, 16
      %v2147 = vrot.slane %v2145, 5
      %v2148 = vor.u32 %v2144, %v2147
      %v2149 = vrot.slane %v2148, 4
      %v2151 = vshll.u32 %v1353, 16
      %v2153 = vrot.slane %v2151, 5
      %v2154 = vsel %vm1828, %v2149, %v2153
      %v2155 = vshrl.u32 %v1353, 16
      %v2157 = vrot.slane %v2155, 4
      %v2158 = vor.u32 %v2157, %v2153
      %v2159 = vrot.slane %v2158, 4
      %v2161 = vshll.u32 %v1354, 16
      %v2163 = vrot.slane %v2161, 5
      %v2164 = vsel %vm1828, %v2159, %v2163
      %v2166 = vshrl.u32 %v1355, 16
      %v2168 = vrot.slane %v2166, 4
      %v2169 = vshll.u32 %v1355, 16
      %v2171 = vrot.slane %v2169, 5
      %v2172 = vor.u32 %v2168, %v2171
      %v2173 = vrot.slane %v2172, 4
      %v2175 = vshll.u32 %v1356, 16
      %v2177 = vrot.slane %v2175, 5
      %v2178 = vsel %vm1828, %v2173, %v2177
      %v2179 = vshrl.u32 %v1356, 16
      %v2181 = vrot.slane %v2179, 4
      %v2182 = vor.u32 %v2181, %v2177
      %v2183 = vrot.slane %v2182, 4
      %v2185 = vshll.u32 %v1357, 16
      %v2187 = vrot.slane %v2185, 5
      %v2188 = vsel %vm1828, %v2183, %v2187
      %v2190 = vshrl.u32 %v1358, 16
      %v2192 = vrot.slane %v2190, 4
      %v2193 = vshll.u32 %v1358, 16
      %v2195 = vrot.slane %v2193, 5
      %v2196 = vor.u32 %v2192, %v2195
      %v2197 = vrot.slane %v2196, 4
      %v2199 = vshll.u32 %v1359, 16
      %v2201 = vrot.slane %v2199, 5
      %v2202 = vsel %vm1828, %v2197, %v2201
      %v2203 = vshrl.u32 %v1359, 16
      %v2205 = vrot.slane %v2203, 4
      %v2206 = vor.u32 %v2205, %v2201
      %v2207 = vrot.slane %v2206, 4
      %v2209 = vshll.u32 %v1360, 16
      %v2211 = vrot.slane %v2209, 5
      %v2212 = vsel %vm1828, %v2207, %v2211
      %s2213 = scalar_lea.vmem %s4, 1
      %v2214 = vld [vmem:[%s2213] sm:$0x1]
      %v2215 = vunpack.c.l.b16 %v1842
      %v2216 = vunpack.c.l.b16 %v1852
      %v2217 = vunpack.c.l.b16 %v1866
      %v2218 = vunpack.c.l.b16 %v1876
      %v2219 = vunpack.c.l.b16 %v1890
      %v2220 = vunpack.c.l.b16 %v1900
      %v2221 = vunpack.c.l.b16 %v1914
      %v2222 = vunpack.c.l.b16 %v1924
      %v2223 = vunpack.c.l.b16 %v1938
      %v2224 = vunpack.c.l.b16 %v1948
      %v2225 = vunpack.c.l.b16 %v1962
      %v2226 = vunpack.c.l.b16 %v1972
      %v2227 = vunpack.c.l.b16 %v1986
      %v2228 = vunpack.c.l.b16 %v1996
      %v2229 = vunpack.c.l.b16 %v2010
      %v2230 = vunpack.c.l.b16 %v2020
      %v2231 = vunpack.c.l.b16 %v2034
      %v2232 = vunpack.c.l.b16 %v2044
      %v2233 = vunpack.c.l.b16 %v2058
      %v2234 = vunpack.c.l.b16 %v2068
      %v2235 = vunpack.c.l.b16 %v2082
      %v2236 = vunpack.c.l.b16 %v2092
      %v2237 = vunpack.c.l.b16 %v2106
      %v2238 = vunpack.c.l.b16 %v2116
      %v2239 = vunpack.c.l.b16 %v2130
      %v2240 = vunpack.c.l.b16 %v2140
      %v2241 = vunpack.c.l.b16 %v2154
      %v2242 = vunpack.c.l.b16 %v2164
      %v2243 = vunpack.c.l.b16 %v2178
      %v2244 = vunpack.c.l.b16 %v2188
      %v2245 = vunpack.c.l.b16 %v2202
      %v2246 = vunpack.c.l.b16 %v2212
      %v2247 = vpack.c.b16 %v2216, %v2215
      %v2248 = vpack.c.b16 %v2218, %v2217
      %v2249 = vpack.c.b16 %v2220, %v2219
      %v2250 = vpack.c.b16 %v2222, %v2221
      %v2251 = vpack.c.b16 %v2224, %v2223
      %v2252 = vpack.c.b16 %v2226, %v2225
      %v2253 = vpack.c.b16 %v2228, %v2227
      %v2254 = vpack.c.b16 %v2230, %v2229
      %v2255 = vpack.c.b16 %v2232, %v2231
      %v2256 = vpack.c.b16 %v2234, %v2233
      %v2257 = vpack.c.b16 %v2236, %v2235
      %v2258 = vpack.c.b16 %v2238, %v2237
      %v2259 = vpack.c.b16 %v2240, %v2239
      %v2260 = vpack.c.b16 %v2242, %v2241
      %v2261 = vpack.c.b16 %v2244, %v2243
      %v2262 = vpack.c.b16 %v2246, %v2245
      %v2264 = vsel %vm1450, %v2247, 0
      %v2267 = vsel %vm1450, %v2248, 0
      %v2270 = vsel %vm1450, %v2249, 0
      %v2273 = vsel %vm1450, %v2250, 0
      %v2276 = vsel %vm1450, %v2251, 0
      %v2279 = vsel %vm1450, %v2252, 0
      %v2282 = vsel %vm1450, %v2253, 0
      %v2285 = vsel %vm1450, %v2254, 0
      %v2288 = vsel %vm1450, %v2255, 0
      %v2291 = vsel %vm1450, %v2256, 0
      %v2294 = vsel %vm1450, %v2257, 0
      %v2297 = vsel %vm1450, %v2258, 0
      %v2300 = vsel %vm1450, %v2259, 0
      %v2303 = vsel %vm1450, %v2260, 0
      %v2306 = vsel %vm1450, %v2261, 0
      %v2309 = vsel %vm1450, %v2262, 0
      %v2312 = vsel %vm1499, %v2214, 0
      %2314 = vmatpush.bf16.msra.mxu0 0
      %2315 = vmatpush.bf16.msra.mxu0 0
      %2316 = vmatpush.bf16.msra.mxu0 0
      %2317 = vmatpush.bf16.msra.mxu0 0
      %2318 = vmatpush.bf16.msra.mxu0 0
      %2319 = vmatpush.bf16.msra.mxu0 0
      %2320 = vmatpush.bf16.msra.mxu0 0
      %2321 = vmatpush.bf16.msra.mxu0 %v2312
      %2322 = vmatmul.bf16.gmra.mxu0 %v2264
      %v2323 = vpop.f32.mrf.mxu0
      %v2324 = vadd.f32 0.0, %v2323
      %v2325 = vpop.f32.mrf.mxu0
      %v2326 = vadd.f32 0.0, %v2325
      %2327 = vmatmul.bf16.gmra.mxu0 %v2267
      %v2328 = vpop.f32.mrf.mxu0
      %v2329 = vadd.f32 0.0, %v2328
      %v2330 = vpop.f32.mrf.mxu0
      %v2331 = vadd.f32 0.0, %v2330
      %2332 = vmatmul.bf16.gmra.mxu0 %v2270
      %v2333 = vpop.f32.mrf.mxu0
      %v2334 = vadd.f32 0.0, %v2333
      %v2335 = vpop.f32.mrf.mxu0
      %v2336 = vadd.f32 0.0, %v2335
      %2337 = vmatmul.bf16.gmra.mxu0 %v2273
      %v2338 = vpop.f32.mrf.mxu0
      %v2339 = vadd.f32 0.0, %v2338
      %v2340 = vpop.f32.mrf.mxu0
      %v2341 = vadd.f32 0.0, %v2340
      %2342 = vmatmul.bf16.gmra.mxu0 %v2276
      %v2343 = vpop.f32.mrf.mxu0
      %v2344 = vadd.f32 0.0, %v2343
      %v2345 = vpop.f32.mrf.mxu0
      %v2346 = vadd.f32 0.0, %v2345
      %2347 = vmatmul.bf16.gmra.mxu0 %v2279
      %v2348 = vpop.f32.mrf.mxu0
      %v2349 = vadd.f32 0.0, %v2348
      %v2350 = vpop.f32.mrf.mxu0
      %v2351 = vadd.f32 0.0, %v2350
      %2352 = vmatmul.bf16.gmra.mxu0 %v2282
      %v2353 = vpop.f32.mrf.mxu0
      %v2354 = vadd.f32 0.0, %v2353
      %v2355 = vpop.f32.mrf.mxu0
      %v2356 = vadd.f32 0.0, %v2355
      %2357 = vmatmul.bf16.gmra.mxu0 %v2285
      %v2358 = vpop.f32.mrf.mxu0
      %v2359 = vadd.f32 0.0, %v2358
      %v2360 = vpop.f32.mrf.mxu0
      %v2361 = vadd.f32 0.0, %v2360
      %2362 = vmatmul.bf16.gmra.mxu0 %v2288
      %v2363 = vpop.f32.mrf.mxu0
      %v2364 = vadd.f32 0.0, %v2363
      %v2365 = vpop.f32.mrf.mxu0
      %v2366 = vadd.f32 0.0, %v2365
      %2367 = vmatmul.bf16.gmra.mxu0 %v2291
      %v2368 = vpop.f32.mrf.mxu0
      %v2369 = vadd.f32 0.0, %v2368
      %v2370 = vpop.f32.mrf.mxu0
      %v2371 = vadd.f32 0.0, %v2370
      %2372 = vmatmul.bf16.gmra.mxu0 %v2294
      %v2373 = vpop.f32.mrf.mxu0
      %v2374 = vadd.f32 0.0, %v2373
      %v2375 = vpop.f32.mrf.mxu0
      %v2376 = vadd.f32 0.0, %v2375
      %2377 = vmatmul.bf16.gmra.mxu0 %v2297
      %v2378 = vpop.f32.mrf.mxu0
      %v2379 = vadd.f32 0.0, %v2378
      %v2380 = vpop.f32.mrf.mxu0
      %v2381 = vadd.f32 0.0, %v2380
      %2382 = vmatmul.bf16.gmra.mxu0 %v2300
      %v2383 = vpop.f32.mrf.mxu0
      %v2384 = vadd.f32 0.0, %v2383
      %v2385 = vpop.f32.mrf.mxu0
      %v2386 = vadd.f32 0.0, %v2385
      %2387 = vmatmul.bf16.gmra.mxu0 %v2303
      %v2388 = vpop.f32.mrf.mxu0
      %v2389 = vadd.f32 0.0, %v2388
      %v2390 = vpop.f32.mrf.mxu0
      %v2391 = vadd.f32 0.0, %v2390
      %2392 = vmatmul.bf16.gmra.mxu0 %v2306
      %v2393 = vpop.f32.mrf.mxu0
      %v2394 = vadd.f32 0.0, %v2393
      %v2395 = vpop.f32.mrf.mxu0
      %v2396 = vadd.f32 0.0, %v2395
      %2397 = vmatmul.bf16.gmra.mxu0 %v2309
      %v2398 = vpop.f32.mrf.mxu0
      %v2399 = vadd.f32 0.0, %v2398
      %v2400 = vpop.f32.mrf.mxu0
      %v2401 = vadd.f32 0.0, %v2400
      %2402 = vdwg.mxu0
      %v2403 = vadd.f32 %v1794, %v2324
      %v2404 = vadd.f32 %v1795, %v2326
      %v2405 = vadd.f32 %v1796, %v2329
      %v2406 = vadd.f32 %v1797, %v2331
      %v2407 = vadd.f32 %v1798, %v2334
      %v2408 = vadd.f32 %v1799, %v2336
      %v2409 = vadd.f32 %v1800, %v2339
      %v2410 = vadd.f32 %v1801, %v2341
      %v2411 = vadd.f32 %v1802, %v2344
      %v2412 = vadd.f32 %v1803, %v2346
      %v2413 = vadd.f32 %v1804, %v2349
      %v2414 = vadd.f32 %v1805, %v2351
      %v2415 = vadd.f32 %v1806, %v2354
      %v2416 = vadd.f32 %v1807, %v2356
      %v2417 = vadd.f32 %v1808, %v2359
      %v2418 = vadd.f32 %v1809, %v2361
      %v2419 = vadd.f32 %v1810, %v2364
      %v2420 = vadd.f32 %v1811, %v2366
      %v2421 = vadd.f32 %v1812, %v2369
      %v2422 = vadd.f32 %v1813, %v2371
      %v2423 = vadd.f32 %v1814, %v2374
      %v2424 = vadd.f32 %v1815, %v2376
      %v2425 = vadd.f32 %v1816, %v2379
      %v2426 = vadd.f32 %v1817, %v2381
      %v2427 = vadd.f32 %v1818, %v2384
      %v2428 = vadd.f32 %v1819, %v2386
      %v2429 = vadd.f32 %v1820, %v2389
      %v2430 = vadd.f32 %v1821, %v2391
      %v2431 = vadd.f32 %v1822, %v2394
      %v2432 = vadd.f32 %v1823, %v2396
      %v2433 = vadd.f32 %v1824, %v2399
      %v2434 = vadd.f32 %v1825, %v2401
      %v2436 = vshrl.u32 %v1361, 16
      %v2438 = vrot.slane %v2436, 4
      %v2439 = vshll.u32 %v1361, 16
      %v2441 = vrot.slane %v2439, 5
      %v2442 = vor.u32 %v2438, %v2441
      %v2443 = vrot.slane %v2442, 4
      %v2445 = vshll.u32 %v1362, 16
      %v2447 = vrot.slane %v2445, 5
      %v2448 = vsel %vm1828, %v2443, %v2447
      %v2449 = vshrl.u32 %v1362, 16
      %v2451 = vrot.slane %v2449, 4
      %v2452 = vor.u32 %v2451, %v2447
      %v2453 = vrot.slane %v2452, 4
      %v2455 = vshll.u32 %v1363, 16
      %v2457 = vrot.slane %v2455, 5
      %v2458 = vsel %vm1828, %v2453, %v2457
      %s2459 = scalar_lea.vmem %s4, 4
      %v2460 = vld [vmem:[%s2459] sm:$0x1]
      %v2461 = vunpack.c.l.b16 %v2448
      %v2462 = vunpack.c.l.b16 %v2458
      %v2463 = vpack.c.b16 %v2462, %v2461
      %v2465 = vsel %vm1450, %v2463, 0
      %v2468 = vsel %vm1499, %v2460, 0
      %2470 = vmatpush.bf16.msra.mxu0 0
      %2471 = vmatpush.bf16.msra.mxu0 0
      %2472 = vmatpush.bf16.msra.mxu0 0
      %2473 = vmatpush.bf16.msra.mxu0 0
      %2474 = vmatpush.bf16.msra.mxu0 0
      %2475 = vmatpush.bf16.msra.mxu0 0
      %2476 = vmatpush.bf16.msra.mxu0 0
      %2477 = vmatpush.bf16.msra.mxu0 %v2468
      %2478 = vmatmul.bf16.gmra.mxu0 %v2267
      %v2479 = vpop.f32.mrf.mxu0
      %v2480 = vadd.f32 0.0, %v2479
      %v2481 = vpop.f32.mrf.mxu0
      %v2482 = vadd.f32 0.0, %v2481
      %2483 = vmatmul.bf16.gmra.mxu0 %v2270
      %v2484 = vpop.f32.mrf.mxu0
      %v2485 = vadd.f32 0.0, %v2484
      %v2486 = vpop.f32.mrf.mxu0
      %v2487 = vadd.f32 0.0, %v2486
      %2488 = vmatmul.bf16.gmra.mxu0 %v2273
      %v2489 = vpop.f32.mrf.mxu0
      %v2490 = vadd.f32 0.0, %v2489
      %v2491 = vpop.f32.mrf.mxu0
      %v2492 = vadd.f32 0.0, %v2491
      %2493 = vmatmul.bf16.gmra.mxu0 %v2276
      %v2494 = vpop.f32.mrf.mxu0
      %v2495 = vadd.f32 0.0, %v2494
      %v2496 = vpop.f32.mrf.mxu0
      %v2497 = vadd.f32 0.0, %v2496
      %2498 = vmatmul.bf16.gmra.mxu0 %v2279
      %v2499 = vpop.f32.mrf.mxu0
      %v2500 = vadd.f32 0.0, %v2499
      %v2501 = vpop.f32.mrf.mxu0
      %v2502 = vadd.f32 0.0, %v2501
      %2503 = vmatmul.bf16.gmra.mxu0 %v2282
      %v2504 = vpop.f32.mrf.mxu0
      %v2505 = vadd.f32 0.0, %v2504
      %v2506 = vpop.f32.mrf.mxu0
      %v2507 = vadd.f32 0.0, %v2506
      %2508 = vmatmul.bf16.gmra.mxu0 %v2285
      %v2509 = vpop.f32.mrf.mxu0
      %v2510 = vadd.f32 0.0, %v2509
      %v2511 = vpop.f32.mrf.mxu0
      %v2512 = vadd.f32 0.0, %v2511
      %2513 = vmatmul.bf16.gmra.mxu0 %v2288
      %v2514 = vpop.f32.mrf.mxu0
      %v2515 = vadd.f32 0.0, %v2514
      %v2516 = vpop.f32.mrf.mxu0
      %v2517 = vadd.f32 0.0, %v2516
      %2518 = vmatmul.bf16.gmra.mxu0 %v2291
      %v2519 = vpop.f32.mrf.mxu0
      %v2520 = vadd.f32 0.0, %v2519
      %v2521 = vpop.f32.mrf.mxu0
      %v2522 = vadd.f32 0.0, %v2521
      %2523 = vmatmul.bf16.gmra.mxu0 %v2294
      %v2524 = vpop.f32.mrf.mxu0
      %v2525 = vadd.f32 0.0, %v2524
      %v2526 = vpop.f32.mrf.mxu0
      %v2527 = vadd.f32 0.0, %v2526
      %2528 = vmatmul.bf16.gmra.mxu0 %v2297
      %v2529 = vpop.f32.mrf.mxu0
      %v2530 = vadd.f32 0.0, %v2529
      %v2531 = vpop.f32.mrf.mxu0
      %v2532 = vadd.f32 0.0, %v2531
      %2533 = vmatmul.bf16.gmra.mxu0 %v2300
      %v2534 = vpop.f32.mrf.mxu0
      %v2535 = vadd.f32 0.0, %v2534
      %v2536 = vpop.f32.mrf.mxu0
      %v2537 = vadd.f32 0.0, %v2536
      %2538 = vmatmul.bf16.gmra.mxu0 %v2303
      %v2539 = vpop.f32.mrf.mxu0
      %v2540 = vadd.f32 0.0, %v2539
      %v2541 = vpop.f32.mrf.mxu0
      %v2542 = vadd.f32 0.0, %v2541
      %2543 = vmatmul.bf16.gmra.mxu0 %v2306
      %v2544 = vpop.f32.mrf.mxu0
      %v2545 = vadd.f32 0.0, %v2544
      %v2546 = vpop.f32.mrf.mxu0
      %v2547 = vadd.f32 0.0, %v2546
      %2548 = vmatmul.bf16.gmra.mxu0 %v2309
      %v2549 = vpop.f32.mrf.mxu0
      %v2550 = vadd.f32 0.0, %v2549
      %v2551 = vpop.f32.mrf.mxu0
      %v2552 = vadd.f32 0.0, %v2551
      %2553 = vmatmul.bf16.gmra.mxu0 %v2465
      %v2554 = vpop.f32.mrf.mxu0
      %v2555 = vadd.f32 0.0, %v2554
      %v2556 = vpop.f32.mrf.mxu0
      %v2557 = vadd.f32 0.0, %v2556
      %2558 = vdwg.mxu0
      %v2559 = vadd.f32 %v2403, %v2480
      %v2560 = vadd.f32 %v2404, %v2482
      %v2561 = vadd.f32 %v2405, %v2485
      %v2562 = vadd.f32 %v2406, %v2487
      %v2563 = vadd.f32 %v2407, %v2490
      %v2564 = vadd.f32 %v2408, %v2492
      %v2565 = vadd.f32 %v2409, %v2495
      %v2566 = vadd.f32 %v2410, %v2497
      %v2567 = vadd.f32 %v2411, %v2500
      %v2568 = vadd.f32 %v2412, %v2502
      %v2569 = vadd.f32 %v2413, %v2505
      %v2570 = vadd.f32 %v2414, %v2507
      %v2571 = vadd.f32 %v2415, %v2510
      %v2572 = vadd.f32 %v2416, %v2512
      %v2573 = vadd.f32 %v2417, %v2515
      %v2574 = vadd.f32 %v2418, %v2517
      %v2575 = vadd.f32 %v2419, %v2520
      %v2576 = vadd.f32 %v2420, %v2522
      %v2577 = vadd.f32 %v2421, %v2525
      %v2578 = vadd.f32 %v2422, %v2527
      %v2579 = vadd.f32 %v2423, %v2530
      %v2580 = vadd.f32 %v2424, %v2532
      %v2581 = vadd.f32 %v2425, %v2535
      %v2582 = vadd.f32 %v2426, %v2537
      %v2583 = vadd.f32 %v2427, %v2540
      %v2584 = vadd.f32 %v2428, %v2542
      %v2585 = vadd.f32 %v2429, %v2545
      %v2586 = vadd.f32 %v2430, %v2547
      %v2587 = vadd.f32 %v2431, %v2550
      %v2588 = vadd.f32 %v2432, %v2552
      %v2589 = vadd.f32 %v2433, %v2555
      %v2590 = vadd.f32 %v2434, %v2557
      %v2592 = vshrl.u32 %v1364, 16
      %v2594 = vrot.slane %v2592, 4
      %v2595 = vshll.u32 %v1364, 16
      %v2597 = vrot.slane %v2595, 5
      %v2598 = vor.u32 %v2594, %v2597
      %v2599 = vrot.slane %v2598, 4
      %v2601 = vshll.u32 %v1365, 16
      %v2603 = vrot.slane %v2601, 5
      %v2604 = vsel %vm1828, %v2599, %v2603
      %v2605 = vshrl.u32 %v1365, 16
      %v2607 = vrot.slane %v2605, 4
      %v2608 = vor.u32 %v2607, %v2603
      %v2609 = vrot.slane %v2608, 4
      %v2611 = vshll.u32 %v1366, 16
      %v2613 = vrot.slane %v2611, 5
      %v2614 = vsel %vm1828, %v2609, %v2613
      %s2615 = scalar_lea.vmem %s4, 7
      %v2616 = vld [vmem:[%s2615] sm:$0x1]
      %v2617 = vunpack.c.l.b16 %v2604
      %v2618 = vunpack.c.l.b16 %v2614
      %v2619 = vpack.c.b16 %v2618, %v2617
      %v2621 = vsel %vm1450, %v2619, 0
      %v2624 = vsel %vm1499, %v2616, 0
      %2626 = vmatpush.bf16.msra.mxu0 0
      %2627 = vmatpush.bf16.msra.mxu0 0
      %2628 = vmatpush.bf16.msra.mxu0 0
      %2629 = vmatpush.bf16.msra.mxu0 0
      %2630 = vmatpush.bf16.msra.mxu0 0
      %2631 = vmatpush.bf16.msra.mxu0 0
      %2632 = vmatpush.bf16.msra.mxu0 0
      %2633 = vmatpush.bf16.msra.mxu0 %v2624
      %2634 = vmatmul.bf16.gmra.mxu0 %v2270
      %v2635 = vpop.f32.mrf.mxu0
      %v2636 = vadd.f32 0.0, %v2635
      %v2637 = vpop.f32.mrf.mxu0
      %v2638 = vadd.f32 0.0, %v2637
      %2639 = vmatmul.bf16.gmra.mxu0 %v2273
      %v2640 = vpop.f32.mrf.mxu0
      %v2641 = vadd.f32 0.0, %v2640
      %v2642 = vpop.f32.mrf.mxu0
      %v2643 = vadd.f32 0.0, %v2642
      %2644 = vmatmul.bf16.gmra.mxu0 %v2276
      %v2645 = vpop.f32.mrf.mxu0
      %v2646 = vadd.f32 0.0, %v2645
      %v2647 = vpop.f32.mrf.mxu0
      %v2648 = vadd.f32 0.0, %v2647
      %2649 = vmatmul.bf16.gmra.mxu0 %v2279
      %v2650 = vpop.f32.mrf.mxu0
      %v2651 = vadd.f32 0.0, %v2650
      %v2652 = vpop.f32.mrf.mxu0
      %v2653 = vadd.f32 0.0, %v2652
      %2654 = vmatmul.bf16.gmra.mxu0 %v2282
      %v2655 = vpop.f32.mrf.mxu0
      %v2656 = vadd.f32 0.0, %v2655
      %v2657 = vpop.f32.mrf.mxu0
      %v2658 = vadd.f32 0.0, %v2657
      %2659 = vmatmul.bf16.gmra.mxu0 %v2285
      %v2660 = vpop.f32.mrf.mxu0
      %v2661 = vadd.f32 0.0, %v2660
      %v2662 = vpop.f32.mrf.mxu0
      %v2663 = vadd.f32 0.0, %v2662
      %2664 = vmatmul.bf16.gmra.mxu0 %v2288
      %v2665 = vpop.f32.mrf.mxu0
      %v2666 = vadd.f32 0.0, %v2665
      %v2667 = vpop.f32.mrf.mxu0
      %v2668 = vadd.f32 0.0, %v2667
      %2669 = vmatmul.bf16.gmra.mxu0 %v2291
      %v2670 = vpop.f32.mrf.mxu0
      %v2671 = vadd.f32 0.0, %v2670
      %v2672 = vpop.f32.mrf.mxu0
      %v2673 = vadd.f32 0.0, %v2672
      %2674 = vmatmul.bf16.gmra.mxu0 %v2294
      %v2675 = vpop.f32.mrf.mxu0
      %v2676 = vadd.f32 0.0, %v2675
      %v2677 = vpop.f32.mrf.mxu0
      %v2678 = vadd.f32 0.0, %v2677
      %2679 = vmatmul.bf16.gmra.mxu0 %v2297
      %v2680 = vpop.f32.mrf.mxu0
      %v2681 = vadd.f32 0.0, %v2680
      %v2682 = vpop.f32.mrf.mxu0
      %v2683 = vadd.f32 0.0, %v2682
      %2684 = vmatmul.bf16.gmra.mxu0 %v2300
      %v2685 = vpop.f32.mrf.mxu0
      %v2686 = vadd.f32 0.0, %v2685
      %v2687 = vpop.f32.mrf.mxu0
      %v2688 = vadd.f32 0.0, %v2687
      %2689 = vmatmul.bf16.gmra.mxu0 %v2303
      %v2690 = vpop.f32.mrf.mxu0
      %v2691 = vadd.f32 0.0, %v2690
      %v2692 = vpop.f32.mrf.mxu0
      %v2693 = vadd.f32 0.0, %v2692
      %2694 = vmatmul.bf16.gmra.mxu0 %v2306
      %v2695 = vpop.f32.mrf.mxu0
      %v2696 = vadd.f32 0.0, %v2695
      %v2697 = vpop.f32.mrf.mxu0
      %v2698 = vadd.f32 0.0, %v2697
      %2699 = vmatmul.bf16.gmra.mxu0 %v2309
      %v2700 = vpop.f32.mrf.mxu0
      %v2701 = vadd.f32 0.0, %v2700
      %v2702 = vpop.f32.mrf.mxu0
      %v2703 = vadd.f32 0.0, %v2702
      %2704 = vmatmul.bf16.gmra.mxu0 %v2465
      %v2705 = vpop.f32.mrf.mxu0
      %v2706 = vadd.f32 0.0, %v2705
      %v2707 = vpop.f32.mrf.mxu0
      %v2708 = vadd.f32 0.0, %v2707
      %2709 = vmatmul.bf16.gmra.mxu0 %v2621
      %v2710 = vpop.f32.mrf.mxu0
      %v2711 = vadd.f32 0.0, %v2710
      %v2712 = vpop.f32.mrf.mxu0
      %v2713 = vadd.f32 0.0, %v2712
      %2714 = vdwg.mxu0
      %v2715 = vadd.f32 %v2559, %v2636
      %v2716 = vadd.f32 %v2560, %v2638
      %v2717 = vadd.f32 %v2561, %v2641
      %v2718 = vadd.f32 %v2562, %v2643
      %v2719 = vadd.f32 %v2563, %v2646
      %v2720 = vadd.f32 %v2564, %v2648
      %v2721 = vadd.f32 %v2565, %v2651
      %v2722 = vadd.f32 %v2566, %v2653
      %v2723 = vadd.f32 %v2567, %v2656
      %v2724 = vadd.f32 %v2568, %v2658
      %v2725 = vadd.f32 %v2569, %v2661
      %v2726 = vadd.f32 %v2570, %v2663
      %v2727 = vadd.f32 %v2571, %v2666
      %v2728 = vadd.f32 %v2572, %v2668
      %v2729 = vadd.f32 %v2573, %v2671
      %v2730 = vadd.f32 %v2574, %v2673
      %v2731 = vadd.f32 %v2575, %v2676
      %v2732 = vadd.f32 %v2576, %v2678
      %v2733 = vadd.f32 %v2577, %v2681
      %v2734 = vadd.f32 %v2578, %v2683
      %v2735 = vadd.f32 %v2579, %v2686
      %v2736 = vadd.f32 %v2580, %v2688
      %v2737 = vadd.f32 %v2581, %v2691
      %v2738 = vadd.f32 %v2582, %v2693
      %v2739 = vadd.f32 %v2583, %v2696
      %v2740 = vadd.f32 %v2584, %v2698
      %v2741 = vadd.f32 %v2585, %v2701
      %v2742 = vadd.f32 %v2586, %v2703
      %v2743 = vadd.f32 %v2587, %v2706
      %v2744 = vadd.f32 %v2588, %v2708
      %v2745 = vadd.f32 %v2589, %v2711
      %v2746 = vadd.f32 %v2590, %v2713
      %vm2763 = vcmask 1042432
      %vm2764 = vcmask 1046532
      %vm2765 = vmor %vm2763, %vm2764
      %v2766 = vrot.slane %v1313, 5
      %v2767 = vrot.slane %v2766, 4
      %v2768 = vrot.slane %v1314, 5
      %v2769 = vsel %vm2765, %v2767, %v2768
      %v2770 = vrot.slane %v2768, 4
      %v2771 = vrot.slane %v1315, 5
      %v2772 = vsel %vm2765, %v2770, %v2771
      %v2773 = vrot.slane %v1316, 5
      %v2774 = vrot.slane %v2773, 4
      %v2775 = vrot.slane %v1317, 5
      %v2776 = vsel %vm2765, %v2774, %v2775
      %v2777 = vrot.slane %v2775, 4
      %v2778 = vrot.slane %v1318, 5
      %v2779 = vsel %vm2765, %v2777, %v2778
      %v2780 = vrot.slane %v1319, 5
      %v2781 = vrot.slane %v2780, 4
      %v2782 = vrot.slane %v1320, 5
      %v2783 = vsel %vm2765, %v2781, %v2782
      %v2784 = vrot.slane %v2782, 4
      %v2785 = vrot.slane %v1321, 5
      %v2786 = vsel %vm2765, %v2784, %v2785
      %v2787 = vrot.slane %v1322, 5
      %v2788 = vrot.slane %v2787, 4
      %v2789 = vrot.slane %v1323, 5
      %v2790 = vsel %vm2765, %v2788, %v2789
      %v2791 = vrot.slane %v2789, 4
      %v2792 = vrot.slane %v1324, 5
      %v2793 = vsel %vm2765, %v2791, %v2792
      %v2794 = vrot.slane %v1325, 5
      %v2795 = vrot.slane %v2794, 4
      %v2796 = vrot.slane %v1326, 5
      %v2797 = vsel %vm2765, %v2795, %v2796
      %v2798 = vrot.slane %v2796, 4
      %v2799 = vrot.slane %v1327, 5
      %v2800 = vsel %vm2765, %v2798, %v2799
      %v2801 = vrot.slane %v1328, 5
      %v2802 = vrot.slane %v2801, 4
      %v2803 = vrot.slane %v1329, 5
      %v2804 = vsel %vm2765, %v2802, %v2803
      %v2805 = vrot.slane %v2803, 4
      %v2806 = vrot.slane %v1330, 5
      %v2807 = vsel %vm2765, %v2805, %v2806
      %v2808 = vrot.slane %v1331, 5
      %v2809 = vrot.slane %v2808, 4
      %v2810 = vrot.slane %v1332, 5
      %v2811 = vsel %vm2765, %v2809, %v2810
      %v2812 = vrot.slane %v2810, 4
      %v2813 = vrot.slane %v1333, 5
      %v2814 = vsel %vm2765, %v2812, %v2813
      %v2815 = vrot.slane %v1334, 5
      %v2816 = vrot.slane %v2815, 4
      %v2817 = vrot.slane %v1335, 5
      %v2818 = vsel %vm2765, %v2816, %v2817
      %v2819 = vrot.slane %v2817, 4
      %v2820 = vrot.slane %v1336, 5
      %v2821 = vsel %vm2765, %v2819, %v2820
      %v2822 = vrot.slane %v1337, 5
      %v2823 = vrot.slane %v2822, 4
      %v2824 = vrot.slane %v1338, 5
      %v2825 = vsel %vm2765, %v2823, %v2824
      %v2826 = vrot.slane %v2824, 4
      %v2827 = vrot.slane %v1339, 5
      %v2828 = vsel %vm2765, %v2826, %v2827
      %v2829 = vrot.slane %v1340, 5
      %v2830 = vrot.slane %v2829, 4
      %v2831 = vrot.slane %v1341, 5
      %v2832 = vsel %vm2765, %v2830, %v2831
      %v2833 = vrot.slane %v2831, 4
      %v2834 = vrot.slane %v1342, 5
      %v2835 = vsel %vm2765, %v2833, %v2834
      %v2836 = vrot.slane %v1343, 5
      %v2837 = vrot.slane %v2836, 4
      %v2838 = vrot.slane %v1344, 5
      %v2839 = vsel %vm2765, %v2837, %v2838
      %v2840 = vrot.slane %v2838, 4
      %v2841 = vrot.slane %v1345, 5
      %v2842 = vsel %vm2765, %v2840, %v2841
      %v2843 = vrot.slane %v1346, 5
      %v2844 = vrot.slane %v2843, 4
      %v2845 = vrot.slane %v1347, 5
      %v2846 = vsel %vm2765, %v2844, %v2845
      %v2847 = vrot.slane %v2845, 4
      %v2848 = vrot.slane %v1348, 5
      %v2849 = vsel %vm2765, %v2847, %v2848
      %v2850 = vrot.slane %v1349, 5
      %v2851 = vrot.slane %v2850, 4
      %v2852 = vrot.slane %v1350, 5
      %v2853 = vsel %vm2765, %v2851, %v2852
      %v2854 = vrot.slane %v2852, 4
      %v2855 = vrot.slane %v1351, 5
      %v2856 = vsel %vm2765, %v2854, %v2855
      %v2857 = vrot.slane %v1352, 5
      %v2858 = vrot.slane %v2857, 4
      %v2859 = vrot.slane %v1353, 5
      %v2860 = vsel %vm2765, %v2858, %v2859
      %v2861 = vrot.slane %v2859, 4
      %v2862 = vrot.slane %v1354, 5
      %v2863 = vsel %vm2765, %v2861, %v2862
      %v2864 = vrot.slane %v1355, 5
      %v2865 = vrot.slane %v2864, 4
      %v2866 = vrot.slane %v1356, 5
      %v2867 = vsel %vm2765, %v2865, %v2866
      %v2868 = vrot.slane %v2866, 4
      %v2869 = vrot.slane %v1357, 5
      %v2870 = vsel %vm2765, %v2868, %v2869
      %v2871 = vrot.slane %v1358, 5
      %v2872 = vrot.slane %v2871, 4
      %v2873 = vrot.slane %v1359, 5
      %v2874 = vsel %vm2765, %v2872, %v2873
      %v2875 = vrot.slane %v2873, 4
      %v2876 = vrot.slane %v1360, 5
      %v2877 = vsel %vm2765, %v2875, %v2876
      %s2878 = scalar_lea.vmem %s4, 2
      %v2879 = vld [vmem:[%s2878] sm:$0x1]
      %v2880 = vunpack.c.l.b16 %v2769
      %v2881 = vunpack.c.l.b16 %v2772
      %v2882 = vunpack.c.l.b16 %v2776
      %v2883 = vunpack.c.l.b16 %v2779
      %v2884 = vunpack.c.l.b16 %v2783
      %v2885 = vunpack.c.l.b16 %v2786
      %v2886 = vunpack.c.l.b16 %v2790
      %v2887 = vunpack.c.l.b16 %v2793
      %v2888 = vunpack.c.l.b16 %v2797
      %v2889 = vunpack.c.l.b16 %v2800
      %v2890 = vunpack.c.l.b16 %v2804
      %v2891 = vunpack.c.l.b16 %v2807
      %v2892 = vunpack.c.l.b16 %v2811
      %v2893 = vunpack.c.l.b16 %v2814
      %v2894 = vunpack.c.l.b16 %v2818
      %v2895 = vunpack.c.l.b16 %v2821
      %v2896 = vunpack.c.l.b16 %v2825
      %v2897 = vunpack.c.l.b16 %v2828
      %v2898 = vunpack.c.l.b16 %v2832
      %v2899 = vunpack.c.l.b16 %v2835
      %v2900 = vunpack.c.l.b16 %v2839
      %v2901 = vunpack.c.l.b16 %v2842
      %v2902 = vunpack.c.l.b16 %v2846
      %v2903 = vunpack.c.l.b16 %v2849
      %v2904 = vunpack.c.l.b16 %v2853
      %v2905 = vunpack.c.l.b16 %v2856
      %v2906 = vunpack.c.l.b16 %v2860
      %v2907 = vunpack.c.l.b16 %v2863
      %v2908 = vunpack.c.l.b16 %v2867
      %v2909 = vunpack.c.l.b16 %v2870
      %v2910 = vunpack.c.l.b16 %v2874
      %v2911 = vunpack.c.l.b16 %v2877
      %v2912 = vpack.c.b16 %v2881, %v2880
      %v2913 = vpack.c.b16 %v2883, %v2882
      %v2914 = vpack.c.b16 %v2885, %v2884
      %v2915 = vpack.c.b16 %v2887, %v2886
      %v2916 = vpack.c.b16 %v2889, %v2888
      %v2917 = vpack.c.b16 %v2891, %v2890
      %v2918 = vpack.c.b16 %v2893, %v2892
      %v2919 = vpack.c.b16 %v2895, %v2894
      %v2920 = vpack.c.b16 %v2897, %v2896
      %v2921 = vpack.c.b16 %v2899, %v2898
      %v2922 = vpack.c.b16 %v2901, %v2900
      %v2923 = vpack.c.b16 %v2903, %v2902
      %v2924 = vpack.c.b16 %v2905, %v2904
      %v2925 = vpack.c.b16 %v2907, %v2906
      %v2926 = vpack.c.b16 %v2909, %v2908
      %v2927 = vpack.c.b16 %v2911, %v2910
      %v2929 = vsel %vm1450, %v2912, 0
      %v2932 = vsel %vm1450, %v2913, 0
      %v2935 = vsel %vm1450, %v2914, 0
      %v2938 = vsel %vm1450, %v2915, 0
      %v2941 = vsel %vm1450, %v2916, 0
      %v2944 = vsel %vm1450, %v2917, 0
      %v2947 = vsel %vm1450, %v2918, 0
      %v2950 = vsel %vm1450, %v2919, 0
      %v2953 = vsel %vm1450, %v2920, 0
      %v2956 = vsel %vm1450, %v2921, 0
      %v2959 = vsel %vm1450, %v2922, 0
      %v2962 = vsel %vm1450, %v2923, 0
      %v2965 = vsel %vm1450, %v2924, 0
      %v2968 = vsel %vm1450, %v2925, 0
      %v2971 = vsel %vm1450, %v2926, 0
      %v2974 = vsel %vm1450, %v2927, 0
      %v2977 = vsel %vm1499, %v2879, 0
      %2979 = vmatpush.bf16.msra.mxu0 0
      %2980 = vmatpush.bf16.msra.mxu0 0
      %2981 = vmatpush.bf16.msra.mxu0 0
      %2982 = vmatpush.bf16.msra.mxu0 0
      %2983 = vmatpush.bf16.msra.mxu0 0
      %2984 = vmatpush.bf16.msra.mxu0 0
      %2985 = vmatpush.bf16.msra.mxu0 0
      %2986 = vmatpush.bf16.msra.mxu0 %v2977
      %2987 = vmatmul.bf16.gmra.mxu0 %v2929
      %v2988 = vpop.f32.mrf.mxu0
      %v2989 = vadd.f32 0.0, %v2988
      %v2990 = vpop.f32.mrf.mxu0
      %v2991 = vadd.f32 0.0, %v2990
      %2992 = vmatmul.bf16.gmra.mxu0 %v2932
      %v2993 = vpop.f32.mrf.mxu0
      %v2994 = vadd.f32 0.0, %v2993
      %v2995 = vpop.f32.mrf.mxu0
      %v2996 = vadd.f32 0.0, %v2995
      %2997 = vmatmul.bf16.gmra.mxu0 %v2935
      %v2998 = vpop.f32.mrf.mxu0
      %v2999 = vadd.f32 0.0, %v2998
      %v3000 = vpop.f32.mrf.mxu0
      %v3001 = vadd.f32 0.0, %v3000
      %3002 = vmatmul.bf16.gmra.mxu0 %v2938
      %v3003 = vpop.f32.mrf.mxu0
      %v3004 = vadd.f32 0.0, %v3003
      %v3005 = vpop.f32.mrf.mxu0
      %v3006 = vadd.f32 0.0, %v3005
      %3007 = vmatmul.bf16.gmra.mxu0 %v2941
      %v3008 = vpop.f32.mrf.mxu0
      %v3009 = vadd.f32 0.0, %v3008
      %v3010 = vpop.f32.mrf.mxu0
      %v3011 = vadd.f32 0.0, %v3010
      %3012 = vmatmul.bf16.gmra.mxu0 %v2944
      %v3013 = vpop.f32.mrf.mxu0
      %v3014 = vadd.f32 0.0, %v3013
      %v3015 = vpop.f32.mrf.mxu0
      %v3016 = vadd.f32 0.0, %v3015
      %3017 = vmatmul.bf16.gmra.mxu0 %v2947
      %v3018 = vpop.f32.mrf.mxu0
      %v3019 = vadd.f32 0.0, %v3018
      %v3020 = vpop.f32.mrf.mxu0
      %v3021 = vadd.f32 0.0, %v3020
      %3022 = vmatmul.bf16.gmra.mxu0 %v2950
      %v3023 = vpop.f32.mrf.mxu0
      %v3024 = vadd.f32 0.0, %v3023
      %v3025 = vpop.f32.mrf.mxu0
      %v3026 = vadd.f32 0.0, %v3025
      %3027 = vmatmul.bf16.gmra.mxu0 %v2953
      %v3028 = vpop.f32.mrf.mxu0
      %v3029 = vadd.f32 0.0, %v3028
      %v3030 = vpop.f32.mrf.mxu0
      %v3031 = vadd.f32 0.0, %v3030
      %3032 = vmatmul.bf16.gmra.mxu0 %v2956
      %v3033 = vpop.f32.mrf.mxu0
      %v3034 = vadd.f32 0.0, %v3033
      %v3035 = vpop.f32.mrf.mxu0
      %v3036 = vadd.f32 0.0, %v3035
      %3037 = vmatmul.bf16.gmra.mxu0 %v2959
      %v3038 = vpop.f32.mrf.mxu0
      %v3039 = vadd.f32 0.0, %v3038
      %v3040 = vpop.f32.mrf.mxu0
      %v3041 = vadd.f32 0.0, %v3040
      %3042 = vmatmul.bf16.gmra.mxu0 %v2962
      %v3043 = vpop.f32.mrf.mxu0
      %v3044 = vadd.f32 0.0, %v3043
      %v3045 = vpop.f32.mrf.mxu0
      %v3046 = vadd.f32 0.0, %v3045
      %3047 = vmatmul.bf16.gmra.mxu0 %v2965
      %v3048 = vpop.f32.mrf.mxu0
      %v3049 = vadd.f32 0.0, %v3048
      %v3050 = vpop.f32.mrf.mxu0
      %v3051 = vadd.f32 0.0, %v3050
      %3052 = vmatmul.bf16.gmra.mxu0 %v2968
      %v3053 = vpop.f32.mrf.mxu0
      %v3054 = vadd.f32 0.0, %v3053
      %v3055 = vpop.f32.mrf.mxu0
      %v3056 = vadd.f32 0.0, %v3055
      %3057 = vmatmul.bf16.gmra.mxu0 %v2971
      %v3058 = vpop.f32.mrf.mxu0
      %v3059 = vadd.f32 0.0, %v3058
      %v3060 = vpop.f32.mrf.mxu0
      %v3061 = vadd.f32 0.0, %v3060
      %3062 = vmatmul.bf16.gmra.mxu0 %v2974
      %v3063 = vpop.f32.mrf.mxu0
      %v3064 = vadd.f32 0.0, %v3063
      %v3065 = vpop.f32.mrf.mxu0
      %v3066 = vadd.f32 0.0, %v3065
      %3067 = vdwg.mxu0
      %v3068 = vadd.f32 %v2715, %v2989
      %v3069 = vadd.f32 %v2716, %v2991
      %v3070 = vadd.f32 %v2717, %v2994
      %v3071 = vadd.f32 %v2718, %v2996
      %v3072 = vadd.f32 %v2719, %v2999
      %v3073 = vadd.f32 %v2720, %v3001
      %v3074 = vadd.f32 %v2721, %v3004
      %v3075 = vadd.f32 %v2722, %v3006
      %v3076 = vadd.f32 %v2723, %v3009
      %v3077 = vadd.f32 %v2724, %v3011
      %v3078 = vadd.f32 %v2725, %v3014
      %v3079 = vadd.f32 %v2726, %v3016
      %v3080 = vadd.f32 %v2727, %v3019
      %v3081 = vadd.f32 %v2728, %v3021
      %v3082 = vadd.f32 %v2729, %v3024
      %v3083 = vadd.f32 %v2730, %v3026
      %v3084 = vadd.f32 %v2731, %v3029
      %v3085 = vadd.f32 %v2732, %v3031
      %v3086 = vadd.f32 %v2733, %v3034
      %v3087 = vadd.f32 %v2734, %v3036
      %v3088 = vadd.f32 %v2735, %v3039
      %v3089 = vadd.f32 %v2736, %v3041
      %v3090 = vadd.f32 %v2737, %v3044
      %v3091 = vadd.f32 %v2738, %v3046
      %v3092 = vadd.f32 %v2739, %v3049
      %v3093 = vadd.f32 %v2740, %v3051
      %v3094 = vadd.f32 %v2741, %v3054
      %v3095 = vadd.f32 %v2742, %v3056
      %v3096 = vadd.f32 %v2743, %v3059
      %v3097 = vadd.f32 %v2744, %v3061
      %v3098 = vadd.f32 %v2745, %v3064
      %v3099 = vadd.f32 %v2746, %v3066
      %v3101 = vrot.slane %v1361, 5
      %v3102 = vrot.slane %v3101, 4
      %v3103 = vrot.slane %v1362, 5
      %v3104 = vsel %vm2765, %v3102, %v3103
      %v3105 = vrot.slane %v3103, 4
      %v3106 = vrot.slane %v1363, 5
      %v3107 = vsel %vm2765, %v3105, %v3106
      %s3108 = scalar_lea.vmem %s4, 5
      %v3109 = vld [vmem:[%s3108] sm:$0x1]
      %v3110 = vunpack.c.l.b16 %v3104
      %v3111 = vunpack.c.l.b16 %v3107
      %v3112 = vpack.c.b16 %v3111, %v3110
      %v3114 = vsel %vm1450, %v3112, 0
      %v3117 = vsel %vm1499, %v3109, 0
      %3119 = vmatpush.bf16.msra.mxu0 0
      %3120 = vmatpush.bf16.msra.mxu0 0
      %3121 = vmatpush.bf16.msra.mxu0 0
      %3122 = vmatpush.bf16.msra.mxu0 0
      %3123 = vmatpush.bf16.msra.mxu0 0
      %3124 = vmatpush.bf16.msra.mxu0 0
      %3125 = vmatpush.bf16.msra.mxu0 0
      %3126 = vmatpush.bf16.msra.mxu0 %v3117
      %3127 = vmatmul.bf16.gmra.mxu0 %v2932
      %v3128 = vpop.f32.mrf.mxu0
      %v3129 = vadd.f32 0.0, %v3128
      %v3130 = vpop.f32.mrf.mxu0
      %v3131 = vadd.f32 0.0, %v3130
      %3132 = vmatmul.bf16.gmra.mxu0 %v2935
      %v3133 = vpop.f32.mrf.mxu0
      %v3134 = vadd.f32 0.0, %v3133
      %v3135 = vpop.f32.mrf.mxu0
      %v3136 = vadd.f32 0.0, %v3135
      %3137 = vmatmul.bf16.gmra.mxu0 %v2938
      %v3138 = vpop.f32.mrf.mxu0
      %v3139 = vadd.f32 0.0, %v3138
      %v3140 = vpop.f32.mrf.mxu0
      %v3141 = vadd.f32 0.0, %v3140
      %3142 = vmatmul.bf16.gmra.mxu0 %v2941
      %v3143 = vpop.f32.mrf.mxu0
      %v3144 = vadd.f32 0.0, %v3143
      %v3145 = vpop.f32.mrf.mxu0
      %v3146 = vadd.f32 0.0, %v3145
      %3147 = vmatmul.bf16.gmra.mxu0 %v2944
      %v3148 = vpop.f32.mrf.mxu0
      %v3149 = vadd.f32 0.0, %v3148
      %v3150 = vpop.f32.mrf.mxu0
      %v3151 = vadd.f32 0.0, %v3150
      %3152 = vmatmul.bf16.gmra.mxu0 %v2947
      %v3153 = vpop.f32.mrf.mxu0
      %v3154 = vadd.f32 0.0, %v3153
      %v3155 = vpop.f32.mrf.mxu0
      %v3156 = vadd.f32 0.0, %v3155
      %3157 = vmatmul.bf16.gmra.mxu0 %v2950
      %v3158 = vpop.f32.mrf.mxu0
      %v3159 = vadd.f32 0.0, %v3158
      %v3160 = vpop.f32.mrf.mxu0
      %v3161 = vadd.f32 0.0, %v3160
      %3162 = vmatmul.bf16.gmra.mxu0 %v2953
      %v3163 = vpop.f32.mrf.mxu0
      %v3164 = vadd.f32 0.0, %v3163
      %v3165 = vpop.f32.mrf.mxu0
      %v3166 = vadd.f32 0.0, %v3165
      %3167 = vmatmul.bf16.gmra.mxu0 %v2956
      %v3168 = vpop.f32.mrf.mxu0
      %v3169 = vadd.f32 0.0, %v3168
      %v3170 = vpop.f32.mrf.mxu0
      %v3171 = vadd.f32 0.0, %v3170
      %3172 = vmatmul.bf16.gmra.mxu0 %v2959
      %v3173 = vpop.f32.mrf.mxu0
      %v3174 = vadd.f32 0.0, %v3173
      %v3175 = vpop.f32.mrf.mxu0
      %v3176 = vadd.f32 0.0, %v3175
      %3177 = vmatmul.bf16.gmra.mxu0 %v2962
      %v3178 = vpop.f32.mrf.mxu0
      %v3179 = vadd.f32 0.0, %v3178
      %v3180 = vpop.f32.mrf.mxu0
      %v3181 = vadd.f32 0.0, %v3180
      %3182 = vmatmul.bf16.gmra.mxu0 %v2965
      %v3183 = vpop.f32.mrf.mxu0
      %v3184 = vadd.f32 0.0, %v3183
      %v3185 = vpop.f32.mrf.mxu0
      %v3186 = vadd.f32 0.0, %v3185
      %3187 = vmatmul.bf16.gmra.mxu0 %v2968
      %v3188 = vpop.f32.mrf.mxu0
      %v3189 = vadd.f32 0.0, %v3188
      %v3190 = vpop.f32.mrf.mxu0
      %v3191 = vadd.f32 0.0, %v3190
      %3192 = vmatmul.bf16.gmra.mxu0 %v2971
      %v3193 = vpop.f32.mrf.mxu0
      %v3194 = vadd.f32 0.0, %v3193
      %v3195 = vpop.f32.mrf.mxu0
      %v3196 = vadd.f32 0.0, %v3195
      %3197 = vmatmul.bf16.gmra.mxu0 %v2974
      %v3198 = vpop.f32.mrf.mxu0
      %v3199 = vadd.f32 0.0, %v3198
      %v3200 = vpop.f32.mrf.mxu0
      %v3201 = vadd.f32 0.0, %v3200
      %3202 = vmatmul.bf16.gmra.mxu0 %v3114
      %v3203 = vpop.f32.mrf.mxu0
      %v3204 = vadd.f32 0.0, %v3203
      %v3205 = vpop.f32.mrf.mxu0
      %v3206 = vadd.f32 0.0, %v3205
      %3207 = vdwg.mxu0
      %v3208 = vadd.f32 %v3068, %v3129
      %v3209 = vadd.f32 %v3069, %v3131
      %v3210 = vadd.f32 %v3070, %v3134
      %v3211 = vadd.f32 %v3071, %v3136
      %v3212 = vadd.f32 %v3072, %v3139
      %v3213 = vadd.f32 %v3073, %v3141
      %v3214 = vadd.f32 %v3074, %v3144
      %v3215 = vadd.f32 %v3075, %v3146
      %v3216 = vadd.f32 %v3076, %v3149
      %v3217 = vadd.f32 %v3077, %v3151
      %v3218 = vadd.f32 %v3078, %v3154
      %v3219 = vadd.f32 %v3079, %v3156
      %v3220 = vadd.f32 %v3080, %v3159
      %v3221 = vadd.f32 %v3081, %v3161
      %v3222 = vadd.f32 %v3082, %v3164
      %v3223 = vadd.f32 %v3083, %v3166
      %v3224 = vadd.f32 %v3084, %v3169
      %v3225 = vadd.f32 %v3085, %v3171
      %v3226 = vadd.f32 %v3086, %v3174
      %v3227 = vadd.f32 %v3087, %v3176
      %v3228 = vadd.f32 %v3088, %v3179
      %v3229 = vadd.f32 %v3089, %v3181
      %v3230 = vadd.f32 %v3090, %v3184
      %v3231 = vadd.f32 %v3091, %v3186
      %v3232 = vadd.f32 %v3092, %v3189
      %v3233 = vadd.f32 %v3093, %v3191
      %v3234 = vadd.f32 %v3094, %v3194
      %v3235 = vadd.f32 %v3095, %v3196
      %v3236 = vadd.f32 %v3096, %v3199
      %v3237 = vadd.f32 %v3097, %v3201
      %v3238 = vadd.f32 %v3098, %v3204
      %v3239 = vadd.f32 %v3099, %v3206
      %v3241 = vrot.slane %v1364, 5
      %v3242 = vrot.slane %v3241, 4
      %v3243 = vrot.slane %v1365, 5
      %v3244 = vsel %vm2765, %v3242, %v3243
      %v3245 = vrot.slane %v3243, 4
      %v3246 = vrot.slane %v1366, 5
      %v3247 = vsel %vm2765, %v3245, %v3246
      %s3248 = scalar_lea.vmem %s4, 8
      %v3249 = vld [vmem:[%s3248] sm:$0x1]
      %v3250 = vunpack.c.l.b16 %v3244
      %v3251 = vunpack.c.l.b16 %v3247
      %v3252 = vpack.c.b16 %v3251, %v3250
      %v3254 = vsel %vm1450, %v3252, 0
      %v3257 = vsel %vm1499, %v3249, 0
      %3259 = vmatpush.bf16.msra.mxu0 0
      %3260 = vmatpush.bf16.msra.mxu0 0
      %3261 = vmatpush.bf16.msra.mxu0 0
      %3262 = vmatpush.bf16.msra.mxu0 0
      %3263 = vmatpush.bf16.msra.mxu0 0
      %3264 = vmatpush.bf16.msra.mxu0 0
      %3265 = vmatpush.bf16.msra.mxu0 0
      %3266 = vmatpush.bf16.msra.mxu0 %v3257
      %3267 = vmatmul.bf16.gmra.mxu0 %v2935
      %v3268 = vpop.f32.mrf.mxu0
      %v3269 = vadd.f32 0.0, %v3268
      %v3270 = vpop.f32.mrf.mxu0
      %v3271 = vadd.f32 0.0, %v3270
      %3272 = vmatmul.bf16.gmra.mxu0 %v2938
      %v3273 = vpop.f32.mrf.mxu0
      %v3274 = vadd.f32 0.0, %v3273
      %v3275 = vpop.f32.mrf.mxu0
      %v3276 = vadd.f32 0.0, %v3275
      %3277 = vmatmul.bf16.gmra.mxu0 %v2941
      %v3278 = vpop.f32.mrf.mxu0
      %v3279 = vadd.f32 0.0, %v3278
      %v3280 = vpop.f32.mrf.mxu0
      %v3281 = vadd.f32 0.0, %v3280
      %3282 = vmatmul.bf16.gmra.mxu0 %v2944
      %v3283 = vpop.f32.mrf.mxu0
      %v3284 = vadd.f32 0.0, %v3283
      %v3285 = vpop.f32.mrf.mxu0
      %v3286 = vadd.f32 0.0, %v3285
      %3287 = vmatmul.bf16.gmra.mxu0 %v2947
      %v3288 = vpop.f32.mrf.mxu0
      %v3289 = vadd.f32 0.0, %v3288
      %v3290 = vpop.f32.mrf.mxu0
      %v3291 = vadd.f32 0.0, %v3290
      %3292 = vmatmul.bf16.gmra.mxu0 %v2950
      %v3293 = vpop.f32.mrf.mxu0
      %v3294 = vadd.f32 0.0, %v3293
      %v3295 = vpop.f32.mrf.mxu0
      %v3296 = vadd.f32 0.0, %v3295
      %3297 = vmatmul.bf16.gmra.mxu0 %v2953
      %v3298 = vpop.f32.mrf.mxu0
      %v3299 = vadd.f32 0.0, %v3298
      %v3300 = vpop.f32.mrf.mxu0
      %v3301 = vadd.f32 0.0, %v3300
      %3302 = vmatmul.bf16.gmra.mxu0 %v2956
      %v3303 = vpop.f32.mrf.mxu0
      %v3304 = vadd.f32 0.0, %v3303
      %v3305 = vpop.f32.mrf.mxu0
      %v3306 = vadd.f32 0.0, %v3305
      %3307 = vmatmul.bf16.gmra.mxu0 %v2959
      %v3308 = vpop.f32.mrf.mxu0
      %v3309 = vadd.f32 0.0, %v3308
      %v3310 = vpop.f32.mrf.mxu0
      %v3311 = vadd.f32 0.0, %v3310
      %3312 = vmatmul.bf16.gmra.mxu0 %v2962
      %v3313 = vpop.f32.mrf.mxu0
      %v3314 = vadd.f32 0.0, %v3313
      %v3315 = vpop.f32.mrf.mxu0
      %v3316 = vadd.f32 0.0, %v3315
      %3317 = vmatmul.bf16.gmra.mxu0 %v2965
      %v3318 = vpop.f32.mrf.mxu0
      %v3319 = vadd.f32 0.0, %v3318
      %v3320 = vpop.f32.mrf.mxu0
      %v3321 = vadd.f32 0.0, %v3320
      %3322 = vmatmul.bf16.gmra.mxu0 %v2968
      %v3323 = vpop.f32.mrf.mxu0
      %v3324 = vadd.f32 0.0, %v3323
      %v3325 = vpop.f32.mrf.mxu0
      %v3326 = vadd.f32 0.0, %v3325
      %3327 = vmatmul.bf16.gmra.mxu0 %v2971
      %v3328 = vpop.f32.mrf.mxu0
      %v3329 = vadd.f32 0.0, %v3328
      %v3330 = vpop.f32.mrf.mxu0
      %v3331 = vadd.f32 0.0, %v3330
      %3332 = vmatmul.bf16.gmra.mxu0 %v2974
      %v3333 = vpop.f32.mrf.mxu0
      %v3334 = vadd.f32 0.0, %v3333
      %v3335 = vpop.f32.mrf.mxu0
      %v3336 = vadd.f32 0.0, %v3335
      %3337 = vmatmul.bf16.gmra.mxu0 %v3114
      %v3338 = vpop.f32.mrf.mxu0
      %v3339 = vadd.f32 0.0, %v3338
      %v3340 = vpop.f32.mrf.mxu0
      %v3341 = vadd.f32 0.0, %v3340
      %3342 = vmatmul.bf16.gmra.mxu0 %v3254
      %v3343 = vpop.f32.mrf.mxu0
      %v3344 = vadd.f32 0.0, %v3343
      %v3345 = vpop.f32.mrf.mxu0
      %v3346 = vadd.f32 0.0, %v3345
      %3347 = vdwg.mxu0
      %v3348 = vadd.f32 %v3208, %v3269
      %v3349 = vadd.f32 %v3209, %v3271
      %v3350 = vadd.f32 %v3210, %v3274
      %v3351 = vadd.f32 %v3211, %v3276
      %v3352 = vadd.f32 %v3212, %v3279
      %v3353 = vadd.f32 %v3213, %v3281
      %v3354 = vadd.f32 %v3214, %v3284
      %v3355 = vadd.f32 %v3215, %v3286
      %v3356 = vadd.f32 %v3216, %v3289
      %v3357 = vadd.f32 %v3217, %v3291
      %v3358 = vadd.f32 %v3218, %v3294
      %v3359 = vadd.f32 %v3219, %v3296
      %v3360 = vadd.f32 %v3220, %v3299
      %v3361 = vadd.f32 %v3221, %v3301
      %v3362 = vadd.f32 %v3222, %v3304
      %v3363 = vadd.f32 %v3223, %v3306
      %v3364 = vadd.f32 %v3224, %v3309
      %v3365 = vadd.f32 %v3225, %v3311
      %v3366 = vadd.f32 %v3226, %v3314
      %v3367 = vadd.f32 %v3227, %v3316
      %v3368 = vadd.f32 %v3228, %v3319
      %v3369 = vadd.f32 %v3229, %v3321
      %v3370 = vadd.f32 %v3230, %v3324
      %v3371 = vadd.f32 %v3231, %v3326
      %v3372 = vadd.f32 %v3232, %v3329
      %v3373 = vadd.f32 %v3233, %v3331
      %v3374 = vadd.f32 %v3234, %v3334
      %v3375 = vadd.f32 %v3235, %v3336
      %v3376 = vadd.f32 %v3236, %v3339
      %v3377 = vadd.f32 %v3237, %v3341
      %v3378 = vadd.f32 %v3238, %v3344
      %v3379 = vadd.f32 %v3239, %v3346
      %v3380 = vld [vmem:[%s5] sm:$0x1]
      %v3382 = vperm.slane %v3380, 0
      %v3384 = vadd.f32 %v3348, %v3382
      %v3385 = vadd.f32 %v3349, %v3382
      %v3386 = vadd.f32 %v3350, %v3382
      %v3387 = vadd.f32 %v3351, %v3382
      %v3388 = vadd.f32 %v3352, %v3382
      %v3389 = vadd.f32 %v3353, %v3382
      %v3390 = vadd.f32 %v3354, %v3382
      %v3391 = vadd.f32 %v3355, %v3382
      %v3392 = vadd.f32 %v3356, %v3382
      %v3393 = vadd.f32 %v3357, %v3382
      %v3394 = vadd.f32 %v3358, %v3382
      %v3395 = vadd.f32 %v3359, %v3382
      %v3396 = vadd.f32 %v3360, %v3382
      %v3397 = vadd.f32 %v3361, %v3382
      %v3398 = vadd.f32 %v3362, %v3382
      %v3399 = vadd.f32 %v3363, %v3382
      %v3400 = vadd.f32 %v3364, %v3382
      %v3401 = vadd.f32 %v3365, %v3382
      %v3402 = vadd.f32 %v3366, %v3382
      %v3403 = vadd.f32 %v3367, %v3382
      %v3404 = vadd.f32 %v3368, %v3382
      %v3405 = vadd.f32 %v3369, %v3382
      %v3406 = vadd.f32 %v3370, %v3382
      %v3407 = vadd.f32 %v3371, %v3382
      %v3408 = vadd.f32 %v3372, %v3382
      %v3409 = vadd.f32 %v3373, %v3382
      %v3410 = vadd.f32 %v3374, %v3382
      %v3411 = vadd.f32 %v3375, %v3382
      %v3412 = vadd.f32 %v3376, %v3382
      %v3413 = vadd.f32 %v3377, %v3382
      %v3414 = vadd.f32 %v3378, %v3382
      %v3415 = vadd.f32 %v3379, %v3382
      %vm3416 = vcmp.gt.f32.partialorder %v3384, 0.0
      %vm3417 = vcmp.gt.f32.partialorder %v3385, 0.0
      %vm3418 = vcmp.gt.f32.partialorder %v3386, 0.0
      %vm3419 = vcmp.gt.f32.partialorder %v3387, 0.0
      %vm3420 = vcmp.gt.f32.partialorder %v3388, 0.0
      %vm3421 = vcmp.gt.f32.partialorder %v3389, 0.0
      %vm3422 = vcmp.gt.f32.partialorder %v3390, 0.0
      %vm3423 = vcmp.gt.f32.partialorder %v3391, 0.0
      %vm3424 = vcmp.gt.f32.partialorder %v3392, 0.0
      %vm3425 = vcmp.gt.f32.partialorder %v3393, 0.0
      %vm3426 = vcmp.gt.f32.partialorder %v3394, 0.0
      %vm3427 = vcmp.gt.f32.partialorder %v3395, 0.0
      %vm3428 = vcmp.gt.f32.partialorder %v3396, 0.0
      %vm3429 = vcmp.gt.f32.partialorder %v3397, 0.0
      %vm3430 = vcmp.gt.f32.partialorder %v3398, 0.0
      %vm3431 = vcmp.gt.f32.partialorder %v3399, 0.0
      %vm3432 = vcmp.gt.f32.partialorder %v3400, 0.0
      %vm3433 = vcmp.gt.f32.partialorder %v3401, 0.0
      %vm3434 = vcmp.gt.f32.partialorder %v3402, 0.0
      %vm3435 = vcmp.gt.f32.partialorder %v3403, 0.0
      %vm3436 = vcmp.gt.f32.partialorder %v3404, 0.0
      %vm3437 = vcmp.gt.f32.partialorder %v3405, 0.0
      %vm3438 = vcmp.gt.f32.partialorder %v3406, 0.0
      %vm3439 = vcmp.gt.f32.partialorder %v3407, 0.0
      %vm3440 = vcmp.gt.f32.partialorder %v3408, 0.0
      %vm3441 = vcmp.gt.f32.partialorder %v3409, 0.0
      %vm3442 = vcmp.gt.f32.partialorder %v3410, 0.0
      %vm3443 = vcmp.gt.f32.partialorder %v3411, 0.0
      %vm3444 = vcmp.gt.f32.partialorder %v3412, 0.0
      %vm3445 = vcmp.gt.f32.partialorder %v3413, 0.0
      %vm3446 = vcmp.gt.f32.partialorder %v3414, 0.0
      %vm3447 = vcmp.gt.f32.partialorder %v3415, 0.0
      %v3448 = vmul.f32 %v3384, 0.1
      %v3449 = vmul.f32 %v3385, 0.1
      %v3450 = vmul.f32 %v3386, 0.1
      %v3451 = vmul.f32 %v3387, 0.1
      %v3452 = vmul.f32 %v3388, 0.1
      %v3453 = vmul.f32 %v3389, 0.1
      %v3454 = vmul.f32 %v3390, 0.1
      %v3455 = vmul.f32 %v3391, 0.1
      %v3456 = vmul.f32 %v3392, 0.1
      %v3457 = vmul.f32 %v3393, 0.1
      %v3458 = vmul.f32 %v3394, 0.1
      %v3459 = vmul.f32 %v3395, 0.1
      %v3460 = vmul.f32 %v3396, 0.1
      %v3461 = vmul.f32 %v3397, 0.1
      %v3462 = vmul.f32 %v3398, 0.1
      %v3463 = vmul.f32 %v3399, 0.1
      %v3464 = vmul.f32 %v3400, 0.1
      %v3465 = vmul.f32 %v3401, 0.1
      %v3466 = vmul.f32 %v3402, 0.1
      %v3467 = vmul.f32 %v3403, 0.1
      %v3468 = vmul.f32 %v3404, 0.1
      %v3469 = vmul.f32 %v3405, 0.1
      %v3470 = vmul.f32 %v3406, 0.1
      %v3471 = vmul.f32 %v3407, 0.1
      %v3472 = vmul.f32 %v3408, 0.1
      %v3473 = vmul.f32 %v3409, 0.1
      %v3474 = vmul.f32 %v3410, 0.1
      %v3475 = vmul.f32 %v3411, 0.1
      %v3476 = vmul.f32 %v3412, 0.1
      %v3477 = vmul.f32 %v3413, 0.1
      %v3478 = vmul.f32 %v3414, 0.1
      %v3479 = vmul.f32 %v3415, 0.1
      %v3480 = vsel %vm3416, %v3384, %v3448
      %v3481 = vsel %vm3417, %v3385, %v3449
      %v3482 = vsel %vm3418, %v3386, %v3450
      %v3483 = vsel %vm3419, %v3387, %v3451
      %v3484 = vsel %vm3420, %v3388, %v3452
      %v3485 = vsel %vm3421, %v3389, %v3453
      %v3486 = vsel %vm3422, %v3390, %v3454
      %v3487 = vsel %vm3423, %v3391, %v3455
      %v3488 = vsel %vm3424, %v3392, %v3456
      %v3489 = vsel %vm3425, %v3393, %v3457
      %v3490 = vsel %vm3426, %v3394, %v3458
      %v3491 = vsel %vm3427, %v3395, %v3459
      %v3492 = vsel %vm3428, %v3396, %v3460
      %v3493 = vsel %vm3429, %v3397, %v3461
      %v3494 = vsel %vm3430, %v3398, %v3462
      %v3495 = vsel %vm3431, %v3399, %v3463
      %v3496 = vsel %vm3432, %v3400, %v3464
      %v3497 = vsel %vm3433, %v3401, %v3465
      %v3498 = vsel %vm3434, %v3402, %v3466
      %v3499 = vsel %vm3435, %v3403, %v3467
      %v3500 = vsel %vm3436, %v3404, %v3468
      %v3501 = vsel %vm3437, %v3405, %v3469
      %v3502 = vsel %vm3438, %v3406, %v3470
      %v3503 = vsel %vm3439, %v3407, %v3471
      %v3504 = vsel %vm3440, %v3408, %v3472
      %v3505 = vsel %vm3441, %v3409, %v3473
      %v3506 = vsel %vm3442, %v3410, %v3474
      %v3507 = vsel %vm3443, %v3411, %v3475
      %v3508 = vsel %vm3444, %v3412, %v3476
      %v3509 = vsel %vm3445, %v3413, %v3477
      %v3510 = vsel %vm3446, %v3414, %v3478
      %v3511 = vsel %vm3447, %v3415, %v3479
      %v3512 = vld [vmem:[%s303] sm:$0xff]
      %v3513 = vld [vmem:[%s303 + $0x8] sm:$0xff]
      %v3514 = vld [vmem:[%s303 + $0x10] sm:$0xff]
      %v3515 = vld [vmem:[%s303 + $0x18] sm:$0xff]
      %v3516 = vld [vmem:[%s303 + $0x20] sm:$0xff]
      %v3517 = vld [vmem:[%s303 + $0x28] sm:$0xff]
      %v3518 = vld [vmem:[%s303 + $0x30] sm:$0xff]
      %v3519 = vld [vmem:[%s303 + $0x38] sm:$0xff]
      %v3520 = vld [vmem:[%s303 + $0x40] sm:$0xff]
      %v3521 = vld [vmem:[%s303 + $0x48] sm:$0xff]
      %v3522 = vld [vmem:[%s303 + $0x50] sm:$0xff]
      %v3523 = vld [vmem:[%s303 + $0x58] sm:$0xff]
      %v3524 = vld [vmem:[%s303 + $0x60] sm:$0xff]
      %v3525 = vld [vmem:[%s303 + $0x68] sm:$0xff]
      %v3526 = vld [vmem:[%s303 + $0x70] sm:$0xff]
      %v3527 = vld [vmem:[%s303 + $0x78] sm:$0xff]
      %v3528 = vld [vmem:[%s303 + $0x80] sm:$0xff]
      %v3529 = vld [vmem:[%s303 + $0x88] sm:$0xff]
      %v3530 = vld [vmem:[%s303 + $0x90] sm:$0xff]
      %v3531 = vld [vmem:[%s303 + $0x98] sm:$0xff]
      %v3532 = vld [vmem:[%s303 + $0xa0] sm:$0xff]
      %v3533 = vld [vmem:[%s303 + $0xa8] sm:$0xff]
      %v3534 = vld [vmem:[%s303 + $0xb0] sm:$0xff]
      %v3535 = vld [vmem:[%s303 + $0xb8] sm:$0xff]
      %v3536 = vld [vmem:[%s303 + $0xc0] sm:$0xff]
      %v3537 = vld [vmem:[%s303 + $0xc8] sm:$0xff]
      %v3538 = vld [vmem:[%s303 + $0xd0] sm:$0xff]
      %v3539 = vld [vmem:[%s303 + $0xd8] sm:$0xff]
      %v3540 = vld [vmem:[%s303 + $0xe0] sm:$0xff]
      %v3541 = vld [vmem:[%s303 + $0xe8] sm:$0xff]
      %v3542 = vld [vmem:[%s303 + $0xf0] sm:$0xff]
      %v3543 = vld [vmem:[%s303 + $0xf8] sm:$0xff]
      %v3544 = vadd.f32 %v3512, %v3480
      %v3545 = vadd.f32 %v3513, %v3481
      %v3546 = vadd.f32 %v3514, %v3482
      %v3547 = vadd.f32 %v3515, %v3483
      %v3548 = vadd.f32 %v3516, %v3484
      %v3549 = vadd.f32 %v3517, %v3485
      %v3550 = vadd.f32 %v3518, %v3486
      %v3551 = vadd.f32 %v3519, %v3487
      %v3552 = vadd.f32 %v3520, %v3488
      %v3553 = vadd.f32 %v3521, %v3489
      %v3554 = vadd.f32 %v3522, %v3490
      %v3555 = vadd.f32 %v3523, %v3491
      %v3556 = vadd.f32 %v3524, %v3492
      %v3557 = vadd.f32 %v3525, %v3493
      %v3558 = vadd.f32 %v3526, %v3494
      %v3559 = vadd.f32 %v3527, %v3495
      %v3560 = vadd.f32 %v3528, %v3496
      %v3561 = vadd.f32 %v3529, %v3497
      %v3562 = vadd.f32 %v3530, %v3498
      %v3563 = vadd.f32 %v3531, %v3499
      %v3564 = vadd.f32 %v3532, %v3500
      %v3565 = vadd.f32 %v3533, %v3501
      %v3566 = vadd.f32 %v3534, %v3502
      %v3567 = vadd.f32 %v3535, %v3503
      %v3568 = vadd.f32 %v3536, %v3504
      %v3569 = vadd.f32 %v3537, %v3505
      %v3570 = vadd.f32 %v3538, %v3506
      %v3571 = vadd.f32 %v3539, %v3507
      %v3572 = vadd.f32 %v3540, %v3508
      %v3573 = vadd.f32 %v3541, %v3509
      %v3574 = vadd.f32 %v3542, %v3510
      %v3575 = vadd.f32 %v3543, %v3511
      %3576 = vst.msk [vmem:[%s314] sm:$0xff] %vm511, %v3544
      %3577 = vst.msk [vmem:[%s314 + $0x8] sm:$0xff] %vm511, %v3545
      %3578 = vst.msk [vmem:[%s314 + $0x10] sm:$0xff] %vm511, %v3546
      %3579 = vst.msk [vmem:[%s314 + $0x18] sm:$0xff] %vm511, %v3547
      %3580 = vst.msk [vmem:[%s314 + $0x20] sm:$0xff] %vm511, %v3548
      %3581 = vst.msk [vmem:[%s314 + $0x28] sm:$0xff] %vm511, %v3549
      %3582 = vst.msk [vmem:[%s314 + $0x30] sm:$0xff] %vm511, %v3550
      %3583 = vst.msk [vmem:[%s314 + $0x38] sm:$0xff] %vm511, %v3551
      %3584 = vst.msk [vmem:[%s314 + $0x40] sm:$0xff] %vm511, %v3552
      %3585 = vst.msk [vmem:[%s314 + $0x48] sm:$0xff] %vm511, %v3553
      %3586 = vst.msk [vmem:[%s314 + $0x50] sm:$0xff] %vm511, %v3554
      %3587 = vst.msk [vmem:[%s314 + $0x58] sm:$0xff] %vm511, %v3555
      %3588 = vst.msk [vmem:[%s314 + $0x60] sm:$0xff] %vm511, %v3556
      %3589 = vst.msk [vmem:[%s314 + $0x68] sm:$0xff] %vm511, %v3557
      %3590 = vst.msk [vmem:[%s314 + $0x70] sm:$0xff] %vm511, %v3558
      %3591 = vst.msk [vmem:[%s314 + $0x78] sm:$0xff] %vm511, %v3559
      %3592 = vst.msk [vmem:[%s314 + $0x80] sm:$0xff] %vm511, %v3560
      %3593 = vst.msk [vmem:[%s314 + $0x88] sm:$0xff] %vm511, %v3561
      %3594 = vst.msk [vmem:[%s314 + $0x90] sm:$0xff] %vm511, %v3562
      %3595 = vst.msk [vmem:[%s314 + $0x98] sm:$0xff] %vm511, %v3563
      %3596 = vst.msk [vmem:[%s314 + $0xa0] sm:$0xff] %vm511, %v3564
      %3597 = vst.msk [vmem:[%s314 + $0xa8] sm:$0xff] %vm511, %v3565
      %3598 = vst.msk [vmem:[%s314 + $0xb0] sm:$0xff] %vm511, %v3566
      %3599 = vst.msk [vmem:[%s314 + $0xb8] sm:$0xff] %vm511, %v3567
      %3600 = vst.msk [vmem:[%s314 + $0xc0] sm:$0xff] %vm511, %v3568
      %3601 = vst.msk [vmem:[%s314 + $0xc8] sm:$0xff] %vm511, %v3569
      %3602 = vst.msk [vmem:[%s314 + $0xd0] sm:$0xff] %vm511, %v3570
      %3603 = vst.msk [vmem:[%s314 + $0xd8] sm:$0xff] %vm511, %v3571
      %3604 = vst.msk [vmem:[%s314 + $0xe0] sm:$0xff] %vm511, %v3572
      %3605 = vst.msk [vmem:[%s314 + $0xe8] sm:$0xff] %vm511, %v3573
      %3606 = vst.msk [vmem:[%s314 + $0xf0] sm:$0xff] %vm511, %v3574
      %3607 = vst.msk [vmem:[%s314 + $0xf8] sm:$0xff] %vm511, %v3575
      %s3608 = smul.u32 16, %s22
      %p3609 = scmp.lt.s32.totalorder %s21, 1
      %s3610 = scalar_select %p3609, %s21, 1
      %p3611 = scmp.lt.s32.totalorder %s3608, 15
      %s3612 = scalar_select %p3611, %s3608, 15
      %s3613 = smul.addr %s3612, 2
      %s3614 = smul.addr %s3610, 32
      %s3615 = sadd.s32 %s3613, %s3614
      %s3616 = smul.addr %s3615, 8
      %s3617 = scalar_lea.vmem %s6, %s3616
      // Predicated region
      $region45: #{tpu_custom_call.1} parent=43 // pred_check
        %p3618 = pneg %p187
      $region46: #{tpu_custom_call.1} parent=43 // pred_check_branch
        %3620 = sbr.rel (%p3618) target = $region48
      $region47: #{tpu_custom_call.1} parent=43 // pred_region
        %s3621 = smul.u32 16, %s22
      $region48: #{tpu_custom_call.1} parent=43 // pred_fallthru
        _
    $region44: #{tpu_custom_call.1} parent=5 // pred_fallthru
      _
    %p3622 = scmp.le.s32.totalorder 2, %s12
    // Predicated region
    $region49: #{tpu_custom_call.1} parent=5 // pred_check
      %p3623 = pneg %p3622
    $region50: #{tpu_custom_call.1} parent=5 // pred_check_branch
      %3625 = sbr.rel (%p3623) target = $region52
    $region51: #{tpu_custom_call.1} parent=5 // pred_region
      %s3626 = ssub.s32 %s12, 2
      // Predicated region
      $region53: #{tpu_custom_call.1} parent=51 // pred_check
        %p3627 = pneg %p193
      $region54: #{tpu_custom_call.1} parent=51 // pred_check_branch
        %3629 = sbr.rel (%p3627) target = $region56
      $region55: #{tpu_custom_call.1} parent=51 // pred_region
        %s3630 = smul.u32 16, %s24
        %p3631 = scmp.lt.s32.totalorder %s23, 1
        %s3632 = scalar_select %p3631, %s23, 1
        %p3633 = scmp.lt.s32.totalorder %s3630, 15
        %s3634 = scalar_select %p3633, %s3630, 15
        %s3635 = smul.addr %s3634, 2
        %s3636 = smul.addr %s3632, 32
        %s3637 = sadd.s32 %s3635, %s3636
        %s3638 = smul.addr %s3637, 8
        %s3639 = scalar_lea.vmem %s6, %s3638
      $region56: #{tpu_custom_call.1} parent=51 // pred_fallthru
        _
    $region52: #{tpu_custom_call.1} parent=5 // pred_fallthru
      _
  $region6: #{tpu_custom_call.1} parent=0 // loop_footer
    %s16 = sadd.s32 1, %s12
  $region7: #{tpu_custom_call.1} parent=0 // loop_footer_branch
    %11 = sbr.rel target = $region3
  $region8: #{tpu_custom_call.1} parent=0 // loop_exit
    _

</llo_original>
